<compile_context>
chip_gen: v5e
topology: v5e:2x2
jax: 0.10.0
libtpu: 0.0.40
codegen_flags: <defaults>
</compile_context>

<pallas_src>
import functools

import jax
import jax.numpy as jnp
from jax.experimental import pallas as pl
from jax.experimental.pallas import tpu as pltpu

LN_EPS = 1e-6  # SPINN LayerNormalization default eps


def _round_up(x, m):
    return ((x + m - 1) // m) * m


# ----------------------------------------------------------------------------
# Kernel
# ----------------------------------------------------------------------------
def _ln_normalize(h):
    """SPINN-style layernorm (affine folded into the next linear layer).

    (x - mean) / (std_unbiased + eps): unbiased variance (divide by n-1), eps
    added to the std (not the variance) -- matches SPINN LayerNormalization.
    """
    n = h.shape[-1]
    mu = jnp.mean(h, axis=-1, keepdims=True)
    c = h - mu
    var = jnp.sum(c * c, axis=-1, keepdims=True) * (1.0 / (n - 1))
    sigma = jnp.sqrt(var)
    # Exact reciprocal (still lowers to the EUP). approx=True was the main
    # numerics leak in the previous version.
    return c * pl.reciprocal(sigma + LN_EPS)


def _mlp_kernel(x_ref, w0_ref, w1_ref, wo_ref, b_ref, out_ref):
    """Whole MLP forward for one batch tile, entirely in VMEM.

    LN gamma/beta are already folded into w*/b* (done once, wrapper-side).
    b_ref packs [b0; b1; b_out] as rows of a single lane-padded (3, W) block.
    """
    d_hid = w0_ref.shape[1]
    n_out = out_ref.shape[1]

    b_all = b_ref[...]
    b0 = b_all[0:1, :d_hid]
    b1 = b_all[1:2, :d_hid]
    bo = b_all[2:3, :n_out]

    h = _ln_normalize(x_ref[...])

    # layer 0: (folded-LN) linear -> relu -> LN-normalize
    h = jnp.dot(h, w0_ref[...], preferred_element_type=jnp.float32) + b0
    h = _ln_normalize(jnp.maximum(h, 0.0))

    # layer 1: (folded-LN) linear -> relu -> LN-normalize
    h = jnp.dot(h, w1_ref[...], preferred_element_type=jnp.float32) + b1
    h = _ln_normalize(jnp.maximum(h, 0.0))

    # output projection (columns zero-padded to lane width in the wrapper)
    out_ref[...] = jnp.dot(h, wo_ref[...], preferred_element_type=jnp.float32) + bo


# ----------------------------------------------------------------------------
# One-time parameter preparation (hoisted out of the per-call hot path)
# ----------------------------------------------------------------------------
def _fold_ln_into_linear(g, b, w, bias):
    """LN(x)*g + b followed by @w + bias  ==  LN(x) @ (g^T * w) + (b @ w + bias)."""
    hp = jax.lax.Precision.HIGHEST
    w_f = g.reshape(-1, 1) * w
    b_f = jnp.dot(b, w, precision=hp) + bias
    return w_f, b_f


def fold_discriminator_params(params):
    """Fold each LayerNorm affine into the following linear layer, pad the
    output projection to a lane-dense width, and pack the three biases into a
    single (3, W) block. Call once at model-load time."""
    d_hid = params["w0"].shape[1]
    n_cls = params["w_out"].shape[1]
    n_cls_pad = _round_up(n_cls, 128)

    w0, b0 = _fold_ln_into_linear(params["ln_in_g"], params["ln_in_b"],
                                  params["w0"], params["b0"])
    w1, b1 = _fold_ln_into_linear(params["ln0_g"], params["ln0_b"],
                                  params["w1"], params["b1"])
    wo, bo = _fold_ln_into_linear(params["ln1_g"], params["ln1_b"],
                                  params["w_out"], params["b_out"])

    # Lane-dense output: zero-pad the output columns to a multiple of 128.
    wo = jnp.pad(wo, ((0, 0), (0, n_cls_pad - n_cls)))
    bo = jnp.pad(bo, ((0, 0), (0, n_cls_pad - n_cls)))

    bw = _round_up(max(d_hid, n_cls_pad), 128)
    b_all = jnp.concatenate([
        jnp.pad(b0, ((0, 0), (0, bw - d_hid))),
        jnp.pad(b1, ((0, 0), (0, bw - d_hid))),
        jnp.pad(bo, ((0, 0), (0, bw - n_cls_pad))),
    ], axis=0)

    folded = {"w0": w0, "w1": w1, "w_out": wo, "b_all": b_all}
    return folded, n_cls


# ----------------------------------------------------------------------------
# Forward
# ----------------------------------------------------------------------------
@functools.partial(jax.jit, static_argnames=("n_cls", "tile_b"))
def discriminator_forward(x, folded, *, n_cls, tile_b=512):
    """x: (B, mlp_input_dim) f32. folded: output of fold_discriminator_params."""
    B, D_in = x.shape
    w0, w1, wo, b_all = folded["w0"], folded["w1"], folded["w_out"], folded["b_all"]
    D_hid = w0.shape[1]
    n_cls_pad = wo.shape[1]
    bw = b_all.shape[1]

    # Single grid step at small B (kernel is per-step-overhead bound); fall
    # back to sublane-aligned batch tiles only when B exceeds tile_b.
    tb = min(tile_b, _round_up(B, 8))
    B_pad = _round_up(B, tb)
    if B_pad != B:
        x = jnp.pad(x, ((0, B_pad - B), (0, 0)))
    n_steps = B_pad // tb

    full = lambda i: (0, 0)   # grid-invariant weight/bias blocks (whole array)
    in_specs = [
        pl.BlockSpec((tb, D_in), lambda i: (i, 0)),     # x tile
        pl.BlockSpec((D_in, D_hid), full),              # w0 (LN_in folded)
        pl.BlockSpec((D_hid, D_hid), full),             # w1 (LN0 folded)
        pl.BlockSpec((D_hid, n_cls_pad), full),         # w_out (LN1 folded, padded)
        pl.BlockSpec((3, bw), full),                    # packed biases [b0; b1; b_out]
    ]

    flops = 2 * B_pad * (D_in * D_hid + D_hid * D_hid + D_hid * n_cls_pad)
    bytes_accessed = 4 * (B_pad * D_in + D_in * D_hid + D_hid * D_hid
                          + D_hid * n_cls_pad + 3 * bw + B_pad * n_cls_pad)

    out_padded = pl.pallas_call(
        _mlp_kernel,
        out_shape=jax.ShapeDtypeStruct((B_pad, n_cls_pad), jnp.float32),
        grid_spec=pltpu.PrefetchScalarGridSpec(
            num_scalar_prefetch=0,
            grid=(n_steps,),
            in_specs=in_specs,
            out_specs=pl.BlockSpec((tb, n_cls_pad), lambda i: (i, 0)),
        ),
        compiler_params=pltpu.CompilerParams(
            dimension_semantics=("parallel",)),
        cost_estimate=pl.CostEstimate(
            flops=flops, transcendentals=6 * B_pad,
            bytes_accessed=bytes_accessed),
    )(x, w0, w1, wo, b_all)

    return out_padded[:B, :n_cls]


# ----------------------------------------------------------------------------
# Pure-JAX reference (mirrors the PyTorch eval-mode forward, no folding)
# ----------------------------------------------------------------------------
def _layernorm_ref(h, g, b):
    mu = jnp.mean(h, axis=-1, keepdims=True)
    c = h - mu
    n = h.shape[-1]
    var = jnp.sum(c * c, axis=-1, keepdims=True) / (n - 1)
    return c / (jnp.sqrt(var) + LN_EPS) * g + b


def _reference_forward(x, p):
    hp = jax.lax.Precision.HIGHEST   # accurate f32 baseline on TPU
    h = _layernorm_ref(x, p["ln_in_g"], p["ln_in_b"])
    h = _layernorm_ref(jnp.maximum(jnp.dot(h, p["w0"], precision=hp) + p["b0"], 0.0),
                       p["ln0_g"], p["ln0_b"])
    h = _layernorm_ref(jnp.maximum(jnp.dot(h, p["w1"], precision=hp) + p["b1"], 0.0),
                       p["ln1_g"], p["ln1_b"])
    return jnp.dot(h, p["w_out"], precision=hp) + p["b_out"]


def make_params(key, mlp_input_dim, mlp_dim, num_classes):
    """Deterministic synthetic init. Linear weights stored as (in, out)."""
    ks = jax.random.split(key, 12)
    s0 = 1.0 / jnp.sqrt(mlp_input_dim)
    s1 = 1.0 / jnp.sqrt(mlp_dim)
    return {
        "ln_in_g": 1.0 + 0.1 * jax.random.normal(ks[6], (1, mlp_input_dim), jnp.float32),
        "ln_in_b": 0.1 * jax.random.normal(ks[7], (1, mlp_input_dim), jnp.float32),
        "w0": jax.random.uniform(ks[0], (mlp_input_dim, mlp_dim), jnp.float32, -s0, s0),
        "b0": jax.random.uniform(ks[1], (1, mlp_dim), jnp.float32, -s0, s0),
        "ln0_g": 1.0 + 0.1 * jax.random.normal(ks[8], (1, mlp_dim), jnp.float32),
        "ln0_b": 0.1 * jax.random.normal(ks[9], (1, mlp_dim), jnp.float32),
        "w1": jax.random.uniform(ks[2], (mlp_dim, mlp_dim), jnp.float32, -s1, s1),
        "b1": jax.random.uniform(ks[3], (1, mlp_dim), jnp.float32, -s1, s1),
        "ln1_g": 1.0 + 0.1 * jax.random.normal(ks[10], (1, mlp_dim), jnp.float32),
        "ln1_b": 0.1 * jax.random.normal(ks[11], (1, mlp_dim), jnp.float32),
        "w_out": jax.random.uniform(ks[4], (mlp_dim, num_classes), jnp.float32, -s1, s1),
        "b_out": jax.random.uniform(ks[5], (1, num_classes), jnp.float32, -s1, s1),
    }


if __name__ == "__main__":
    # Discriminator(mlp_input_dim=32, mlp_dim=64, num_classes=8,
    #               num_mlp_layers=2, mlp_ln=True, classifier_keep_rate=1.0)
    B, D_IN, D_HID, N_CLS = 256, 32, 64, 8

    key = jax.random.PRNGKey(0)
    k_x, k_p = jax.random.split(key)
    x = jax.random.normal(k_x, (B, D_IN), jnp.float32)
    params = make_params(k_p, D_IN, D_HID, N_CLS)

    # One-time, load-time preparation (hoisted out of the per-call hot path).
    folded, n_cls = fold_discriminator_params(params)

    out = discriminator_forward(x, folded, n_cls=n_cls)
    out = jax.block_until_ready(out)

    ref = _reference_forward(x, params)
    assert out.shape == (B, N_CLS)
    # Tolerance covers the difference between the kernel's MXU f32 matmul
    # passes and the HIGHEST-precision XLA reference (outputs are O(1));
    # structural bugs would produce O(0.1-1) errors and still be caught.
    max_err = float(jnp.max(jnp.abs(out - ref)))
    assert jnp.allclose(out, ref, atol=1e-2, rtol=1e-2), (
        f"mismatch vs reference (max abs err {max_err})")

    print("KERNEL_OK")
</pallas_src>

<mosaic_0001>
module attributes {stable_mosaic.version = 11 : i64} {
  func.func @_mlp_kernel(%arg0: i32, %arg1: memref<256x32xf32, #tpu.memory_space<vmem>>, %arg2: memref<32x64xf32, #tpu.memory_space<vmem>>, %arg3: memref<64x64xf32, #tpu.memory_space<vmem>>, %arg4: memref<64x128xf32, #tpu.memory_space<vmem>>, %arg5: memref<3x128xf32, #tpu.memory_space<vmem>>, %arg6: memref<256x128xf32, #tpu.memory_space<vmem>>) attributes {dimension_semantics = [#tpu.dimension_semantics<parallel>], iteration_bounds = array<i64: 1>, scalar_prefetch = 0 : i64, scratch_operands = 0 : i64, tpu.core_type = #tpu.core_type<tc>, window_params = [{transform_indices = @transform_0, window_bounds = array<i64: 256, 32>}, {pipeline_mode = #tpu.pipeline_mode<synchronous>, transform_indices = @transform_1, window_bounds = array<i64: 32, 64>}, {pipeline_mode = #tpu.pipeline_mode<synchronous>, transform_indices = @transform_2, window_bounds = array<i64: 64, 64>}, {pipeline_mode = #tpu.pipeline_mode<synchronous>, transform_indices = @transform_3, window_bounds = array<i64: 64, 128>}, {pipeline_mode = #tpu.pipeline_mode<synchronous>, transform_indices = @transform_4, window_bounds = array<i64: 3, 128>}, {transform_indices = @transform_5, window_bounds = array<i64: 256, 128>}]} {
    %c0 = arith.constant 0 : index
    %c0_0 = arith.constant 0 : index
    %0 = vector.load %arg5[%c0, %c0_0] : memref<3x128xf32, #tpu.memory_space<vmem>>, vector<3x128xf32>
    %1 = vector.extract_strided_slice %0 {offsets = [0, 0], sizes = [1, 64], strides = [1, 1]} : vector<3x128xf32> to vector<1x64xf32>
    %2 = vector.extract_strided_slice %0 {offsets = [1, 0], sizes = [1, 64], strides = [1, 1]} : vector<3x128xf32> to vector<1x64xf32>
    %3 = vector.extract_strided_slice %0 {offsets = [2, 0], sizes = [1, 128], strides = [1, 1]} : vector<3x128xf32> to vector<1x128xf32>
    %c0_1 = arith.constant 0 : index
    %c0_2 = arith.constant 0 : index
    %4 = vector.load %arg1[%c0_1, %c0_2] : memref<256x32xf32, #tpu.memory_space<vmem>>, vector<256x32xf32>
    %cst = arith.constant dense<0.000000e+00> : vector<256xf32>
    %5 = vector.multi_reduction <add>, %4, %cst [1] : vector<256x32xf32> to vector<256xf32>
    %6 = vector.shape_cast %5 : vector<256xf32> to vector<256x1xf32>
    %cst_3 = arith.constant 3.200000e+01 : f32
    %7 = vector.broadcast %cst_3 : f32 to vector<256x1xf32>
    %8 = arith.divf %6, %7 : vector<256x1xf32>
    %9 = vector.broadcast %8 : vector<256x1xf32> to vector<256x32xf32>
    %10 = arith.subf %4, %9 : vector<256x32xf32>
    %11 = arith.mulf %10, %10 : vector<256x32xf32>
    %cst_4 = arith.constant dense<0.000000e+00> : vector<256xf32>
    %12 = vector.multi_reduction <add>, %11, %cst_4 [1] : vector<256x32xf32> to vector<256xf32>
    %13 = vector.shape_cast %12 : vector<256xf32> to vector<256x1xf32>
    %cst_5 = arith.constant 0.0322580636 : f32
    %14 = vector.broadcast %cst_5 : f32 to vector<256x1xf32>
    %15 = arith.mulf %13, %14 : vector<256x1xf32>
    %16 = math.sqrt %15 : vector<256x1xf32>
    %cst_6 = arith.constant 9.99999997E-7 : f32
    %17 = vector.broadcast %cst_6 : f32 to vector<256x1xf32>
    %18 = arith.addf %16, %17 : vector<256x1xf32>
    %19 = tpu.reciprocal %18 : vector<256x1xf32> -> vector<256x1xf32>
    %20 = vector.broadcast %19 : vector<256x1xf32> to vector<256x32xf32>
    %21 = arith.mulf %10, %20 : vector<256x32xf32>
    %c0_7 = arith.constant 0 : index
    %c0_8 = arith.constant 0 : index
    %22 = vector.load %arg2[%c0_7, %c0_8] : memref<32x64xf32, #tpu.memory_space<vmem>>, vector<32x64xf32>
    %cst_9 = arith.constant dense<0.000000e+00> : vector<256x64xf32>
    %23 = tpu.matmul %21, %22, %cst_9 {dimension_numbers = #tpu.dot_dimension_numbers<[1], [0], [0], [1], [0, 0, 1, 1], [], []>} : vector<256x32xf32>, vector<32x64xf32>, vector<256x64xf32> -> vector<256x64xf32>
    %24 = vector.broadcast %1 : vector<1x64xf32> to vector<256x64xf32>
    %25 = arith.addf %23, %24 : vector<256x64xf32>
    %cst_10 = arith.constant 0.000000e+00 : f32
    %26 = vector.broadcast %cst_10 : f32 to vector<256x64xf32>
    %27 = arith.maximumf %25, %26 : vector<256x64xf32>
    %cst_11 = arith.constant dense<0.000000e+00> : vector<256xf32>
    %28 = vector.multi_reduction <add>, %27, %cst_11 [1] : vector<256x64xf32> to vector<256xf32>
    %29 = vector.shape_cast %28 : vector<256xf32> to vector<256x1xf32>
    %cst_12 = arith.constant 6.400000e+01 : f32
    %30 = vector.broadcast %cst_12 : f32 to vector<256x1xf32>
    %31 = arith.divf %29, %30 : vector<256x1xf32>
    %32 = vector.broadcast %31 : vector<256x1xf32> to vector<256x64xf32>
    %33 = arith.subf %27, %32 : vector<256x64xf32>
    %34 = arith.mulf %33, %33 : vector<256x64xf32>
    %cst_13 = arith.constant dense<0.000000e+00> : vector<256xf32>
    %35 = vector.multi_reduction <add>, %34, %cst_13 [1] : vector<256x64xf32> to vector<256xf32>
    %36 = vector.shape_cast %35 : vector<256xf32> to vector<256x1xf32>
    %cst_14 = arith.constant 0.0158730168 : f32
    %37 = vector.broadcast %cst_14 : f32 to vector<256x1xf32>
    %38 = arith.mulf %36, %37 : vector<256x1xf32>
    %39 = math.sqrt %38 : vector<256x1xf32>
    %cst_15 = arith.constant 9.99999997E-7 : f32
    %40 = vector.broadcast %cst_15 : f32 to vector<256x1xf32>
    %41 = arith.addf %39, %40 : vector<256x1xf32>
    %42 = tpu.reciprocal %41 : vector<256x1xf32> -> vector<256x1xf32>
    %43 = vector.broadcast %42 : vector<256x1xf32> to vector<256x64xf32>
    %44 = arith.mulf %33, %43 : vector<256x64xf32>
    %c0_16 = arith.constant 0 : index
    %c0_17 = arith.constant 0 : index
    %45 = vector.load %arg3[%c0_16, %c0_17] : memref<64x64xf32, #tpu.memory_space<vmem>>, vector<64x64xf32>
    %cst_18 = arith.constant dense<0.000000e+00> : vector<256x64xf32>
    %46 = tpu.matmul %44, %45, %cst_18 {dimension_numbers = #tpu.dot_dimension_numbers<[1], [0], [0], [1], [0, 0, 1, 1], [], []>} : vector<256x64xf32>, vector<64x64xf32>, vector<256x64xf32> -> vector<256x64xf32>
    %47 = vector.broadcast %2 : vector<1x64xf32> to vector<256x64xf32>
    %48 = arith.addf %46, %47 : vector<256x64xf32>
    %cst_19 = arith.constant 0.000000e+00 : f32
    %49 = vector.broadcast %cst_19 : f32 to vector<256x64xf32>
    %50 = arith.maximumf %48, %49 : vector<256x64xf32>
    %cst_20 = arith.constant dense<0.000000e+00> : vector<256xf32>
    %51 = vector.multi_reduction <add>, %50, %cst_20 [1] : vector<256x64xf32> to vector<256xf32>
    %52 = vector.shape_cast %51 : vector<256xf32> to vector<256x1xf32>
    %cst_21 = arith.constant 6.400000e+01 : f32
    %53 = vector.broadcast %cst_21 : f32 to vector<256x1xf32>
    %54 = arith.divf %52, %53 : vector<256x1xf32>
    %55 = vector.broadcast %54 : vector<256x1xf32> to vector<256x64xf32>
    %56 = arith.subf %50, %55 : vector<256x64xf32>
    %57 = arith.mulf %56, %56 : vector<256x64xf32>
    %cst_22 = arith.constant dense<0.000000e+00> : vector<256xf32>
    %58 = vector.multi_reduction <add>, %57, %cst_22 [1] : vector<256x64xf32> to vector<256xf32>
    %59 = vector.shape_cast %58 : vector<256xf32> to vector<256x1xf32>
    %cst_23 = arith.constant 0.0158730168 : f32
    %60 = vector.broadcast %cst_23 : f32 to vector<256x1xf32>
    %61 = arith.mulf %59, %60 : vector<256x1xf32>
    %62 = math.sqrt %61 : vector<256x1xf32>
    %cst_24 = arith.constant 9.99999997E-7 : f32
    %63 = vector.broadcast %cst_24 : f32 to vector<256x1xf32>
    %64 = arith.addf %62, %63 : vector<256x1xf32>
    %65 = tpu.reciprocal %64 : vector<256x1xf32> -> vector<256x1xf32>
    %66 = vector.broadcast %65 : vector<256x1xf32> to vector<256x64xf32>
    %67 = arith.mulf %56, %66 : vector<256x64xf32>
    %c0_25 = arith.constant 0 : index
    %c0_26 = arith.constant 0 : index
    %68 = vector.load %arg4[%c0_25, %c0_26] : memref<64x128xf32, #tpu.memory_space<vmem>>, vector<64x128xf32>
    %cst_27 = arith.constant dense<0.000000e+00> : vector<256x128xf32>
    %69 = tpu.matmul %67, %68, %cst_27 {dimension_numbers = #tpu.dot_dimension_numbers<[1], [0], [0], [1], [0, 0, 1, 1], [], []>} : vector<256x64xf32>, vector<64x128xf32>, vector<256x128xf32> -> vector<256x128xf32>
    %70 = vector.broadcast %3 : vector<1x128xf32> to vector<256x128xf32>
    %71 = arith.addf %69, %70 : vector<256x128xf32>
    %c0_28 = arith.constant 0 : index
    %c0_29 = arith.constant 0 : index
    %72 = vector.load %arg6[%c0_28, %c0_29] : memref<256x128xf32, #tpu.memory_space<vmem>>, vector<256x128xf32>
    tpu.vector_store %arg6[%c0_28, %c0_29], %71 {strides = array<i32>} : memref<256x128xf32, #tpu.memory_space<vmem>>, vector<256x128xf32>,
    return
  }
  func.func @transform_0(%arg0: i32) -> (i32, i32) {
    %c0_i32 = arith.constant 0 : i32
    %c0_i32_0 = arith.constant 0 : i32
    return %arg0, %c0_i32 : i32, i32
  }
  func.func @transform_1(%arg0: i32) -> (i32, i32) {
    %c0_i32 = arith.constant 0 : i32
    %c0_i32_0 = arith.constant 0 : i32
    %c0_i32_1 = arith.constant 0 : i32
    return %c0_i32, %c0_i32_0 : i32, i32
  }
  func.func @transform_2(%arg0: i32) -> (i32, i32) {
    %c0_i32 = arith.constant 0 : i32
    %c0_i32_0 = arith.constant 0 : i32
    %c0_i32_1 = arith.constant 0 : i32
    return %c0_i32, %c0_i32_0 : i32, i32
  }
  func.func @transform_3(%arg0: i32) -> (i32, i32) {
    %c0_i32 = arith.constant 0 : i32
    %c0_i32_0 = arith.constant 0 : i32
    %c0_i32_1 = arith.constant 0 : i32
    return %c0_i32, %c0_i32_0 : i32, i32
  }
  func.func @transform_4(%arg0: i32) -> (i32, i32) {
    %c0_i32 = arith.constant 0 : i32
    %c0_i32_0 = arith.constant 0 : i32
    %c0_i32_1 = arith.constant 0 : i32
    return %c0_i32, %c0_i32_0 : i32, i32
  }
  func.func @transform_5(%arg0: i32) -> (i32, i32) {
    %c0_i32 = arith.constant 0 : i32
    %c0_i32_0 = arith.constant 0 : i32
    return %arg0, %c0_i32 : i32, i32
  }
}

</mosaic_0001>

<llo_original>
// kernel: discriminator_forward.1
$region0: #{discriminator_forward.1}
  #allocation0 [shape = 'u32[]', space=smem, size = 0x4, offset = 0x4, fixed_abs, tag = 'smem constant byte address 0x4 - core index']
  #allocation1 [shape = 'u32[72,128]{1,0:T(1,128)}', space=vmem, size = 0x9000, scoped, tag = 'internal scratch']
  %s0 = inlined_call_operand.vmem [shape: f32[256,32], index: 0, kind: input, shape index: {}]
  %s1 = inlined_call_operand.vmem [shape: f32[32,64], index: 1, kind: input, shape index: {}]
  %s2 = inlined_call_operand.vmem [shape: f32[64,64], index: 2, kind: input, shape index: {}]
  %s3 = inlined_call_operand.vmem [shape: f32[64,128], index: 3, kind: input, shape index: {}]
  %s4 = inlined_call_operand.vmem [shape: f32[3,128], index: 4, kind: input, shape index: {}]
  %s5 = inlined_call_operand.vmem [shape: f32[256,128], index: 5, kind: output, shape index: {}]
  %s6 = sld [smem:[#allocation0]]
  $region30: #{discriminator_forward.1} parent=0
    _
  %s8 = ssub.s32 1, %s6
  %s9 = scalar_select 0, %s8, %s6
  // Predicated region
  $region2: #{discriminator_forward.1} parent=0 // pred_check
    _
  $region3: #{discriminator_forward.1} parent=0 // pred_check_branch
    %11 = sbr.rel (0) target = $region5
  $region4: #{discriminator_forward.1} parent=0 // pred_region
    _
  $region5: #{discriminator_forward.1} parent=0 // pred_fallthru
    _
  // Predicated region
  $region6: #{discriminator_forward.1} parent=0 // pred_check
    _
  $region7: #{discriminator_forward.1} parent=0 // pred_check_branch
    %13 = sbr.rel (0) target = $region9
  $region8: #{discriminator_forward.1} parent=0 // pred_region
    _
  $region9: #{discriminator_forward.1} parent=0 // pred_fallthru
    _
  // Predicated region
  $region10: #{discriminator_forward.1} parent=0 // pred_check
    _
  $region11: #{discriminator_forward.1} parent=0 // pred_check_branch
    %15 = sbr.rel (0) target = $region13
  $region12: #{discriminator_forward.1} parent=0 // pred_region
    _
  $region13: #{discriminator_forward.1} parent=0 // pred_fallthru
    _
  // Predicated region
  $region14: #{discriminator_forward.1} parent=0 // pred_check
    _
  $region15: #{discriminator_forward.1} parent=0 // pred_check_branch
    %17 = sbr.rel (0) target = $region17
  $region16: #{discriminator_forward.1} parent=0 // pred_region
    _
  $region17: #{discriminator_forward.1} parent=0 // pred_fallthru
    _
  // Predicated region
  $region18: #{discriminator_forward.1} parent=0 // pred_check
    _
  $region19: #{discriminator_forward.1} parent=0 // pred_check_branch
    %19 = sbr.rel (0) target = $region21
  $region20: #{discriminator_forward.1} parent=0 // pred_region
    _
  $region21: #{discriminator_forward.1} parent=0 // pred_fallthru
    _
  %v20 = vld [vmem:[%s4] sm:$0x7]
  %v21 = vld [vmem:[%s0] sm:$0xff]
  %v22 = vld [vmem:[%s0 + $0x8] sm:$0xff]
  %v23 = vld [vmem:[%s0 + $0x10] sm:$0xff]
  %v24 = vld [vmem:[%s0 + $0x18] sm:$0xff]
  %v25 = vld [vmem:[%s0 + $0x20] sm:$0xff]
  %v26 = vld [vmem:[%s0 + $0x28] sm:$0xff]
  %v27 = vld [vmem:[%s0 + $0x30] sm:$0xff]
  %v28 = vld [vmem:[%s0 + $0x38] sm:$0xff]
  %v29 = vld [vmem:[%s0 + $0x40] sm:$0xff]
  %v30 = vld [vmem:[%s0 + $0x48] sm:$0xff]
  %v31 = vld [vmem:[%s0 + $0x50] sm:$0xff]
  %v32 = vld [vmem:[%s0 + $0x58] sm:$0xff]
  %v33 = vld [vmem:[%s0 + $0x60] sm:$0xff]
  %v34 = vld [vmem:[%s0 + $0x68] sm:$0xff]
  %v35 = vld [vmem:[%s0 + $0x70] sm:$0xff]
  %v36 = vld [vmem:[%s0 + $0x78] sm:$0xff]
  %v37 = vld [vmem:[%s0 + $0x80] sm:$0xff]
  %v38 = vld [vmem:[%s0 + $0x88] sm:$0xff]
  %v39 = vld [vmem:[%s0 + $0x90] sm:$0xff]
  %v40 = vld [vmem:[%s0 + $0x98] sm:$0xff]
  %v41 = vld [vmem:[%s0 + $0xa0] sm:$0xff]
  %v42 = vld [vmem:[%s0 + $0xa8] sm:$0xff]
  %v43 = vld [vmem:[%s0 + $0xb0] sm:$0xff]
  %v44 = vld [vmem:[%s0 + $0xb8] sm:$0xff]
  %v45 = vld [vmem:[%s0 + $0xc0] sm:$0xff]
  %v46 = vld [vmem:[%s0 + $0xc8] sm:$0xff]
  %v47 = vld [vmem:[%s0 + $0xd0] sm:$0xff]
  %v48 = vld [vmem:[%s0 + $0xd8] sm:$0xff]
  %v49 = vld [vmem:[%s0 + $0xe0] sm:$0xff]
  %v50 = vld [vmem:[%s0 + $0xe8] sm:$0xff]
  %v51 = vld [vmem:[%s0 + $0xf0] sm:$0xff]
  %v52 = vld [vmem:[%s0 + $0xf8] sm:$0xff]
  %vm53 = vcmask 261120
  %v54 = vsel %vm53, %v21, 0.0
  %55 = vadd.xlane.f32.xlu0 %v54
  %v56 = vpop.xlane.xlu0 %55
  %v57 = vsel %vm53, %v22, 0.0
  %58 = vadd.xlane.f32.xlu0 %v57
  %v59 = vpop.xlane.xlu0 %58
  %v60 = vsel %vm53, %v23, 0.0
  %61 = vadd.xlane.f32.xlu0 %v60
  %v62 = vpop.xlane.xlu0 %61
  %v63 = vsel %vm53, %v24, 0.0
  %64 = vadd.xlane.f32.xlu0 %v63
  %v65 = vpop.xlane.xlu0 %64
  %v66 = vsel %vm53, %v25, 0.0
  %67 = vadd.xlane.f32.xlu0 %v66
  %v68 = vpop.xlane.xlu0 %67
  %v69 = vsel %vm53, %v26, 0.0
  %70 = vadd.xlane.f32.xlu0 %v69
  %v71 = vpop.xlane.xlu0 %70
  %v72 = vsel %vm53, %v27, 0.0
  %73 = vadd.xlane.f32.xlu0 %v72
  %v74 = vpop.xlane.xlu0 %73
  %v75 = vsel %vm53, %v28, 0.0
  %76 = vadd.xlane.f32.xlu0 %v75
  %v77 = vpop.xlane.xlu0 %76
  %v78 = vsel %vm53, %v29, 0.0
  %79 = vadd.xlane.f32.xlu0 %v78
  %v80 = vpop.xlane.xlu0 %79
  %v81 = vsel %vm53, %v30, 0.0
  %82 = vadd.xlane.f32.xlu0 %v81
  %v83 = vpop.xlane.xlu0 %82
  %v84 = vsel %vm53, %v31, 0.0
  %85 = vadd.xlane.f32.xlu0 %v84
  %v86 = vpop.xlane.xlu0 %85
  %v87 = vsel %vm53, %v32, 0.0
  %88 = vadd.xlane.f32.xlu0 %v87
  %v89 = vpop.xlane.xlu0 %88
  %v90 = vsel %vm53, %v33, 0.0
  %91 = vadd.xlane.f32.xlu0 %v90
  %v92 = vpop.xlane.xlu0 %91
  %v93 = vsel %vm53, %v34, 0.0
  %94 = vadd.xlane.f32.xlu0 %v93
  %v95 = vpop.xlane.xlu0 %94
  %v96 = vsel %vm53, %v35, 0.0
  %97 = vadd.xlane.f32.xlu0 %v96
  %v98 = vpop.xlane.xlu0 %97
  %v99 = vsel %vm53, %v36, 0.0
  %100 = vadd.xlane.f32.xlu0 %v99
  %v101 = vpop.xlane.xlu0 %100
  %v102 = vsel %vm53, %v37, 0.0
  %103 = vadd.xlane.f32.xlu0 %v102
  %v104 = vpop.xlane.xlu0 %103
  %v105 = vsel %vm53, %v38, 0.0
  %106 = vadd.xlane.f32.xlu0 %v105
  %v107 = vpop.xlane.xlu0 %106
  %v108 = vsel %vm53, %v39, 0.0
  %109 = vadd.xlane.f32.xlu0 %v108
  %v110 = vpop.xlane.xlu0 %109
  %v111 = vsel %vm53, %v40, 0.0
  %112 = vadd.xlane.f32.xlu0 %v111
  %v113 = vpop.xlane.xlu0 %112
  %v114 = vsel %vm53, %v41, 0.0
  %115 = vadd.xlane.f32.xlu0 %v114
  %v116 = vpop.xlane.xlu0 %115
  %v117 = vsel %vm53, %v42, 0.0
  %118 = vadd.xlane.f32.xlu0 %v117
  %v119 = vpop.xlane.xlu0 %118
  %v120 = vsel %vm53, %v43, 0.0
  %121 = vadd.xlane.f32.xlu0 %v120
  %v122 = vpop.xlane.xlu0 %121
  %v123 = vsel %vm53, %v44, 0.0
  %124 = vadd.xlane.f32.xlu0 %v123
  %v125 = vpop.xlane.xlu0 %124
  %v126 = vsel %vm53, %v45, 0.0
  %127 = vadd.xlane.f32.xlu0 %v126
  %v128 = vpop.xlane.xlu0 %127
  %v129 = vsel %vm53, %v46, 0.0
  %130 = vadd.xlane.f32.xlu0 %v129
  %v131 = vpop.xlane.xlu0 %130
  %v132 = vsel %vm53, %v47, 0.0
  %133 = vadd.xlane.f32.xlu0 %v132
  %v134 = vpop.xlane.xlu0 %133
  %v135 = vsel %vm53, %v48, 0.0
  %136 = vadd.xlane.f32.xlu0 %v135
  %v137 = vpop.xlane.xlu0 %136
  %v138 = vsel %vm53, %v49, 0.0
  %139 = vadd.xlane.f32.xlu0 %v138
  %v140 = vpop.xlane.xlu0 %139
  %v141 = vsel %vm53, %v50, 0.0
  %142 = vadd.xlane.f32.xlu0 %v141
  %v143 = vpop.xlane.xlu0 %142
  %v144 = vsel %vm53, %v51, 0.0
  %145 = vadd.xlane.f32.xlu0 %v144
  %v146 = vpop.xlane.xlu0 %145
  %v147 = vsel %vm53, %v52, 0.0
  %148 = vadd.xlane.f32.xlu0 %v147
  %v149 = vpop.xlane.xlu0 %148
  %v150 = vrcp.pop 32.0
  %v151 = vmul.f32 32.0, %v150
  %v152 = vsub.f32 1.0, %v151
  %v153 = vmul.f32 %v150, %v152
  %v154 = vadd.f32 %v150, %v153
  %vm155 = vweird.f32 %v150
  %v156 = vsel %vm155, %v150, %v154
  %v157 = vmul.f32 %v56, %v156
  %v158 = vmul.f32 %v59, %v156
  %v159 = vmul.f32 %v62, %v156
  %v160 = vmul.f32 %v65, %v156
  %v161 = vmul.f32 %v68, %v156
  %v162 = vmul.f32 %v71, %v156
  %v163 = vmul.f32 %v74, %v156
  %v164 = vmul.f32 %v77, %v156
  %v165 = vmul.f32 %v80, %v156
  %v166 = vmul.f32 %v83, %v156
  %v167 = vmul.f32 %v86, %v156
  %v168 = vmul.f32 %v89, %v156
  %v169 = vmul.f32 %v92, %v156
  %v170 = vmul.f32 %v95, %v156
  %v171 = vmul.f32 %v98, %v156
  %v172 = vmul.f32 %v101, %v156
  %v173 = vmul.f32 %v104, %v156
  %v174 = vmul.f32 %v107, %v156
  %v175 = vmul.f32 %v110, %v156
  %v176 = vmul.f32 %v113, %v156
  %v177 = vmul.f32 %v116, %v156
  %v178 = vmul.f32 %v119, %v156
  %v179 = vmul.f32 %v122, %v156
  %v180 = vmul.f32 %v125, %v156
  %v181 = vmul.f32 %v128, %v156
  %v182 = vmul.f32 %v131, %v156
  %v183 = vmul.f32 %v134, %v156
  %v184 = vmul.f32 %v137, %v156
  %v185 = vmul.f32 %v140, %v156
  %v186 = vmul.f32 %v143, %v156
  %v187 = vmul.f32 %v146, %v156
  %v188 = vmul.f32 %v149, %v156
  %v189 = vsub.f32 %v21, %v157
  %v190 = vsub.f32 %v22, %v158
  %v191 = vsub.f32 %v23, %v159
  %v192 = vsub.f32 %v24, %v160
  %v193 = vsub.f32 %v25, %v161
  %v194 = vsub.f32 %v26, %v162
  %v195 = vsub.f32 %v27, %v163
  %v196 = vsub.f32 %v28, %v164
  %v197 = vsub.f32 %v29, %v165
  %v198 = vsub.f32 %v30, %v166
  %v199 = vsub.f32 %v31, %v167
  %v200 = vsub.f32 %v32, %v168
  %v201 = vsub.f32 %v33, %v169
  %v202 = vsub.f32 %v34, %v170
  %v203 = vsub.f32 %v35, %v171
  %v204 = vsub.f32 %v36, %v172
  %v205 = vsub.f32 %v37, %v173
  %v206 = vsub.f32 %v38, %v174
  %v207 = vsub.f32 %v39, %v175
  %v208 = vsub.f32 %v40, %v176
  %v209 = vsub.f32 %v41, %v177
  %v210 = vsub.f32 %v42, %v178
  %v211 = vsub.f32 %v43, %v179
  %v212 = vsub.f32 %v44, %v180
  %v213 = vsub.f32 %v45, %v181
  %v214 = vsub.f32 %v46, %v182
  %v215 = vsub.f32 %v47, %v183
  %v216 = vsub.f32 %v48, %v184
  %v217 = vsub.f32 %v49, %v185
  %v218 = vsub.f32 %v50, %v186
  %v219 = vsub.f32 %v51, %v187
  %v220 = vsub.f32 %v52, %v188
  %v221 = vmul.f32 %v189, %v189
  %v222 = vmul.f32 %v190, %v190
  %v223 = vmul.f32 %v191, %v191
  %v224 = vmul.f32 %v192, %v192
  %v225 = vmul.f32 %v193, %v193
  %v226 = vmul.f32 %v194, %v194
  %v227 = vmul.f32 %v195, %v195
  %v228 = vmul.f32 %v196, %v196
  %v229 = vmul.f32 %v197, %v197
  %v230 = vmul.f32 %v198, %v198
  %v231 = vmul.f32 %v199, %v199
  %v232 = vmul.f32 %v200, %v200
  %v233 = vmul.f32 %v201, %v201
  %v234 = vmul.f32 %v202, %v202
  %v235 = vmul.f32 %v203, %v203
  %v236 = vmul.f32 %v204, %v204
  %v237 = vmul.f32 %v205, %v205
  %v238 = vmul.f32 %v206, %v206
  %v239 = vmul.f32 %v207, %v207
  %v240 = vmul.f32 %v208, %v208
  %v241 = vmul.f32 %v209, %v209
  %v242 = vmul.f32 %v210, %v210
  %v243 = vmul.f32 %v211, %v211
  %v244 = vmul.f32 %v212, %v212
  %v245 = vmul.f32 %v213, %v213
  %v246 = vmul.f32 %v214, %v214
  %v247 = vmul.f32 %v215, %v215
  %v248 = vmul.f32 %v216, %v216
  %v249 = vmul.f32 %v217, %v217
  %v250 = vmul.f32 %v218, %v218
  %v251 = vmul.f32 %v219, %v219
  %v252 = vmul.f32 %v220, %v220
  %v253 = vsel %vm53, %v221, 0.0
  %254 = vadd.xlane.f32.xlu0 %v253
  %v255 = vpop.xlane.xlu0 %254
  %v256 = vsel %vm53, %v222, 0.0
  %257 = vadd.xlane.f32.xlu0 %v256
  %v258 = vpop.xlane.xlu0 %257
  %v259 = vsel %vm53, %v223, 0.0
  %260 = vadd.xlane.f32.xlu0 %v259
  %v261 = vpop.xlane.xlu0 %260
  %v262 = vsel %vm53, %v224, 0.0
  %263 = vadd.xlane.f32.xlu0 %v262
  %v264 = vpop.xlane.xlu0 %263
  %v265 = vsel %vm53, %v225, 0.0
  %266 = vadd.xlane.f32.xlu0 %v265
  %v267 = vpop.xlane.xlu0 %266
  %v268 = vsel %vm53, %v226, 0.0
  %269 = vadd.xlane.f32.xlu0 %v268
  %v270 = vpop.xlane.xlu0 %269
  %v271 = vsel %vm53, %v227, 0.0
  %272 = vadd.xlane.f32.xlu0 %v271
  %v273 = vpop.xlane.xlu0 %272
  %v274 = vsel %vm53, %v228, 0.0
  %275 = vadd.xlane.f32.xlu0 %v274
  %v276 = vpop.xlane.xlu0 %275
  %v277 = vsel %vm53, %v229, 0.0
  %278 = vadd.xlane.f32.xlu0 %v277
  %v279 = vpop.xlane.xlu0 %278
  %v280 = vsel %vm53, %v230, 0.0
  %281 = vadd.xlane.f32.xlu0 %v280
  %v282 = vpop.xlane.xlu0 %281
  %v283 = vsel %vm53, %v231, 0.0
  %284 = vadd.xlane.f32.xlu0 %v283
  %v285 = vpop.xlane.xlu0 %284
  %v286 = vsel %vm53, %v232, 0.0
  %287 = vadd.xlane.f32.xlu0 %v286
  %v288 = vpop.xlane.xlu0 %287
  %v289 = vsel %vm53, %v233, 0.0
  %290 = vadd.xlane.f32.xlu0 %v289
  %v291 = vpop.xlane.xlu0 %290
  %v292 = vsel %vm53, %v234, 0.0
  %293 = vadd.xlane.f32.xlu0 %v292
  %v294 = vpop.xlane.xlu0 %293
  %v295 = vsel %vm53, %v235, 0.0
  %296 = vadd.xlane.f32.xlu0 %v295
  %v297 = vpop.xlane.xlu0 %296
  %v298 = vsel %vm53, %v236, 0.0
  %299 = vadd.xlane.f32.xlu0 %v298
  %v300 = vpop.xlane.xlu0 %299
  %v301 = vsel %vm53, %v237, 0.0
  %302 = vadd.xlane.f32.xlu0 %v301
  %v303 = vpop.xlane.xlu0 %302
  %v304 = vsel %vm53, %v238, 0.0
  %305 = vadd.xlane.f32.xlu0 %v304
  %v306 = vpop.xlane.xlu0 %305
  %v307 = vsel %vm53, %v239, 0.0
  %308 = vadd.xlane.f32.xlu0 %v307
  %v309 = vpop.xlane.xlu0 %308
  %v310 = vsel %vm53, %v240, 0.0
  %311 = vadd.xlane.f32.xlu0 %v310
  %v312 = vpop.xlane.xlu0 %311
  %v313 = vsel %vm53, %v241, 0.0
  %314 = vadd.xlane.f32.xlu0 %v313
  %v315 = vpop.xlane.xlu0 %314
  %v316 = vsel %vm53, %v242, 0.0
  %317 = vadd.xlane.f32.xlu0 %v316
  %v318 = vpop.xlane.xlu0 %317
  %v319 = vsel %vm53, %v243, 0.0
  %320 = vadd.xlane.f32.xlu0 %v319
  %v321 = vpop.xlane.xlu0 %320
  %v322 = vsel %vm53, %v244, 0.0
  %323 = vadd.xlane.f32.xlu0 %v322
  %v324 = vpop.xlane.xlu0 %323
  %v325 = vsel %vm53, %v245, 0.0
  %326 = vadd.xlane.f32.xlu0 %v325
  %v327 = vpop.xlane.xlu0 %326
  %v328 = vsel %vm53, %v246, 0.0
  %329 = vadd.xlane.f32.xlu0 %v328
  %v330 = vpop.xlane.xlu0 %329
  %v331 = vsel %vm53, %v247, 0.0
  %332 = vadd.xlane.f32.xlu0 %v331
  %v333 = vpop.xlane.xlu0 %332
  %v334 = vsel %vm53, %v248, 0.0
  %335 = vadd.xlane.f32.xlu0 %v334
  %v336 = vpop.xlane.xlu0 %335
  %v337 = vsel %vm53, %v249, 0.0
  %338 = vadd.xlane.f32.xlu0 %v337
  %v339 = vpop.xlane.xlu0 %338
  %v340 = vsel %vm53, %v250, 0.0
  %341 = vadd.xlane.f32.xlu0 %v340
  %v342 = vpop.xlane.xlu0 %341
  %v343 = vsel %vm53, %v251, 0.0
  %344 = vadd.xlane.f32.xlu0 %v343
  %v345 = vpop.xlane.xlu0 %344
  %v346 = vsel %vm53, %v252, 0.0
  %347 = vadd.xlane.f32.xlu0 %v346
  %v348 = vpop.xlane.xlu0 %347
  %v349 = vmul.f32 %v255, 0.032258064
  %v350 = vmul.f32 %v258, 0.032258064
  %v351 = vmul.f32 %v261, 0.032258064
  %v352 = vmul.f32 %v264, 0.032258064
  %v353 = vmul.f32 %v267, 0.032258064
  %v354 = vmul.f32 %v270, 0.032258064
  %v355 = vmul.f32 %v273, 0.032258064
  %v356 = vmul.f32 %v276, 0.032258064
  %v357 = vmul.f32 %v279, 0.032258064
  %v358 = vmul.f32 %v282, 0.032258064
  %v359 = vmul.f32 %v285, 0.032258064
  %v360 = vmul.f32 %v288, 0.032258064
  %v361 = vmul.f32 %v291, 0.032258064
  %v362 = vmul.f32 %v294, 0.032258064
  %v363 = vmul.f32 %v297, 0.032258064
  %v364 = vmul.f32 %v300, 0.032258064
  %v365 = vmul.f32 %v303, 0.032258064
  %v366 = vmul.f32 %v306, 0.032258064
  %v367 = vmul.f32 %v309, 0.032258064
  %v368 = vmul.f32 %v312, 0.032258064
  %v369 = vmul.f32 %v315, 0.032258064
  %v370 = vmul.f32 %v318, 0.032258064
  %v371 = vmul.f32 %v321, 0.032258064
  %v372 = vmul.f32 %v324, 0.032258064
  %v373 = vmul.f32 %v327, 0.032258064
  %v374 = vmul.f32 %v330, 0.032258064
  %v375 = vmul.f32 %v333, 0.032258064
  %v376 = vmul.f32 %v336, 0.032258064
  %v377 = vmul.f32 %v339, 0.032258064
  %v378 = vmul.f32 %v342, 0.032258064
  %v379 = vmul.f32 %v345, 0.032258064
  %v380 = vmul.f32 %v348, 0.032258064
  %v381 = vrsqrt.pop %v349
  %v382 = vmul.f32 %v381, %v349
  %v383 = vmul.f32 %v382, %v381
  %v384 = vmul.f32 0.5, %v383
  %v385 = vsub.f32 1.5, %v384
  %v386 = vmul.f32 %v381, %v385
  %v387 = vmul.f32 %v349, %v386
  %vm388 = vcmp.eq.f32.partialorder %v349, inf
  %v389 = vsel %vm388, %v349, %v387
  %vm390 = vcmp.eq.f32.partialorder %v349, 0.0
  %v391 = vand.u32 %v349, 2147483648
  %v392 = vsel %vm390, %v391, %v389
  %v393 = vrsqrt.pop %v350
  %v394 = vmul.f32 %v393, %v350
  %v395 = vmul.f32 %v394, %v393
  %v396 = vmul.f32 0.5, %v395
  %v397 = vsub.f32 1.5, %v396
  %v398 = vmul.f32 %v393, %v397
  %v399 = vmul.f32 %v350, %v398
  %vm400 = vcmp.eq.f32.partialorder %v350, inf
  %v401 = vsel %vm400, %v350, %v399
  %vm402 = vcmp.eq.f32.partialorder %v350, 0.0
  %v403 = vand.u32 %v350, 2147483648
  %v404 = vsel %vm402, %v403, %v401
  %v405 = vrsqrt.pop %v351
  %v406 = vmul.f32 %v405, %v351
  %v407 = vmul.f32 %v406, %v405
  %v408 = vmul.f32 0.5, %v407
  %v409 = vsub.f32 1.5, %v408
  %v410 = vmul.f32 %v405, %v409
  %v411 = vmul.f32 %v351, %v410
  %vm412 = vcmp.eq.f32.partialorder %v351, inf
  %v413 = vsel %vm412, %v351, %v411
  %vm414 = vcmp.eq.f32.partialorder %v351, 0.0
  %v415 = vand.u32 %v351, 2147483648
  %v416 = vsel %vm414, %v415, %v413
  %v417 = vrsqrt.pop %v352
  %v418 = vmul.f32 %v417, %v352
  %v419 = vmul.f32 %v418, %v417
  %v420 = vmul.f32 0.5, %v419
  %v421 = vsub.f32 1.5, %v420
  %v422 = vmul.f32 %v417, %v421
  %v423 = vmul.f32 %v352, %v422
  %vm424 = vcmp.eq.f32.partialorder %v352, inf
  %v425 = vsel %vm424, %v352, %v423
  %vm426 = vcmp.eq.f32.partialorder %v352, 0.0
  %v427 = vand.u32 %v352, 2147483648
  %v428 = vsel %vm426, %v427, %v425
  %v429 = vrsqrt.pop %v353
  %v430 = vmul.f32 %v429, %v353
  %v431 = vmul.f32 %v430, %v429
  %v432 = vmul.f32 0.5, %v431
  %v433 = vsub.f32 1.5, %v432
  %v434 = vmul.f32 %v429, %v433
  %v435 = vmul.f32 %v353, %v434
  %vm436 = vcmp.eq.f32.partialorder %v353, inf
  %v437 = vsel %vm436, %v353, %v435
  %vm438 = vcmp.eq.f32.partialorder %v353, 0.0
  %v439 = vand.u32 %v353, 2147483648
  %v440 = vsel %vm438, %v439, %v437
  %v441 = vrsqrt.pop %v354
  %v442 = vmul.f32 %v441, %v354
  %v443 = vmul.f32 %v442, %v441
  %v444 = vmul.f32 0.5, %v443
  %v445 = vsub.f32 1.5, %v444
  %v446 = vmul.f32 %v441, %v445
  %v447 = vmul.f32 %v354, %v446
  %vm448 = vcmp.eq.f32.partialorder %v354, inf
  %v449 = vsel %vm448, %v354, %v447
  %vm450 = vcmp.eq.f32.partialorder %v354, 0.0
  %v451 = vand.u32 %v354, 2147483648
  %v452 = vsel %vm450, %v451, %v449
  %v453 = vrsqrt.pop %v355
  %v454 = vmul.f32 %v453, %v355
  %v455 = vmul.f32 %v454, %v453
  %v456 = vmul.f32 0.5, %v455
  %v457 = vsub.f32 1.5, %v456
  %v458 = vmul.f32 %v453, %v457
  %v459 = vmul.f32 %v355, %v458
  %vm460 = vcmp.eq.f32.partialorder %v355, inf
  %v461 = vsel %vm460, %v355, %v459
  %vm462 = vcmp.eq.f32.partialorder %v355, 0.0
  %v463 = vand.u32 %v355, 2147483648
  %v464 = vsel %vm462, %v463, %v461
  %v465 = vrsqrt.pop %v356
  %v466 = vmul.f32 %v465, %v356
  %v467 = vmul.f32 %v466, %v465
  %v468 = vmul.f32 0.5, %v467
  %v469 = vsub.f32 1.5, %v468
  %v470 = vmul.f32 %v465, %v469
  %v471 = vmul.f32 %v356, %v470
  %vm472 = vcmp.eq.f32.partialorder %v356, inf
  %v473 = vsel %vm472, %v356, %v471
  %vm474 = vcmp.eq.f32.partialorder %v356, 0.0
  %v475 = vand.u32 %v356, 2147483648
  %v476 = vsel %vm474, %v475, %v473
  %v477 = vrsqrt.pop %v357
  %v478 = vmul.f32 %v477, %v357
  %v479 = vmul.f32 %v478, %v477
  %v480 = vmul.f32 0.5, %v479
  %v481 = vsub.f32 1.5, %v480
  %v482 = vmul.f32 %v477, %v481
  %v483 = vmul.f32 %v357, %v482
  %vm484 = vcmp.eq.f32.partialorder %v357, inf
  %v485 = vsel %vm484, %v357, %v483
  %vm486 = vcmp.eq.f32.partialorder %v357, 0.0
  %v487 = vand.u32 %v357, 2147483648
  %v488 = vsel %vm486, %v487, %v485
  %v489 = vrsqrt.pop %v358
  %v490 = vmul.f32 %v489, %v358
  %v491 = vmul.f32 %v490, %v489
  %v492 = vmul.f32 0.5, %v491
  %v493 = vsub.f32 1.5, %v492
  %v494 = vmul.f32 %v489, %v493
  %v495 = vmul.f32 %v358, %v494
  %vm496 = vcmp.eq.f32.partialorder %v358, inf
  %v497 = vsel %vm496, %v358, %v495
  %vm498 = vcmp.eq.f32.partialorder %v358, 0.0
  %v499 = vand.u32 %v358, 2147483648
  %v500 = vsel %vm498, %v499, %v497
  %v501 = vrsqrt.pop %v359
  %v502 = vmul.f32 %v501, %v359
  %v503 = vmul.f32 %v502, %v501
  %v504 = vmul.f32 0.5, %v503
  %v505 = vsub.f32 1.5, %v504
  %v506 = vmul.f32 %v501, %v505
  %v507 = vmul.f32 %v359, %v506
  %vm508 = vcmp.eq.f32.partialorder %v359, inf
  %v509 = vsel %vm508, %v359, %v507
  %vm510 = vcmp.eq.f32.partialorder %v359, 0.0
  %v511 = vand.u32 %v359, 2147483648
  %v512 = vsel %vm510, %v511, %v509
  %v513 = vrsqrt.pop %v360
  %v514 = vmul.f32 %v513, %v360
  %v515 = vmul.f32 %v514, %v513
  %v516 = vmul.f32 0.5, %v515
  %v517 = vsub.f32 1.5, %v516
  %v518 = vmul.f32 %v513, %v517
  %v519 = vmul.f32 %v360, %v518
  %vm520 = vcmp.eq.f32.partialorder %v360, inf
  %v521 = vsel %vm520, %v360, %v519
  %vm522 = vcmp.eq.f32.partialorder %v360, 0.0
  %v523 = vand.u32 %v360, 2147483648
  %v524 = vsel %vm522, %v523, %v521
  %v525 = vrsqrt.pop %v361
  %v526 = vmul.f32 %v525, %v361
  %v527 = vmul.f32 %v526, %v525
  %v528 = vmul.f32 0.5, %v527
  %v529 = vsub.f32 1.5, %v528
  %v530 = vmul.f32 %v525, %v529
  %v531 = vmul.f32 %v361, %v530
  %vm532 = vcmp.eq.f32.partialorder %v361, inf
  %v533 = vsel %vm532, %v361, %v531
  %vm534 = vcmp.eq.f32.partialorder %v361, 0.0
  %v535 = vand.u32 %v361, 2147483648
  %v536 = vsel %vm534, %v535, %v533
  %v537 = vrsqrt.pop %v362
  %v538 = vmul.f32 %v537, %v362
  %v539 = vmul.f32 %v538, %v537
  %v540 = vmul.f32 0.5, %v539
  %v541 = vsub.f32 1.5, %v540
  %v542 = vmul.f32 %v537, %v541
  %v543 = vmul.f32 %v362, %v542
  %vm544 = vcmp.eq.f32.partialorder %v362, inf
  %v545 = vsel %vm544, %v362, %v543
  %vm546 = vcmp.eq.f32.partialorder %v362, 0.0
  %v547 = vand.u32 %v362, 2147483648
  %v548 = vsel %vm546, %v547, %v545
  %v549 = vrsqrt.pop %v363
  %v550 = vmul.f32 %v549, %v363
  %v551 = vmul.f32 %v550, %v549
  %v552 = vmul.f32 0.5, %v551
  %v553 = vsub.f32 1.5, %v552
  %v554 = vmul.f32 %v549, %v553
  %v555 = vmul.f32 %v363, %v554
  %vm556 = vcmp.eq.f32.partialorder %v363, inf
  %v557 = vsel %vm556, %v363, %v555
  %vm558 = vcmp.eq.f32.partialorder %v363, 0.0
  %v559 = vand.u32 %v363, 2147483648
  %v560 = vsel %vm558, %v559, %v557
  %v561 = vrsqrt.pop %v364
  %v562 = vmul.f32 %v561, %v364
  %v563 = vmul.f32 %v562, %v561
  %v564 = vmul.f32 0.5, %v563
  %v565 = vsub.f32 1.5, %v564
  %v566 = vmul.f32 %v561, %v565
  %v567 = vmul.f32 %v364, %v566
  %vm568 = vcmp.eq.f32.partialorder %v364, inf
  %v569 = vsel %vm568, %v364, %v567
  %vm570 = vcmp.eq.f32.partialorder %v364, 0.0
  %v571 = vand.u32 %v364, 2147483648
  %v572 = vsel %vm570, %v571, %v569
  %v573 = vrsqrt.pop %v365
  %v574 = vmul.f32 %v573, %v365
  %v575 = vmul.f32 %v574, %v573
  %v576 = vmul.f32 0.5, %v575
  %v577 = vsub.f32 1.5, %v576
  %v578 = vmul.f32 %v573, %v577
  %v579 = vmul.f32 %v365, %v578
  %vm580 = vcmp.eq.f32.partialorder %v365, inf
  %v581 = vsel %vm580, %v365, %v579
  %vm582 = vcmp.eq.f32.partialorder %v365, 0.0
  %v583 = vand.u32 %v365, 2147483648
  %v584 = vsel %vm582, %v583, %v581
  %v585 = vrsqrt.pop %v366
  %v586 = vmul.f32 %v585, %v366
  %v587 = vmul.f32 %v586, %v585
  %v588 = vmul.f32 0.5, %v587
  %v589 = vsub.f32 1.5, %v588
  %v590 = vmul.f32 %v585, %v589
  %v591 = vmul.f32 %v366, %v590
  %vm592 = vcmp.eq.f32.partialorder %v366, inf
  %v593 = vsel %vm592, %v366, %v591
  %vm594 = vcmp.eq.f32.partialorder %v366, 0.0
  %v595 = vand.u32 %v366, 2147483648
  %v596 = vsel %vm594, %v595, %v593
  %v597 = vrsqrt.pop %v367
  %v598 = vmul.f32 %v597, %v367
  %v599 = vmul.f32 %v598, %v597
  %v600 = vmul.f32 0.5, %v599
  %v601 = vsub.f32 1.5, %v600
  %v602 = vmul.f32 %v597, %v601
  %v603 = vmul.f32 %v367, %v602
  %vm604 = vcmp.eq.f32.partialorder %v367, inf
  %v605 = vsel %vm604, %v367, %v603
  %vm606 = vcmp.eq.f32.partialorder %v367, 0.0
  %v607 = vand.u32 %v367, 2147483648
  %v608 = vsel %vm606, %v607, %v605
  %v609 = vrsqrt.pop %v368
  %v610 = vmul.f32 %v609, %v368
  %v611 = vmul.f32 %v610, %v609
  %v612 = vmul.f32 0.5, %v611
  %v613 = vsub.f32 1.5, %v612
  %v614 = vmul.f32 %v609, %v613
  %v615 = vmul.f32 %v368, %v614
  %vm616 = vcmp.eq.f32.partialorder %v368, inf
  %v617 = vsel %vm616, %v368, %v615
  %vm618 = vcmp.eq.f32.partialorder %v368, 0.0
  %v619 = vand.u32 %v368, 2147483648
  %v620 = vsel %vm618, %v619, %v617
  %v621 = vrsqrt.pop %v369
  %v622 = vmul.f32 %v621, %v369
  %v623 = vmul.f32 %v622, %v621
  %v624 = vmul.f32 0.5, %v623
  %v625 = vsub.f32 1.5, %v624
  %v626 = vmul.f32 %v621, %v625
  %v627 = vmul.f32 %v369, %v626
  %vm628 = vcmp.eq.f32.partialorder %v369, inf
  %v629 = vsel %vm628, %v369, %v627
  %vm630 = vcmp.eq.f32.partialorder %v369, 0.0
  %v631 = vand.u32 %v369, 2147483648
  %v632 = vsel %vm630, %v631, %v629
  %v633 = vrsqrt.pop %v370
  %v634 = vmul.f32 %v633, %v370
  %v635 = vmul.f32 %v634, %v633
  %v636 = vmul.f32 0.5, %v635
  %v637 = vsub.f32 1.5, %v636
  %v638 = vmul.f32 %v633, %v637
  %v639 = vmul.f32 %v370, %v638
  %vm640 = vcmp.eq.f32.partialorder %v370, inf
  %v641 = vsel %vm640, %v370, %v639
  %vm642 = vcmp.eq.f32.partialorder %v370, 0.0
  %v643 = vand.u32 %v370, 2147483648
  %v644 = vsel %vm642, %v643, %v641
  %v645 = vrsqrt.pop %v371
  %v646 = vmul.f32 %v645, %v371
  %v647 = vmul.f32 %v646, %v645
  %v648 = vmul.f32 0.5, %v647
  %v649 = vsub.f32 1.5, %v648
  %v650 = vmul.f32 %v645, %v649
  %v651 = vmul.f32 %v371, %v650
  %vm652 = vcmp.eq.f32.partialorder %v371, inf
  %v653 = vsel %vm652, %v371, %v651
  %vm654 = vcmp.eq.f32.partialorder %v371, 0.0
  %v655 = vand.u32 %v371, 2147483648
  %v656 = vsel %vm654, %v655, %v653
  %v657 = vrsqrt.pop %v372
  %v658 = vmul.f32 %v657, %v372
  %v659 = vmul.f32 %v658, %v657
  %v660 = vmul.f32 0.5, %v659
  %v661 = vsub.f32 1.5, %v660
  %v662 = vmul.f32 %v657, %v661
  %v663 = vmul.f32 %v372, %v662
  %vm664 = vcmp.eq.f32.partialorder %v372, inf
  %v665 = vsel %vm664, %v372, %v663
  %vm666 = vcmp.eq.f32.partialorder %v372, 0.0
  %v667 = vand.u32 %v372, 2147483648
  %v668 = vsel %vm666, %v667, %v665
  %v669 = vrsqrt.pop %v373
  %v670 = vmul.f32 %v669, %v373
  %v671 = vmul.f32 %v670, %v669
  %v672 = vmul.f32 0.5, %v671
  %v673 = vsub.f32 1.5, %v672
  %v674 = vmul.f32 %v669, %v673
  %v675 = vmul.f32 %v373, %v674
  %vm676 = vcmp.eq.f32.partialorder %v373, inf
  %v677 = vsel %vm676, %v373, %v675
  %vm678 = vcmp.eq.f32.partialorder %v373, 0.0
  %v679 = vand.u32 %v373, 2147483648
  %v680 = vsel %vm678, %v679, %v677
  %v681 = vrsqrt.pop %v374
  %v682 = vmul.f32 %v681, %v374
  %v683 = vmul.f32 %v682, %v681
  %v684 = vmul.f32 0.5, %v683
  %v685 = vsub.f32 1.5, %v684
  %v686 = vmul.f32 %v681, %v685
  %v687 = vmul.f32 %v374, %v686
  %vm688 = vcmp.eq.f32.partialorder %v374, inf
  %v689 = vsel %vm688, %v374, %v687
  %vm690 = vcmp.eq.f32.partialorder %v374, 0.0
  %v691 = vand.u32 %v374, 2147483648
  %v692 = vsel %vm690, %v691, %v689
  %v693 = vrsqrt.pop %v375
  %v694 = vmul.f32 %v693, %v375
  %v695 = vmul.f32 %v694, %v693
  %v696 = vmul.f32 0.5, %v695
  %v697 = vsub.f32 1.5, %v696
  %v698 = vmul.f32 %v693, %v697
  %v699 = vmul.f32 %v375, %v698
  %vm700 = vcmp.eq.f32.partialorder %v375, inf
  %v701 = vsel %vm700, %v375, %v699
  %vm702 = vcmp.eq.f32.partialorder %v375, 0.0
  %v703 = vand.u32 %v375, 2147483648
  %v704 = vsel %vm702, %v703, %v701
  %v705 = vrsqrt.pop %v376
  %v706 = vmul.f32 %v705, %v376
  %v707 = vmul.f32 %v706, %v705
  %v708 = vmul.f32 0.5, %v707
  %v709 = vsub.f32 1.5, %v708
  %v710 = vmul.f32 %v705, %v709
  %v711 = vmul.f32 %v376, %v710
  %vm712 = vcmp.eq.f32.partialorder %v376, inf
  %v713 = vsel %vm712, %v376, %v711
  %vm714 = vcmp.eq.f32.partialorder %v376, 0.0
  %v715 = vand.u32 %v376, 2147483648
  %v716 = vsel %vm714, %v715, %v713
  %v717 = vrsqrt.pop %v377
  %v718 = vmul.f32 %v717, %v377
  %v719 = vmul.f32 %v718, %v717
  %v720 = vmul.f32 0.5, %v719
  %v721 = vsub.f32 1.5, %v720
  %v722 = vmul.f32 %v717, %v721
  %v723 = vmul.f32 %v377, %v722
  %vm724 = vcmp.eq.f32.partialorder %v377, inf
  %v725 = vsel %vm724, %v377, %v723
  %vm726 = vcmp.eq.f32.partialorder %v377, 0.0
  %v727 = vand.u32 %v377, 2147483648
  %v728 = vsel %vm726, %v727, %v725
  %v729 = vrsqrt.pop %v378
  %v730 = vmul.f32 %v729, %v378
  %v731 = vmul.f32 %v730, %v729
  %v732 = vmul.f32 0.5, %v731
  %v733 = vsub.f32 1.5, %v732
  %v734 = vmul.f32 %v729, %v733
  %v735 = vmul.f32 %v378, %v734
  %vm736 = vcmp.eq.f32.partialorder %v378, inf
  %v737 = vsel %vm736, %v378, %v735
  %vm738 = vcmp.eq.f32.partialorder %v378, 0.0
  %v739 = vand.u32 %v378, 2147483648
  %v740 = vsel %vm738, %v739, %v737
  %v741 = vrsqrt.pop %v379
  %v742 = vmul.f32 %v741, %v379
  %v743 = vmul.f32 %v742, %v741
  %v744 = vmul.f32 0.5, %v743
  %v745 = vsub.f32 1.5, %v744
  %v746 = vmul.f32 %v741, %v745
  %v747 = vmul.f32 %v379, %v746
  %vm748 = vcmp.eq.f32.partialorder %v379, inf
  %v749 = vsel %vm748, %v379, %v747
  %vm750 = vcmp.eq.f32.partialorder %v379, 0.0
  %v751 = vand.u32 %v379, 2147483648
  %v752 = vsel %vm750, %v751, %v749
  %v753 = vrsqrt.pop %v380
  %v754 = vmul.f32 %v753, %v380
  %v755 = vmul.f32 %v754, %v753
  %v756 = vmul.f32 0.5, %v755
  %v757 = vsub.f32 1.5, %v756
  %v758 = vmul.f32 %v753, %v757
  %v759 = vmul.f32 %v380, %v758
  %vm760 = vcmp.eq.f32.partialorder %v380, inf
  %v761 = vsel %vm760, %v380, %v759
  %vm762 = vcmp.eq.f32.partialorder %v380, 0.0
  %v763 = vand.u32 %v380, 2147483648
  %v764 = vsel %vm762, %v763, %v761
  %v765 = vadd.f32 %v392, 1e-06
  %v766 = vadd.f32 %v404, 1e-06
  %v767 = vadd.f32 %v416, 1e-06
  %v768 = vadd.f32 %v428, 1e-06
  %v769 = vadd.f32 %v440, 1e-06
  %v770 = vadd.f32 %v452, 1e-06
  %v771 = vadd.f32 %v464, 1e-06
  %v772 = vadd.f32 %v476, 1e-06
  %v773 = vadd.f32 %v488, 1e-06
  %v774 = vadd.f32 %v500, 1e-06
  %v775 = vadd.f32 %v512, 1e-06
  %v776 = vadd.f32 %v524, 1e-06
  %v777 = vadd.f32 %v536, 1e-06
  %v778 = vadd.f32 %v548, 1e-06
  %v779 = vadd.f32 %v560, 1e-06
  %v780 = vadd.f32 %v572, 1e-06
  %v781 = vadd.f32 %v584, 1e-06
  %v782 = vadd.f32 %v596, 1e-06
  %v783 = vadd.f32 %v608, 1e-06
  %v784 = vadd.f32 %v620, 1e-06
  %v785 = vadd.f32 %v632, 1e-06
  %v786 = vadd.f32 %v644, 1e-06
  %v787 = vadd.f32 %v656, 1e-06
  %v788 = vadd.f32 %v668, 1e-06
  %v789 = vadd.f32 %v680, 1e-06
  %v790 = vadd.f32 %v692, 1e-06
  %v791 = vadd.f32 %v704, 1e-06
  %v792 = vadd.f32 %v716, 1e-06
  %v793 = vadd.f32 %v728, 1e-06
  %v794 = vadd.f32 %v740, 1e-06
  %v795 = vadd.f32 %v752, 1e-06
  %v796 = vadd.f32 %v764, 1e-06
  %v797 = vrcp.pop %v765
  %v798 = vmul.f32 %v765, %v797
  %v799 = vsub.f32 1.0, %v798
  %v800 = vmul.f32 %v797, %v799
  %v801 = vadd.f32 %v797, %v800
  %vm802 = vweird.f32 %v765
  %vm803 = vweird.f32 %v797
  %vm804 = vmor %vm802, %vm803
  %v805 = vsel %vm804, %v797, %v801
  %v806 = vand.u32 2147483647, %v765
  %vm807 = vcmp.eq.f32.partialorder %v806, 8.507059e+37
  %v808 = vand.u32 %v765, 2147483648
  %v809 = vor.u32 1.1754944e-38, %v808
  %v810 = vsel %vm807, %v809, %v805
  %v811 = vrcp.pop %v766
  %v812 = vmul.f32 %v766, %v811
  %v813 = vsub.f32 1.0, %v812
  %v814 = vmul.f32 %v811, %v813
  %v815 = vadd.f32 %v811, %v814
  %vm816 = vweird.f32 %v766
  %vm817 = vweird.f32 %v811
  %vm818 = vmor %vm816, %vm817
  %v819 = vsel %vm818, %v811, %v815
  %v820 = vand.u32 2147483647, %v766
  %vm821 = vcmp.eq.f32.partialorder %v820, 8.507059e+37
  %v822 = vand.u32 %v766, 2147483648
  %v823 = vor.u32 1.1754944e-38, %v822
  %v824 = vsel %vm821, %v823, %v819
  %v825 = vrcp.pop %v767
  %v826 = vmul.f32 %v767, %v825
  %v827 = vsub.f32 1.0, %v826
  %v828 = vmul.f32 %v825, %v827
  %v829 = vadd.f32 %v825, %v828
  %vm830 = vweird.f32 %v767
  %vm831 = vweird.f32 %v825
  %vm832 = vmor %vm830, %vm831
  %v833 = vsel %vm832, %v825, %v829
  %v834 = vand.u32 2147483647, %v767
  %vm835 = vcmp.eq.f32.partialorder %v834, 8.507059e+37
  %v836 = vand.u32 %v767, 2147483648
  %v837 = vor.u32 1.1754944e-38, %v836
  %v838 = vsel %vm835, %v837, %v833
  %v839 = vrcp.pop %v768
  %v840 = vmul.f32 %v768, %v839
  %v841 = vsub.f32 1.0, %v840
  %v842 = vmul.f32 %v839, %v841
  %v843 = vadd.f32 %v839, %v842
  %vm844 = vweird.f32 %v768
  %vm845 = vweird.f32 %v839
  %vm846 = vmor %vm844, %vm845
  %v847 = vsel %vm846, %v839, %v843
  %v848 = vand.u32 2147483647, %v768
  %vm849 = vcmp.eq.f32.partialorder %v848, 8.507059e+37
  %v850 = vand.u32 %v768, 2147483648
  %v851 = vor.u32 1.1754944e-38, %v850
  %v852 = vsel %vm849, %v851, %v847
  %v853 = vrcp.pop %v769
  %v854 = vmul.f32 %v769, %v853
  %v855 = vsub.f32 1.0, %v854
  %v856 = vmul.f32 %v853, %v855
  %v857 = vadd.f32 %v853, %v856
  %vm858 = vweird.f32 %v769
  %vm859 = vweird.f32 %v853
  %vm860 = vmor %vm858, %vm859
  %v861 = vsel %vm860, %v853, %v857
  %v862 = vand.u32 2147483647, %v769
  %vm863 = vcmp.eq.f32.partialorder %v862, 8.507059e+37
  %v864 = vand.u32 %v769, 2147483648
  %v865 = vor.u32 1.1754944e-38, %v864
  %v866 = vsel %vm863, %v865, %v861
  %v867 = vrcp.pop %v770
  %v868 = vmul.f32 %v770, %v867
  %v869 = vsub.f32 1.0, %v868
  %v870 = vmul.f32 %v867, %v869
  %v871 = vadd.f32 %v867, %v870
  %vm872 = vweird.f32 %v770
  %vm873 = vweird.f32 %v867
  %vm874 = vmor %vm872, %vm873
  %v875 = vsel %vm874, %v867, %v871
  %v876 = vand.u32 2147483647, %v770
  %vm877 = vcmp.eq.f32.partialorder %v876, 8.507059e+37
  %v878 = vand.u32 %v770, 2147483648
  %v879 = vor.u32 1.1754944e-38, %v878
  %v880 = vsel %vm877, %v879, %v875
  %v881 = vrcp.pop %v771
  %v882 = vmul.f32 %v771, %v881
  %v883 = vsub.f32 1.0, %v882
  %v884 = vmul.f32 %v881, %v883
  %v885 = vadd.f32 %v881, %v884
  %vm886 = vweird.f32 %v771
  %vm887 = vweird.f32 %v881
  %vm888 = vmor %vm886, %vm887
  %v889 = vsel %vm888, %v881, %v885
  %v890 = vand.u32 2147483647, %v771
  %vm891 = vcmp.eq.f32.partialorder %v890, 8.507059e+37
  %v892 = vand.u32 %v771, 2147483648
  %v893 = vor.u32 1.1754944e-38, %v892
  %v894 = vsel %vm891, %v893, %v889
  %v895 = vrcp.pop %v772
  %v896 = vmul.f32 %v772, %v895
  %v897 = vsub.f32 1.0, %v896
  %v898 = vmul.f32 %v895, %v897
  %v899 = vadd.f32 %v895, %v898
  %vm900 = vweird.f32 %v772
  %vm901 = vweird.f32 %v895
  %vm902 = vmor %vm900, %vm901
  %v903 = vsel %vm902, %v895, %v899
  %v904 = vand.u32 2147483647, %v772
  %vm905 = vcmp.eq.f32.partialorder %v904, 8.507059e+37
  %v906 = vand.u32 %v772, 2147483648
  %v907 = vor.u32 1.1754944e-38, %v906
  %v908 = vsel %vm905, %v907, %v903
  %v909 = vrcp.pop %v773
  %v910 = vmul.f32 %v773, %v909
  %v911 = vsub.f32 1.0, %v910
  %v912 = vmul.f32 %v909, %v911
  %v913 = vadd.f32 %v909, %v912
  %vm914 = vweird.f32 %v773
  %vm915 = vweird.f32 %v909
  %vm916 = vmor %vm914, %vm915
  %v917 = vsel %vm916, %v909, %v913
  %v918 = vand.u32 2147483647, %v773
  %vm919 = vcmp.eq.f32.partialorder %v918, 8.507059e+37
  %v920 = vand.u32 %v773, 2147483648
  %v921 = vor.u32 1.1754944e-38, %v920
  %v922 = vsel %vm919, %v921, %v917
  %v923 = vrcp.pop %v774
  %v924 = vmul.f32 %v774, %v923
  %v925 = vsub.f32 1.0, %v924
  %v926 = vmul.f32 %v923, %v925
  %v927 = vadd.f32 %v923, %v926
  %vm928 = vweird.f32 %v774
  %vm929 = vweird.f32 %v923
  %vm930 = vmor %vm928, %vm929
  %v931 = vsel %vm930, %v923, %v927
  %v932 = vand.u32 2147483647, %v774
  %vm933 = vcmp.eq.f32.partialorder %v932, 8.507059e+37
  %v934 = vand.u32 %v774, 2147483648
  %v935 = vor.u32 1.1754944e-38, %v934
  %v936 = vsel %vm933, %v935, %v931
  %v937 = vrcp.pop %v775
  %v938 = vmul.f32 %v775, %v937
  %v939 = vsub.f32 1.0, %v938
  %v940 = vmul.f32 %v937, %v939
  %v941 = vadd.f32 %v937, %v940
  %vm942 = vweird.f32 %v775
  %vm943 = vweird.f32 %v937
  %vm944 = vmor %vm942, %vm943
  %v945 = vsel %vm944, %v937, %v941
  %v946 = vand.u32 2147483647, %v775
  %vm947 = vcmp.eq.f32.partialorder %v946, 8.507059e+37
  %v948 = vand.u32 %v775, 2147483648
  %v949 = vor.u32 1.1754944e-38, %v948
  %v950 = vsel %vm947, %v949, %v945
  %v951 = vrcp.pop %v776
  %v952 = vmul.f32 %v776, %v951
  %v953 = vsub.f32 1.0, %v952
  %v954 = vmul.f32 %v951, %v953
  %v955 = vadd.f32 %v951, %v954
  %vm956 = vweird.f32 %v776
  %vm957 = vweird.f32 %v951
  %vm958 = vmor %vm956, %vm957
  %v959 = vsel %vm958, %v951, %v955
  %v960 = vand.u32 2147483647, %v776
  %vm961 = vcmp.eq.f32.partialorder %v960, 8.507059e+37
  %v962 = vand.u32 %v776, 2147483648
  %v963 = vor.u32 1.1754944e-38, %v962
  %v964 = vsel %vm961, %v963, %v959
  %v965 = vrcp.pop %v777
  %v966 = vmul.f32 %v777, %v965
  %v967 = vsub.f32 1.0, %v966
  %v968 = vmul.f32 %v965, %v967
  %v969 = vadd.f32 %v965, %v968
  %vm970 = vweird.f32 %v777
  %vm971 = vweird.f32 %v965
  %vm972 = vmor %vm970, %vm971
  %v973 = vsel %vm972, %v965, %v969
  %v974 = vand.u32 2147483647, %v777
  %vm975 = vcmp.eq.f32.partialorder %v974, 8.507059e+37
  %v976 = vand.u32 %v777, 2147483648
  %v977 = vor.u32 1.1754944e-38, %v976
  %v978 = vsel %vm975, %v977, %v973
  %v979 = vrcp.pop %v778
  %v980 = vmul.f32 %v778, %v979
  %v981 = vsub.f32 1.0, %v980
  %v982 = vmul.f32 %v979, %v981
  %v983 = vadd.f32 %v979, %v982
  %vm984 = vweird.f32 %v778
  %vm985 = vweird.f32 %v979
  %vm986 = vmor %vm984, %vm985
  %v987 = vsel %vm986, %v979, %v983
  %v988 = vand.u32 2147483647, %v778
  %vm989 = vcmp.eq.f32.partialorder %v988, 8.507059e+37
  %v990 = vand.u32 %v778, 2147483648
  %v991 = vor.u32 1.1754944e-38, %v990
  %v992 = vsel %vm989, %v991, %v987
  %v993 = vrcp.pop %v779
  %v994 = vmul.f32 %v779, %v993
  %v995 = vsub.f32 1.0, %v994
  %v996 = vmul.f32 %v993, %v995
  %v997 = vadd.f32 %v993, %v996
  %vm998 = vweird.f32 %v779
  %vm999 = vweird.f32 %v993
  %vm1000 = vmor %vm998, %vm999
  %v1001 = vsel %vm1000, %v993, %v997
  %v1002 = vand.u32 2147483647, %v779
  %vm1003 = vcmp.eq.f32.partialorder %v1002, 8.507059e+37
  %v1004 = vand.u32 %v779, 2147483648
  %v1005 = vor.u32 1.1754944e-38, %v1004
  %v1006 = vsel %vm1003, %v1005, %v1001
  %v1007 = vrcp.pop %v780
  %v1008 = vmul.f32 %v780, %v1007
  %v1009 = vsub.f32 1.0, %v1008
  %v1010 = vmul.f32 %v1007, %v1009
  %v1011 = vadd.f32 %v1007, %v1010
  %vm1012 = vweird.f32 %v780
  %vm1013 = vweird.f32 %v1007
  %vm1014 = vmor %vm1012, %vm1013
  %v1015 = vsel %vm1014, %v1007, %v1011
  %v1016 = vand.u32 2147483647, %v780
  %vm1017 = vcmp.eq.f32.partialorder %v1016, 8.507059e+37
  %v1018 = vand.u32 %v780, 2147483648
  %v1019 = vor.u32 1.1754944e-38, %v1018
  %v1020 = vsel %vm1017, %v1019, %v1015
  %v1021 = vrcp.pop %v781
  %v1022 = vmul.f32 %v781, %v1021
  %v1023 = vsub.f32 1.0, %v1022
  %v1024 = vmul.f32 %v1021, %v1023
  %v1025 = vadd.f32 %v1021, %v1024
  %vm1026 = vweird.f32 %v781
  %vm1027 = vweird.f32 %v1021
  %vm1028 = vmor %vm1026, %vm1027
  %v1029 = vsel %vm1028, %v1021, %v1025
  %v1030 = vand.u32 2147483647, %v781
  %vm1031 = vcmp.eq.f32.partialorder %v1030, 8.507059e+37
  %v1032 = vand.u32 %v781, 2147483648
  %v1033 = vor.u32 1.1754944e-38, %v1032
  %v1034 = vsel %vm1031, %v1033, %v1029
  %v1035 = vrcp.pop %v782
  %v1036 = vmul.f32 %v782, %v1035
  %v1037 = vsub.f32 1.0, %v1036
  %v1038 = vmul.f32 %v1035, %v1037
  %v1039 = vadd.f32 %v1035, %v1038
  %vm1040 = vweird.f32 %v782
  %vm1041 = vweird.f32 %v1035
  %vm1042 = vmor %vm1040, %vm1041
  %v1043 = vsel %vm1042, %v1035, %v1039
  %v1044 = vand.u32 2147483647, %v782
  %vm1045 = vcmp.eq.f32.partialorder %v1044, 8.507059e+37
  %v1046 = vand.u32 %v782, 2147483648
  %v1047 = vor.u32 1.1754944e-38, %v1046
  %v1048 = vsel %vm1045, %v1047, %v1043
  %v1049 = vrcp.pop %v783
  %v1050 = vmul.f32 %v783, %v1049
  %v1051 = vsub.f32 1.0, %v1050
  %v1052 = vmul.f32 %v1049, %v1051
  %v1053 = vadd.f32 %v1049, %v1052
  %vm1054 = vweird.f32 %v783
  %vm1055 = vweird.f32 %v1049
  %vm1056 = vmor %vm1054, %vm1055
  %v1057 = vsel %vm1056, %v1049, %v1053
  %v1058 = vand.u32 2147483647, %v783
  %vm1059 = vcmp.eq.f32.partialorder %v1058, 8.507059e+37
  %v1060 = vand.u32 %v783, 2147483648
  %v1061 = vor.u32 1.1754944e-38, %v1060
  %v1062 = vsel %vm1059, %v1061, %v1057
  %v1063 = vrcp.pop %v784
  %v1064 = vmul.f32 %v784, %v1063
  %v1065 = vsub.f32 1.0, %v1064
  %v1066 = vmul.f32 %v1063, %v1065
  %v1067 = vadd.f32 %v1063, %v1066
  %vm1068 = vweird.f32 %v784
  %vm1069 = vweird.f32 %v1063
  %vm1070 = vmor %vm1068, %vm1069
  %v1071 = vsel %vm1070, %v1063, %v1067
  %v1072 = vand.u32 2147483647, %v784
  %vm1073 = vcmp.eq.f32.partialorder %v1072, 8.507059e+37
  %v1074 = vand.u32 %v784, 2147483648
  %v1075 = vor.u32 1.1754944e-38, %v1074
  %v1076 = vsel %vm1073, %v1075, %v1071
  %v1077 = vrcp.pop %v785
  %v1078 = vmul.f32 %v785, %v1077
  %v1079 = vsub.f32 1.0, %v1078
  %v1080 = vmul.f32 %v1077, %v1079
  %v1081 = vadd.f32 %v1077, %v1080
  %vm1082 = vweird.f32 %v785
  %vm1083 = vweird.f32 %v1077
  %vm1084 = vmor %vm1082, %vm1083
  %v1085 = vsel %vm1084, %v1077, %v1081
  %v1086 = vand.u32 2147483647, %v785
  %vm1087 = vcmp.eq.f32.partialorder %v1086, 8.507059e+37
  %v1088 = vand.u32 %v785, 2147483648
  %v1089 = vor.u32 1.1754944e-38, %v1088
  %v1090 = vsel %vm1087, %v1089, %v1085
  %v1091 = vrcp.pop %v786
  %v1092 = vmul.f32 %v786, %v1091
  %v1093 = vsub.f32 1.0, %v1092
  %v1094 = vmul.f32 %v1091, %v1093
  %v1095 = vadd.f32 %v1091, %v1094
  %vm1096 = vweird.f32 %v786
  %vm1097 = vweird.f32 %v1091
  %vm1098 = vmor %vm1096, %vm1097
  %v1099 = vsel %vm1098, %v1091, %v1095
  %v1100 = vand.u32 2147483647, %v786
  %vm1101 = vcmp.eq.f32.partialorder %v1100, 8.507059e+37
  %v1102 = vand.u32 %v786, 2147483648
  %v1103 = vor.u32 1.1754944e-38, %v1102
  %v1104 = vsel %vm1101, %v1103, %v1099
  %v1105 = vrcp.pop %v787
  %v1106 = vmul.f32 %v787, %v1105
  %v1107 = vsub.f32 1.0, %v1106
  %v1108 = vmul.f32 %v1105, %v1107
  %v1109 = vadd.f32 %v1105, %v1108
  %vm1110 = vweird.f32 %v787
  %vm1111 = vweird.f32 %v1105
  %vm1112 = vmor %vm1110, %vm1111
  %v1113 = vsel %vm1112, %v1105, %v1109
  %v1114 = vand.u32 2147483647, %v787
  %vm1115 = vcmp.eq.f32.partialorder %v1114, 8.507059e+37
  %v1116 = vand.u32 %v787, 2147483648
  %v1117 = vor.u32 1.1754944e-38, %v1116
  %v1118 = vsel %vm1115, %v1117, %v1113
  %v1119 = vrcp.pop %v788
  %v1120 = vmul.f32 %v788, %v1119
  %v1121 = vsub.f32 1.0, %v1120
  %v1122 = vmul.f32 %v1119, %v1121
  %v1123 = vadd.f32 %v1119, %v1122
  %vm1124 = vweird.f32 %v788
  %vm1125 = vweird.f32 %v1119
  %vm1126 = vmor %vm1124, %vm1125
  %v1127 = vsel %vm1126, %v1119, %v1123
  %v1128 = vand.u32 2147483647, %v788
  %vm1129 = vcmp.eq.f32.partialorder %v1128, 8.507059e+37
  %v1130 = vand.u32 %v788, 2147483648
  %v1131 = vor.u32 1.1754944e-38, %v1130
  %v1132 = vsel %vm1129, %v1131, %v1127
  %v1133 = vrcp.pop %v789
  %v1134 = vmul.f32 %v789, %v1133
  %v1135 = vsub.f32 1.0, %v1134
  %v1136 = vmul.f32 %v1133, %v1135
  %v1137 = vadd.f32 %v1133, %v1136
  %vm1138 = vweird.f32 %v789
  %vm1139 = vweird.f32 %v1133
  %vm1140 = vmor %vm1138, %vm1139
  %v1141 = vsel %vm1140, %v1133, %v1137
  %v1142 = vand.u32 2147483647, %v789
  %vm1143 = vcmp.eq.f32.partialorder %v1142, 8.507059e+37
  %v1144 = vand.u32 %v789, 2147483648
  %v1145 = vor.u32 1.1754944e-38, %v1144
  %v1146 = vsel %vm1143, %v1145, %v1141
  %v1147 = vrcp.pop %v790
  %v1148 = vmul.f32 %v790, %v1147
  %v1149 = vsub.f32 1.0, %v1148
  %v1150 = vmul.f32 %v1147, %v1149
  %v1151 = vadd.f32 %v1147, %v1150
  %vm1152 = vweird.f32 %v790
  %vm1153 = vweird.f32 %v1147
  %vm1154 = vmor %vm1152, %vm1153
  %v1155 = vsel %vm1154, %v1147, %v1151
  %v1156 = vand.u32 2147483647, %v790
  %vm1157 = vcmp.eq.f32.partialorder %v1156, 8.507059e+37
  %v1158 = vand.u32 %v790, 2147483648
  %v1159 = vor.u32 1.1754944e-38, %v1158
  %v1160 = vsel %vm1157, %v1159, %v1155
  %v1161 = vrcp.pop %v791
  %v1162 = vmul.f32 %v791, %v1161
  %v1163 = vsub.f32 1.0, %v1162
  %v1164 = vmul.f32 %v1161, %v1163
  %v1165 = vadd.f32 %v1161, %v1164
  %vm1166 = vweird.f32 %v791
  %vm1167 = vweird.f32 %v1161
  %vm1168 = vmor %vm1166, %vm1167
  %v1169 = vsel %vm1168, %v1161, %v1165
  %v1170 = vand.u32 2147483647, %v791
  %vm1171 = vcmp.eq.f32.partialorder %v1170, 8.507059e+37
  %v1172 = vand.u32 %v791, 2147483648
  %v1173 = vor.u32 1.1754944e-38, %v1172
  %v1174 = vsel %vm1171, %v1173, %v1169
  %v1175 = vrcp.pop %v792
  %v1176 = vmul.f32 %v792, %v1175
  %v1177 = vsub.f32 1.0, %v1176
  %v1178 = vmul.f32 %v1175, %v1177
  %v1179 = vadd.f32 %v1175, %v1178
  %vm1180 = vweird.f32 %v792
  %vm1181 = vweird.f32 %v1175
  %vm1182 = vmor %vm1180, %vm1181
  %v1183 = vsel %vm1182, %v1175, %v1179
  %v1184 = vand.u32 2147483647, %v792
  %vm1185 = vcmp.eq.f32.partialorder %v1184, 8.507059e+37
  %v1186 = vand.u32 %v792, 2147483648
  %v1187 = vor.u32 1.1754944e-38, %v1186
  %v1188 = vsel %vm1185, %v1187, %v1183
  %v1189 = vrcp.pop %v793
  %v1190 = vmul.f32 %v793, %v1189
  %v1191 = vsub.f32 1.0, %v1190
  %v1192 = vmul.f32 %v1189, %v1191
  %v1193 = vadd.f32 %v1189, %v1192
  %vm1194 = vweird.f32 %v793
  %vm1195 = vweird.f32 %v1189
  %vm1196 = vmor %vm1194, %vm1195
  %v1197 = vsel %vm1196, %v1189, %v1193
  %v1198 = vand.u32 2147483647, %v793
  %vm1199 = vcmp.eq.f32.partialorder %v1198, 8.507059e+37
  %v1200 = vand.u32 %v793, 2147483648
  %v1201 = vor.u32 1.1754944e-38, %v1200
  %v1202 = vsel %vm1199, %v1201, %v1197
  %v1203 = vrcp.pop %v794
  %v1204 = vmul.f32 %v794, %v1203
  %v1205 = vsub.f32 1.0, %v1204
  %v1206 = vmul.f32 %v1203, %v1205
  %v1207 = vadd.f32 %v1203, %v1206
  %vm1208 = vweird.f32 %v794
  %vm1209 = vweird.f32 %v1203
  %vm1210 = vmor %vm1208, %vm1209
  %v1211 = vsel %vm1210, %v1203, %v1207
  %v1212 = vand.u32 2147483647, %v794
  %vm1213 = vcmp.eq.f32.partialorder %v1212, 8.507059e+37
  %v1214 = vand.u32 %v794, 2147483648
  %v1215 = vor.u32 1.1754944e-38, %v1214
  %v1216 = vsel %vm1213, %v1215, %v1211
  %v1217 = vrcp.pop %v795
  %v1218 = vmul.f32 %v795, %v1217
  %v1219 = vsub.f32 1.0, %v1218
  %v1220 = vmul.f32 %v1217, %v1219
  %v1221 = vadd.f32 %v1217, %v1220
  %vm1222 = vweird.f32 %v795
  %vm1223 = vweird.f32 %v1217
  %vm1224 = vmor %vm1222, %vm1223
  %v1225 = vsel %vm1224, %v1217, %v1221
  %v1226 = vand.u32 2147483647, %v795
  %vm1227 = vcmp.eq.f32.partialorder %v1226, 8.507059e+37
  %v1228 = vand.u32 %v795, 2147483648
  %v1229 = vor.u32 1.1754944e-38, %v1228
  %v1230 = vsel %vm1227, %v1229, %v1225
  %v1231 = vrcp.pop %v796
  %v1232 = vmul.f32 %v796, %v1231
  %v1233 = vsub.f32 1.0, %v1232
  %v1234 = vmul.f32 %v1231, %v1233
  %v1235 = vadd.f32 %v1231, %v1234
  %vm1236 = vweird.f32 %v796
  %vm1237 = vweird.f32 %v1231
  %vm1238 = vmor %vm1236, %vm1237
  %v1239 = vsel %vm1238, %v1231, %v1235
  %v1240 = vand.u32 2147483647, %v796
  %vm1241 = vcmp.eq.f32.partialorder %v1240, 8.507059e+37
  %v1242 = vand.u32 %v796, 2147483648
  %v1243 = vor.u32 1.1754944e-38, %v1242
  %v1244 = vsel %vm1241, %v1243, %v1239
  %v1245 = vmul.f32 %v189, %v810
  %v1246 = vmul.f32 %v190, %v824
  %v1247 = vmul.f32 %v191, %v838
  %v1248 = vmul.f32 %v192, %v852
  %v1249 = vmul.f32 %v193, %v866
  %v1250 = vmul.f32 %v194, %v880
  %v1251 = vmul.f32 %v195, %v894
  %v1252 = vmul.f32 %v196, %v908
  %v1253 = vmul.f32 %v197, %v922
  %v1254 = vmul.f32 %v198, %v936
  %v1255 = vmul.f32 %v199, %v950
  %v1256 = vmul.f32 %v200, %v964
  %v1257 = vmul.f32 %v201, %v978
  %v1258 = vmul.f32 %v202, %v992
  %v1259 = vmul.f32 %v203, %v1006
  %v1260 = vmul.f32 %v204, %v1020
  %v1261 = vmul.f32 %v205, %v1034
  %v1262 = vmul.f32 %v206, %v1048
  %v1263 = vmul.f32 %v207, %v1062
  %v1264 = vmul.f32 %v208, %v1076
  %v1265 = vmul.f32 %v209, %v1090
  %v1266 = vmul.f32 %v210, %v1104
  %v1267 = vmul.f32 %v211, %v1118
  %v1268 = vmul.f32 %v212, %v1132
  %v1269 = vmul.f32 %v213, %v1146
  %v1270 = vmul.f32 %v214, %v1160
  %v1271 = vmul.f32 %v215, %v1174
  %v1272 = vmul.f32 %v216, %v1188
  %v1273 = vmul.f32 %v217, %v1202
  %v1274 = vmul.f32 %v218, %v1216
  %v1275 = vmul.f32 %v219, %v1230
  %v1276 = vmul.f32 %v220, %v1244
  %v1277 = vld [vmem:[%s1] sm:$0xff]
  %v1278 = vld [vmem:[%s1 + $0x8] sm:$0xff]
  %v1279 = vld [vmem:[%s1 + $0x10] sm:$0xff]
  %v1280 = vld [vmem:[%s1 + $0x18] sm:$0xff]
  %v1281 = vperm.slane %v20, 0
  %v1283 = vsel %vm53, %v1245, 0
  %v1286 = vsel %vm53, %v1246, 0
  %v1289 = vsel %vm53, %v1247, 0
  %v1292 = vsel %vm53, %v1248, 0
  %v1295 = vsel %vm53, %v1249, 0
  %v1298 = vsel %vm53, %v1250, 0
  %v1301 = vsel %vm53, %v1251, 0
  %v1304 = vsel %vm53, %v1252, 0
  %v1307 = vsel %vm53, %v1253, 0
  %v1310 = vsel %vm53, %v1254, 0
  %v1313 = vsel %vm53, %v1255, 0
  %v1316 = vsel %vm53, %v1256, 0
  %v1319 = vsel %vm53, %v1257, 0
  %v1322 = vsel %vm53, %v1258, 0
  %v1325 = vsel %vm53, %v1259, 0
  %v1328 = vsel %vm53, %v1260, 0
  %v1331 = vsel %vm53, %v1261, 0
  %v1334 = vsel %vm53, %v1262, 0
  %v1337 = vsel %vm53, %v1263, 0
  %v1340 = vsel %vm53, %v1264, 0
  %v1343 = vsel %vm53, %v1265, 0
  %v1346 = vsel %vm53, %v1266, 0
  %v1349 = vsel %vm53, %v1267, 0
  %v1352 = vsel %vm53, %v1268, 0
  %v1355 = vsel %vm53, %v1269, 0
  %v1358 = vsel %vm53, %v1270, 0
  %v1361 = vsel %vm53, %v1271, 0
  %v1364 = vsel %vm53, %v1272, 0
  %v1367 = vsel %vm53, %v1273, 0
  %v1370 = vsel %vm53, %v1274, 0
  %v1373 = vsel %vm53, %v1275, 0
  %v1376 = vsel %vm53, %v1276, 0
  %1378 = vmatpush.msra.mxu0 0.0
  %1379 = vmatpush.msra.mxu0 0.0
  %1380 = vmatpush.msra.mxu0 0.0
  %1381 = vmatpush.msra.mxu0 0.0
  %1382 = vmatpush.msra.mxu0 0.0
  %1383 = vmatpush.msra.mxu0 0.0
  %1384 = vmatpush.msra.mxu0 0.0
  %1385 = vmatpush.msra.mxu0 0.0
  %1386 = vmatpush.msra.mxu0 0.0
  %1387 = vmatpush.msra.mxu0 0.0
  %1388 = vmatpush.msra.mxu0 0.0
  %1389 = vmatpush.msra.mxu0 0.0
  %1390 = vmatpush.msra.mxu0 %v1280
  %1391 = vmatpush.msra.mxu0 %v1279
  %1392 = vmatpush.msra.mxu0 %v1278
  %1393 = vmatpush.msra.mxu0 %v1277
  %1394 = vmatmul.f32.gmra.mxu0 %v1283
  %v1395 = vpop.f32.mrf.mxu0
  %v1396 = vadd.f32 %v1281, %v1395
  %1397 = vmatmul.f32.gmra.mxu0 %v1286
  %v1398 = vpop.f32.mrf.mxu0
  %v1399 = vadd.f32 %v1281, %v1398
  %1400 = vmatmul.f32.gmra.mxu0 %v1289
  %v1401 = vpop.f32.mrf.mxu0
  %v1402 = vadd.f32 %v1281, %v1401
  %1403 = vmatmul.f32.gmra.mxu0 %v1292
  %v1404 = vpop.f32.mrf.mxu0
  %v1405 = vadd.f32 %v1281, %v1404
  %1406 = vmatmul.f32.gmra.mxu0 %v1295
  %v1407 = vpop.f32.mrf.mxu0
  %v1408 = vadd.f32 %v1281, %v1407
  %1409 = vmatmul.f32.gmra.mxu0 %v1298
  %v1410 = vpop.f32.mrf.mxu0
  %v1411 = vadd.f32 %v1281, %v1410
  %1412 = vmatmul.f32.gmra.mxu0 %v1301
  %v1413 = vpop.f32.mrf.mxu0
  %v1414 = vadd.f32 %v1281, %v1413
  %1415 = vmatmul.f32.gmra.mxu0 %v1304
  %v1416 = vpop.f32.mrf.mxu0
  %v1417 = vadd.f32 %v1281, %v1416
  %1418 = vmatmul.f32.gmra.mxu0 %v1307
  %v1419 = vpop.f32.mrf.mxu0
  %v1420 = vadd.f32 %v1281, %v1419
  %1421 = vmatmul.f32.gmra.mxu0 %v1310
  %v1422 = vpop.f32.mrf.mxu0
  %v1423 = vadd.f32 %v1281, %v1422
  %1424 = vmatmul.f32.gmra.mxu0 %v1313
  %v1425 = vpop.f32.mrf.mxu0
  %v1426 = vadd.f32 %v1281, %v1425
  %1427 = vmatmul.f32.gmra.mxu0 %v1316
  %v1428 = vpop.f32.mrf.mxu0
  %v1429 = vadd.f32 %v1281, %v1428
  %1430 = vmatmul.f32.gmra.mxu0 %v1319
  %v1431 = vpop.f32.mrf.mxu0
  %v1432 = vadd.f32 %v1281, %v1431
  %1433 = vmatmul.f32.gmra.mxu0 %v1322
  %v1434 = vpop.f32.mrf.mxu0
  %v1435 = vadd.f32 %v1281, %v1434
  %1436 = vmatmul.f32.gmra.mxu0 %v1325
  %v1437 = vpop.f32.mrf.mxu0
  %v1438 = vadd.f32 %v1281, %v1437
  %1439 = vmatmul.f32.gmra.mxu0 %v1328
  %v1440 = vpop.f32.mrf.mxu0
  %v1441 = vadd.f32 %v1281, %v1440
  %1442 = vmatmul.f32.gmra.mxu0 %v1331
  %v1443 = vpop.f32.mrf.mxu0
  %v1444 = vadd.f32 %v1281, %v1443
  %1445 = vmatmul.f32.gmra.mxu0 %v1334
  %v1446 = vpop.f32.mrf.mxu0
  %v1447 = vadd.f32 %v1281, %v1446
  %1448 = vmatmul.f32.gmra.mxu0 %v1337
  %v1449 = vpop.f32.mrf.mxu0
  %v1450 = vadd.f32 %v1281, %v1449
  %1451 = vmatmul.f32.gmra.mxu0 %v1340
  %v1452 = vpop.f32.mrf.mxu0
  %v1453 = vadd.f32 %v1281, %v1452
  %1454 = vmatmul.f32.gmra.mxu0 %v1343
  %v1455 = vpop.f32.mrf.mxu0
  %v1456 = vadd.f32 %v1281, %v1455
  %1457 = vmatmul.f32.gmra.mxu0 %v1346
  %v1458 = vpop.f32.mrf.mxu0
  %v1459 = vadd.f32 %v1281, %v1458
  %1460 = vmatmul.f32.gmra.mxu0 %v1349
  %v1461 = vpop.f32.mrf.mxu0
  %v1462 = vadd.f32 %v1281, %v1461
  %1463 = vmatmul.f32.gmra.mxu0 %v1352
  %v1464 = vpop.f32.mrf.mxu0
  %v1465 = vadd.f32 %v1281, %v1464
  %1466 = vmatmul.f32.gmra.mxu0 %v1355
  %v1467 = vpop.f32.mrf.mxu0
  %v1468 = vadd.f32 %v1281, %v1467
  %1469 = vmatmul.f32.gmra.mxu0 %v1358
  %v1470 = vpop.f32.mrf.mxu0
  %v1471 = vadd.f32 %v1281, %v1470
  %1472 = vmatmul.f32.gmra.mxu0 %v1361
  %v1473 = vpop.f32.mrf.mxu0
  %v1474 = vadd.f32 %v1281, %v1473
  %1475 = vmatmul.f32.gmra.mxu0 %v1364
  %v1476 = vpop.f32.mrf.mxu0
  %v1477 = vadd.f32 %v1281, %v1476
  %1478 = vmatmul.f32.gmra.mxu0 %v1367
  %v1479 = vpop.f32.mrf.mxu0
  %v1480 = vadd.f32 %v1281, %v1479
  %1481 = vmatmul.f32.gmra.mxu0 %v1370
  %v1482 = vpop.f32.mrf.mxu0
  %v1483 = vadd.f32 %v1281, %v1482
  %1484 = vmatmul.f32.gmra.mxu0 %v1373
  %v1485 = vpop.f32.mrf.mxu0
  %v1486 = vadd.f32 %v1281, %v1485
  %1487 = vmatmul.f32.gmra.mxu0 %v1376
  %v1488 = vpop.f32.mrf.mxu0
  %v1489 = vadd.f32 %v1281, %v1488
  %1490 = vdwg.mxu0
  %v1491 = vmax.f32 %v1396, 0.0
  %v1492 = vmax.f32 %v1399, 0.0
  %v1493 = vmax.f32 %v1402, 0.0
  %v1494 = vmax.f32 %v1405, 0.0
  %v1495 = vmax.f32 %v1408, 0.0
  %v1496 = vmax.f32 %v1411, 0.0
  %v1497 = vmax.f32 %v1414, 0.0
  %v1498 = vmax.f32 %v1417, 0.0
  %v1499 = vmax.f32 %v1420, 0.0
  %v1500 = vmax.f32 %v1423, 0.0
  %v1501 = vmax.f32 %v1426, 0.0
  %v1502 = vmax.f32 %v1429, 0.0
  %v1503 = vmax.f32 %v1432, 0.0
  %v1504 = vmax.f32 %v1435, 0.0
  %v1505 = vmax.f32 %v1438, 0.0
  %v1506 = vmax.f32 %v1441, 0.0
  %v1507 = vmax.f32 %v1444, 0.0
  %v1508 = vmax.f32 %v1447, 0.0
  %v1509 = vmax.f32 %v1450, 0.0
  %v1510 = vmax.f32 %v1453, 0.0
  %v1511 = vmax.f32 %v1456, 0.0
  %v1512 = vmax.f32 %v1459, 0.0
  %v1513 = vmax.f32 %v1462, 0.0
  %v1514 = vmax.f32 %v1465, 0.0
  %v1515 = vmax.f32 %v1468, 0.0
  %v1516 = vmax.f32 %v1471, 0.0
  %v1517 = vmax.f32 %v1474, 0.0
  %v1518 = vmax.f32 %v1477, 0.0
  %v1519 = vmax.f32 %v1480, 0.0
  %v1520 = vmax.f32 %v1483, 0.0
  %v1521 = vmax.f32 %v1486, 0.0
  %v1522 = vmax.f32 %v1489, 0.0
  %vm1523 = vcmask 523264
  %v1524 = vsel %vm1523, %v1491, 0.0
  %1525 = vadd.xlane.f32.xlu0 %v1524
  %v1526 = vpop.xlane.xlu0 %1525
  %v1527 = vsel %vm1523, %v1492, 0.0
  %1528 = vadd.xlane.f32.xlu0 %v1527
  %v1529 = vpop.xlane.xlu0 %1528
  %v1530 = vsel %vm1523, %v1493, 0.0
  %1531 = vadd.xlane.f32.xlu0 %v1530
  %v1532 = vpop.xlane.xlu0 %1531
  %v1533 = vsel %vm1523, %v1494, 0.0
  %1534 = vadd.xlane.f32.xlu0 %v1533
  %v1535 = vpop.xlane.xlu0 %1534
  %v1536 = vsel %vm1523, %v1495, 0.0
  %1537 = vadd.xlane.f32.xlu0 %v1536
  %v1538 = vpop.xlane.xlu0 %1537
  %v1539 = vsel %vm1523, %v1496, 0.0
  %1540 = vadd.xlane.f32.xlu0 %v1539
  %v1541 = vpop.xlane.xlu0 %1540
  %v1542 = vsel %vm1523, %v1497, 0.0
  %1543 = vadd.xlane.f32.xlu0 %v1542
  %v1544 = vpop.xlane.xlu0 %1543
  %v1545 = vsel %vm1523, %v1498, 0.0
  %1546 = vadd.xlane.f32.xlu0 %v1545
  %v1547 = vpop.xlane.xlu0 %1546
  %v1548 = vsel %vm1523, %v1499, 0.0
  %1549 = vadd.xlane.f32.xlu0 %v1548
  %v1550 = vpop.xlane.xlu0 %1549
  %v1551 = vsel %vm1523, %v1500, 0.0
  %1552 = vadd.xlane.f32.xlu0 %v1551
  %v1553 = vpop.xlane.xlu0 %1552
  %v1554 = vsel %vm1523, %v1501, 0.0
  %1555 = vadd.xlane.f32.xlu0 %v1554
  %v1556 = vpop.xlane.xlu0 %1555
  %v1557 = vsel %vm1523, %v1502, 0.0
  %1558 = vadd.xlane.f32.xlu0 %v1557
  %v1559 = vpop.xlane.xlu0 %1558
  %v1560 = vsel %vm1523, %v1503, 0.0
  %1561 = vadd.xlane.f32.xlu0 %v1560
  %v1562 = vpop.xlane.xlu0 %1561
  %v1563 = vsel %vm1523, %v1504, 0.0
  %1564 = vadd.xlane.f32.xlu0 %v1563
  %v1565 = vpop.xlane.xlu0 %1564
  %v1566 = vsel %vm1523, %v1505, 0.0
  %1567 = vadd.xlane.f32.xlu0 %v1566
  %v1568 = vpop.xlane.xlu0 %1567
  %v1569 = vsel %vm1523, %v1506, 0.0
  %1570 = vadd.xlane.f32.xlu0 %v1569
  %v1571 = vpop.xlane.xlu0 %1570
  %v1572 = vsel %vm1523, %v1507, 0.0
  %1573 = vadd.xlane.f32.xlu0 %v1572
  %v1574 = vpop.xlane.xlu0 %1573
  %v1575 = vsel %vm1523, %v1508, 0.0
  %1576 = vadd.xlane.f32.xlu0 %v1575
  %v1577 = vpop.xlane.xlu0 %1576
  %v1578 = vsel %vm1523, %v1509, 0.0
  %1579 = vadd.xlane.f32.xlu0 %v1578
  %v1580 = vpop.xlane.xlu0 %1579
  %v1581 = vsel %vm1523, %v1510, 0.0
  %1582 = vadd.xlane.f32.xlu0 %v1581
  %v1583 = vpop.xlane.xlu0 %1582
  %v1584 = vsel %vm1523, %v1511, 0.0
  %1585 = vadd.xlane.f32.xlu0 %v1584
  %v1586 = vpop.xlane.xlu0 %1585
  %v1587 = vsel %vm1523, %v1512, 0.0
  %1588 = vadd.xlane.f32.xlu0 %v1587
  %v1589 = vpop.xlane.xlu0 %1588
  %v1590 = vsel %vm1523, %v1513, 0.0
  %1591 = vadd.xlane.f32.xlu0 %v1590
  %v1592 = vpop.xlane.xlu0 %1591
  %v1593 = vsel %vm1523, %v1514, 0.0
  %1594 = vadd.xlane.f32.xlu0 %v1593
  %v1595 = vpop.xlane.xlu0 %1594
  %v1596 = vsel %vm1523, %v1515, 0.0
  %1597 = vadd.xlane.f32.xlu0 %v1596
  %v1598 = vpop.xlane.xlu0 %1597
  %v1599 = vsel %vm1523, %v1516, 0.0
  %1600 = vadd.xlane.f32.xlu0 %v1599
  %v1601 = vpop.xlane.xlu0 %1600
  %v1602 = vsel %vm1523, %v1517, 0.0
  %1603 = vadd.xlane.f32.xlu0 %v1602
  %v1604 = vpop.xlane.xlu0 %1603
  %v1605 = vsel %vm1523, %v1518, 0.0
  %1606 = vadd.xlane.f32.xlu0 %v1605
  %v1607 = vpop.xlane.xlu0 %1606
  %v1608 = vsel %vm1523, %v1519, 0.0
  %1609 = vadd.xlane.f32.xlu0 %v1608
  %v1610 = vpop.xlane.xlu0 %1609
  %v1611 = vsel %vm1523, %v1520, 0.0
  %1612 = vadd.xlane.f32.xlu0 %v1611
  %v1613 = vpop.xlane.xlu0 %1612
  %v1614 = vsel %vm1523, %v1521, 0.0
  %1615 = vadd.xlane.f32.xlu0 %v1614
  %v1616 = vpop.xlane.xlu0 %1615
  %v1617 = vsel %vm1523, %v1522, 0.0
  %1618 = vadd.xlane.f32.xlu0 %v1617
  %v1619 = vpop.xlane.xlu0 %1618
  %v1620 = vrcp.pop 64.0
  %v1621 = vmul.f32 64.0, %v1620
  %v1622 = vsub.f32 1.0, %v1621
  %v1623 = vmul.f32 %v1620, %v1622
  %v1624 = vadd.f32 %v1620, %v1623
  %vm1625 = vweird.f32 %v1620
  %v1626 = vsel %vm1625, %v1620, %v1624
  %v1627 = vmul.f32 %v1526, %v1626
  %v1628 = vmul.f32 %v1529, %v1626
  %v1629 = vmul.f32 %v1532, %v1626
  %v1630 = vmul.f32 %v1535, %v1626
  %v1631 = vmul.f32 %v1538, %v1626
  %v1632 = vmul.f32 %v1541, %v1626
  %v1633 = vmul.f32 %v1544, %v1626
  %v1634 = vmul.f32 %v1547, %v1626
  %v1635 = vmul.f32 %v1550, %v1626
  %v1636 = vmul.f32 %v1553, %v1626
  %v1637 = vmul.f32 %v1556, %v1626
  %v1638 = vmul.f32 %v1559, %v1626
  %v1639 = vmul.f32 %v1562, %v1626
  %v1640 = vmul.f32 %v1565, %v1626
  %v1641 = vmul.f32 %v1568, %v1626
  %v1642 = vmul.f32 %v1571, %v1626
  %v1643 = vmul.f32 %v1574, %v1626
  %v1644 = vmul.f32 %v1577, %v1626
  %v1645 = vmul.f32 %v1580, %v1626
  %v1646 = vmul.f32 %v1583, %v1626
  %v1647 = vmul.f32 %v1586, %v1626
  %v1648 = vmul.f32 %v1589, %v1626
  %v1649 = vmul.f32 %v1592, %v1626
  %v1650 = vmul.f32 %v1595, %v1626
  %v1651 = vmul.f32 %v1598, %v1626
  %v1652 = vmul.f32 %v1601, %v1626
  %v1653 = vmul.f32 %v1604, %v1626
  %v1654 = vmul.f32 %v1607, %v1626
  %v1655 = vmul.f32 %v1610, %v1626
  %v1656 = vmul.f32 %v1613, %v1626
  %v1657 = vmul.f32 %v1616, %v1626
  %v1658 = vmul.f32 %v1619, %v1626
  %v1659 = vsub.f32 %v1491, %v1627
  %v1660 = vsub.f32 %v1492, %v1628
  %v1661 = vsub.f32 %v1493, %v1629
  %v1662 = vsub.f32 %v1494, %v1630
  %v1663 = vsub.f32 %v1495, %v1631
  %v1664 = vsub.f32 %v1496, %v1632
  %v1665 = vsub.f32 %v1497, %v1633
  %v1666 = vsub.f32 %v1498, %v1634
  %v1667 = vsub.f32 %v1499, %v1635
  %v1668 = vsub.f32 %v1500, %v1636
  %v1669 = vsub.f32 %v1501, %v1637
  %v1670 = vsub.f32 %v1502, %v1638
  %v1671 = vsub.f32 %v1503, %v1639
  %v1672 = vsub.f32 %v1504, %v1640
  %v1673 = vsub.f32 %v1505, %v1641
  %v1674 = vsub.f32 %v1506, %v1642
  %v1675 = vsub.f32 %v1507, %v1643
  %v1676 = vsub.f32 %v1508, %v1644
  %v1677 = vsub.f32 %v1509, %v1645
  %v1678 = vsub.f32 %v1510, %v1646
  %v1679 = vsub.f32 %v1511, %v1647
  %v1680 = vsub.f32 %v1512, %v1648
  %v1681 = vsub.f32 %v1513, %v1649
  %v1682 = vsub.f32 %v1514, %v1650
  %v1683 = vsub.f32 %v1515, %v1651
  %v1684 = vsub.f32 %v1516, %v1652
  %v1685 = vsub.f32 %v1517, %v1653
  %v1686 = vsub.f32 %v1518, %v1654
  %v1687 = vsub.f32 %v1519, %v1655
  %v1688 = vsub.f32 %v1520, %v1656
  %v1689 = vsub.f32 %v1521, %v1657
  %v1690 = vsub.f32 %v1522, %v1658
  %v1691 = vmul.f32 %v1659, %v1659
  %v1692 = vmul.f32 %v1660, %v1660
  %v1693 = vmul.f32 %v1661, %v1661
  %v1694 = vmul.f32 %v1662, %v1662
  %v1695 = vmul.f32 %v1663, %v1663
  %v1696 = vmul.f32 %v1664, %v1664
  %v1697 = vmul.f32 %v1665, %v1665
  %v1698 = vmul.f32 %v1666, %v1666
  %v1699 = vmul.f32 %v1667, %v1667
  %v1700 = vmul.f32 %v1668, %v1668
  %v1701 = vmul.f32 %v1669, %v1669
  %v1702 = vmul.f32 %v1670, %v1670
  %v1703 = vmul.f32 %v1671, %v1671
  %v1704 = vmul.f32 %v1672, %v1672
  %v1705 = vmul.f32 %v1673, %v1673
  %v1706 = vmul.f32 %v1674, %v1674
  %v1707 = vmul.f32 %v1675, %v1675
  %v1708 = vmul.f32 %v1676, %v1676
  %v1709 = vmul.f32 %v1677, %v1677
  %v1710 = vmul.f32 %v1678, %v1678
  %v1711 = vmul.f32 %v1679, %v1679
  %v1712 = vmul.f32 %v1680, %v1680
  %v1713 = vmul.f32 %v1681, %v1681
  %v1714 = vmul.f32 %v1682, %v1682
  %v1715 = vmul.f32 %v1683, %v1683
  %v1716 = vmul.f32 %v1684, %v1684
  %v1717 = vmul.f32 %v1685, %v1685
  %v1718 = vmul.f32 %v1686, %v1686
  %v1719 = vmul.f32 %v1687, %v1687
  %v1720 = vmul.f32 %v1688, %v1688
  %v1721 = vmul.f32 %v1689, %v1689
  %v1722 = vmul.f32 %v1690, %v1690
  %v1723 = vsel %vm1523, %v1691, 0.0
  %1724 = vadd.xlane.f32.xlu0 %v1723
  %v1725 = vpop.xlane.xlu0 %1724
  %v1726 = vsel %vm1523, %v1692, 0.0
  %1727 = vadd.xlane.f32.xlu0 %v1726
  %v1728 = vpop.xlane.xlu0 %1727
  %v1729 = vsel %vm1523, %v1693, 0.0
  %1730 = vadd.xlane.f32.xlu0 %v1729
  %v1731 = vpop.xlane.xlu0 %1730
  %v1732 = vsel %vm1523, %v1694, 0.0
  %1733 = vadd.xlane.f32.xlu0 %v1732
  %v1734 = vpop.xlane.xlu0 %1733
  %v1735 = vsel %vm1523, %v1695, 0.0
  %1736 = vadd.xlane.f32.xlu0 %v1735
  %v1737 = vpop.xlane.xlu0 %1736
  %v1738 = vsel %vm1523, %v1696, 0.0
  %1739 = vadd.xlane.f32.xlu0 %v1738
  %v1740 = vpop.xlane.xlu0 %1739
  %v1741 = vsel %vm1523, %v1697, 0.0
  %1742 = vadd.xlane.f32.xlu0 %v1741
  %v1743 = vpop.xlane.xlu0 %1742
  %v1744 = vsel %vm1523, %v1698, 0.0
  %1745 = vadd.xlane.f32.xlu0 %v1744
  %v1746 = vpop.xlane.xlu0 %1745
  %v1747 = vsel %vm1523, %v1699, 0.0
  %1748 = vadd.xlane.f32.xlu0 %v1747
  %v1749 = vpop.xlane.xlu0 %1748
  %v1750 = vsel %vm1523, %v1700, 0.0
  %1751 = vadd.xlane.f32.xlu0 %v1750
  %v1752 = vpop.xlane.xlu0 %1751
  %v1753 = vsel %vm1523, %v1701, 0.0
  %1754 = vadd.xlane.f32.xlu0 %v1753
  %v1755 = vpop.xlane.xlu0 %1754
  %v1756 = vsel %vm1523, %v1702, 0.0
  %1757 = vadd.xlane.f32.xlu0 %v1756
  %v1758 = vpop.xlane.xlu0 %1757
  %v1759 = vsel %vm1523, %v1703, 0.0
  %1760 = vadd.xlane.f32.xlu0 %v1759
  %v1761 = vpop.xlane.xlu0 %1760
  %v1762 = vsel %vm1523, %v1704, 0.0
  %1763 = vadd.xlane.f32.xlu0 %v1762
  %v1764 = vpop.xlane.xlu0 %1763
  %v1765 = vsel %vm1523, %v1705, 0.0
  %1766 = vadd.xlane.f32.xlu0 %v1765
  %v1767 = vpop.xlane.xlu0 %1766
  %v1768 = vsel %vm1523, %v1706, 0.0
  %1769 = vadd.xlane.f32.xlu0 %v1768
  %v1770 = vpop.xlane.xlu0 %1769
  %v1771 = vsel %vm1523, %v1707, 0.0
  %1772 = vadd.xlane.f32.xlu0 %v1771
  %v1773 = vpop.xlane.xlu0 %1772
  %v1774 = vsel %vm1523, %v1708, 0.0
  %1775 = vadd.xlane.f32.xlu0 %v1774
  %v1776 = vpop.xlane.xlu0 %1775
  %v1777 = vsel %vm1523, %v1709, 0.0
  %1778 = vadd.xlane.f32.xlu0 %v1777
  %v1779 = vpop.xlane.xlu0 %1778
  %v1780 = vsel %vm1523, %v1710, 0.0
  %1781 = vadd.xlane.f32.xlu0 %v1780
  %v1782 = vpop.xlane.xlu0 %1781
  %v1783 = vsel %vm1523, %v1711, 0.0
  %1784 = vadd.xlane.f32.xlu0 %v1783
  %v1785 = vpop.xlane.xlu0 %1784
  %v1786 = vsel %vm1523, %v1712, 0.0
  %1787 = vadd.xlane.f32.xlu0 %v1786
  %v1788 = vpop.xlane.xlu0 %1787
  %v1789 = vsel %vm1523, %v1713, 0.0
  %1790 = vadd.xlane.f32.xlu0 %v1789
  %v1791 = vpop.xlane.xlu0 %1790
  %v1792 = vsel %vm1523, %v1714, 0.0
  %1793 = vadd.xlane.f32.xlu0 %v1792
  %v1794 = vpop.xlane.xlu0 %1793
  %v1795 = vsel %vm1523, %v1715, 0.0
  %1796 = vadd.xlane.f32.xlu0 %v1795
  %v1797 = vpop.xlane.xlu0 %1796
  %v1798 = vsel %vm1523, %v1716, 0.0
  %1799 = vadd.xlane.f32.xlu0 %v1798
  %v1800 = vpop.xlane.xlu0 %1799
  %v1801 = vsel %vm1523, %v1717, 0.0
  %1802 = vadd.xlane.f32.xlu0 %v1801
  %v1803 = vpop.xlane.xlu0 %1802
  %v1804 = vsel %vm1523, %v1718, 0.0
  %1805 = vadd.xlane.f32.xlu0 %v1804
  %v1806 = vpop.xlane.xlu0 %1805
  %v1807 = vsel %vm1523, %v1719, 0.0
  %1808 = vadd.xlane.f32.xlu0 %v1807
  %v1809 = vpop.xlane.xlu0 %1808
  %v1810 = vsel %vm1523, %v1720, 0.0
  %1811 = vadd.xlane.f32.xlu0 %v1810
  %v1812 = vpop.xlane.xlu0 %1811
  %v1813 = vsel %vm1523, %v1721, 0.0
  %1814 = vadd.xlane.f32.xlu0 %v1813
  %v1815 = vpop.xlane.xlu0 %1814
  %v1816 = vsel %vm1523, %v1722, 0.0
  %1817 = vadd.xlane.f32.xlu0 %v1816
  %v1818 = vpop.xlane.xlu0 %1817
  %v1819 = vmul.f32 %v1725, 0.015873017
  %v1820 = vmul.f32 %v1728, 0.015873017
  %v1821 = vmul.f32 %v1731, 0.015873017
  %v1822 = vmul.f32 %v1734, 0.015873017
  %v1823 = vmul.f32 %v1737, 0.015873017
  %v1824 = vmul.f32 %v1740, 0.015873017
  %v1825 = vmul.f32 %v1743, 0.015873017
  %v1826 = vmul.f32 %v1746, 0.015873017
  %v1827 = vmul.f32 %v1749, 0.015873017
  %v1828 = vmul.f32 %v1752, 0.015873017
  %v1829 = vmul.f32 %v1755, 0.015873017
  %v1830 = vmul.f32 %v1758, 0.015873017
  %v1831 = vmul.f32 %v1761, 0.015873017
  %v1832 = vmul.f32 %v1764, 0.015873017
  %v1833 = vmul.f32 %v1767, 0.015873017
  %v1834 = vmul.f32 %v1770, 0.015873017
  %v1835 = vmul.f32 %v1773, 0.015873017
  %v1836 = vmul.f32 %v1776, 0.015873017
  %v1837 = vmul.f32 %v1779, 0.015873017
  %v1838 = vmul.f32 %v1782, 0.015873017
  %v1839 = vmul.f32 %v1785, 0.015873017
  %v1840 = vmul.f32 %v1788, 0.015873017
  %v1841 = vmul.f32 %v1791, 0.015873017
  %v1842 = vmul.f32 %v1794, 0.015873017
  %v1843 = vmul.f32 %v1797, 0.015873017
  %v1844 = vmul.f32 %v1800, 0.015873017
  %v1845 = vmul.f32 %v1803, 0.015873017
  %v1846 = vmul.f32 %v1806, 0.015873017
  %v1847 = vmul.f32 %v1809, 0.015873017
  %v1848 = vmul.f32 %v1812, 0.015873017
  %v1849 = vmul.f32 %v1815, 0.015873017
  %v1850 = vmul.f32 %v1818, 0.015873017
  %v1851 = vrsqrt.pop %v1819
  %v1852 = vmul.f32 %v1851, %v1819
  %v1853 = vmul.f32 %v1852, %v1851
  %v1854 = vmul.f32 0.5, %v1853
  %v1855 = vsub.f32 1.5, %v1854
  %v1856 = vmul.f32 %v1851, %v1855
  %v1857 = vmul.f32 %v1819, %v1856
  %vm1858 = vcmp.eq.f32.partialorder %v1819, inf
  %v1859 = vsel %vm1858, %v1819, %v1857
  %vm1860 = vcmp.eq.f32.partialorder %v1819, 0.0
  %v1861 = vand.u32 %v1819, 2147483648
  %v1862 = vsel %vm1860, %v1861, %v1859
  %v1863 = vrsqrt.pop %v1820
  %v1864 = vmul.f32 %v1863, %v1820
  %v1865 = vmul.f32 %v1864, %v1863
  %v1866 = vmul.f32 0.5, %v1865
  %v1867 = vsub.f32 1.5, %v1866
  %v1868 = vmul.f32 %v1863, %v1867
  %v1869 = vmul.f32 %v1820, %v1868
  %vm1870 = vcmp.eq.f32.partialorder %v1820, inf
  %v1871 = vsel %vm1870, %v1820, %v1869
  %vm1872 = vcmp.eq.f32.partialorder %v1820, 0.0
  %v1873 = vand.u32 %v1820, 2147483648
  %v1874 = vsel %vm1872, %v1873, %v1871
  %v1875 = vrsqrt.pop %v1821
  %v1876 = vmul.f32 %v1875, %v1821
  %v1877 = vmul.f32 %v1876, %v1875
  %v1878 = vmul.f32 0.5, %v1877
  %v1879 = vsub.f32 1.5, %v1878
  %v1880 = vmul.f32 %v1875, %v1879
  %v1881 = vmul.f32 %v1821, %v1880
  %vm1882 = vcmp.eq.f32.partialorder %v1821, inf
  %v1883 = vsel %vm1882, %v1821, %v1881
  %vm1884 = vcmp.eq.f32.partialorder %v1821, 0.0
  %v1885 = vand.u32 %v1821, 2147483648
  %v1886 = vsel %vm1884, %v1885, %v1883
  %v1887 = vrsqrt.pop %v1822
  %v1888 = vmul.f32 %v1887, %v1822
  %v1889 = vmul.f32 %v1888, %v1887
  %v1890 = vmul.f32 0.5, %v1889
  %v1891 = vsub.f32 1.5, %v1890
  %v1892 = vmul.f32 %v1887, %v1891
  %v1893 = vmul.f32 %v1822, %v1892
  %vm1894 = vcmp.eq.f32.partialorder %v1822, inf
  %v1895 = vsel %vm1894, %v1822, %v1893
  %vm1896 = vcmp.eq.f32.partialorder %v1822, 0.0
  %v1897 = vand.u32 %v1822, 2147483648
  %v1898 = vsel %vm1896, %v1897, %v1895
  %v1899 = vrsqrt.pop %v1823
  %v1900 = vmul.f32 %v1899, %v1823
  %v1901 = vmul.f32 %v1900, %v1899
  %v1902 = vmul.f32 0.5, %v1901
  %v1903 = vsub.f32 1.5, %v1902
  %v1904 = vmul.f32 %v1899, %v1903
  %v1905 = vmul.f32 %v1823, %v1904
  %vm1906 = vcmp.eq.f32.partialorder %v1823, inf
  %v1907 = vsel %vm1906, %v1823, %v1905
  %vm1908 = vcmp.eq.f32.partialorder %v1823, 0.0
  %v1909 = vand.u32 %v1823, 2147483648
  %v1910 = vsel %vm1908, %v1909, %v1907
  %v1911 = vrsqrt.pop %v1824
  %v1912 = vmul.f32 %v1911, %v1824
  %v1913 = vmul.f32 %v1912, %v1911
  %v1914 = vmul.f32 0.5, %v1913
  %v1915 = vsub.f32 1.5, %v1914
  %v1916 = vmul.f32 %v1911, %v1915
  %v1917 = vmul.f32 %v1824, %v1916
  %vm1918 = vcmp.eq.f32.partialorder %v1824, inf
  %v1919 = vsel %vm1918, %v1824, %v1917
  %vm1920 = vcmp.eq.f32.partialorder %v1824, 0.0
  %v1921 = vand.u32 %v1824, 2147483648
  %v1922 = vsel %vm1920, %v1921, %v1919
  %v1923 = vrsqrt.pop %v1825
  %v1924 = vmul.f32 %v1923, %v1825
  %v1925 = vmul.f32 %v1924, %v1923
  %v1926 = vmul.f32 0.5, %v1925
  %v1927 = vsub.f32 1.5, %v1926
  %v1928 = vmul.f32 %v1923, %v1927
  %v1929 = vmul.f32 %v1825, %v1928
  %vm1930 = vcmp.eq.f32.partialorder %v1825, inf
  %v1931 = vsel %vm1930, %v1825, %v1929
  %vm1932 = vcmp.eq.f32.partialorder %v1825, 0.0
  %v1933 = vand.u32 %v1825, 2147483648
  %v1934 = vsel %vm1932, %v1933, %v1931
  %v1935 = vrsqrt.pop %v1826
  %v1936 = vmul.f32 %v1935, %v1826
  %v1937 = vmul.f32 %v1936, %v1935
  %v1938 = vmul.f32 0.5, %v1937
  %v1939 = vsub.f32 1.5, %v1938
  %v1940 = vmul.f32 %v1935, %v1939
  %v1941 = vmul.f32 %v1826, %v1940
  %vm1942 = vcmp.eq.f32.partialorder %v1826, inf
  %v1943 = vsel %vm1942, %v1826, %v1941
  %vm1944 = vcmp.eq.f32.partialorder %v1826, 0.0
  %v1945 = vand.u32 %v1826, 2147483648
  %v1946 = vsel %vm1944, %v1945, %v1943
  %v1947 = vrsqrt.pop %v1827
  %v1948 = vmul.f32 %v1947, %v1827
  %v1949 = vmul.f32 %v1948, %v1947
  %v1950 = vmul.f32 0.5, %v1949
  %v1951 = vsub.f32 1.5, %v1950
  %v1952 = vmul.f32 %v1947, %v1951
  %v1953 = vmul.f32 %v1827, %v1952
  %vm1954 = vcmp.eq.f32.partialorder %v1827, inf
  %v1955 = vsel %vm1954, %v1827, %v1953
  %vm1956 = vcmp.eq.f32.partialorder %v1827, 0.0
  %v1957 = vand.u32 %v1827, 2147483648
  %v1958 = vsel %vm1956, %v1957, %v1955
  %v1959 = vrsqrt.pop %v1828
  %v1960 = vmul.f32 %v1959, %v1828
  %v1961 = vmul.f32 %v1960, %v1959
  %v1962 = vmul.f32 0.5, %v1961
  %v1963 = vsub.f32 1.5, %v1962
  %v1964 = vmul.f32 %v1959, %v1963
  %v1965 = vmul.f32 %v1828, %v1964
  %vm1966 = vcmp.eq.f32.partialorder %v1828, inf
  %v1967 = vsel %vm1966, %v1828, %v1965
  %vm1968 = vcmp.eq.f32.partialorder %v1828, 0.0
  %v1969 = vand.u32 %v1828, 2147483648
  %v1970 = vsel %vm1968, %v1969, %v1967
  %v1971 = vrsqrt.pop %v1829
  %v1972 = vmul.f32 %v1971, %v1829
  %v1973 = vmul.f32 %v1972, %v1971
  %v1974 = vmul.f32 0.5, %v1973
  %v1975 = vsub.f32 1.5, %v1974
  %v1976 = vmul.f32 %v1971, %v1975
  %v1977 = vmul.f32 %v1829, %v1976
  %vm1978 = vcmp.eq.f32.partialorder %v1829, inf
  %v1979 = vsel %vm1978, %v1829, %v1977
  %vm1980 = vcmp.eq.f32.partialorder %v1829, 0.0
  %v1981 = vand.u32 %v1829, 2147483648
  %v1982 = vsel %vm1980, %v1981, %v1979
  %v1983 = vrsqrt.pop %v1830
  %v1984 = vmul.f32 %v1983, %v1830
  %v1985 = vmul.f32 %v1984, %v1983
  %v1986 = vmul.f32 0.5, %v1985
  %v1987 = vsub.f32 1.5, %v1986
  %v1988 = vmul.f32 %v1983, %v1987
  %v1989 = vmul.f32 %v1830, %v1988
  %vm1990 = vcmp.eq.f32.partialorder %v1830, inf
  %v1991 = vsel %vm1990, %v1830, %v1989
  %vm1992 = vcmp.eq.f32.partialorder %v1830, 0.0
  %v1993 = vand.u32 %v1830, 2147483648
  %v1994 = vsel %vm1992, %v1993, %v1991
  %v1995 = vrsqrt.pop %v1831
  %v1996 = vmul.f32 %v1995, %v1831
  %v1997 = vmul.f32 %v1996, %v1995
  %v1998 = vmul.f32 0.5, %v1997
  %v1999 = vsub.f32 1.5, %v1998
  %v2000 = vmul.f32 %v1995, %v1999
  %v2001 = vmul.f32 %v1831, %v2000
  %vm2002 = vcmp.eq.f32.partialorder %v1831, inf
  %v2003 = vsel %vm2002, %v1831, %v2001
  %vm2004 = vcmp.eq.f32.partialorder %v1831, 0.0
  %v2005 = vand.u32 %v1831, 2147483648
  %v2006 = vsel %vm2004, %v2005, %v2003
  %v2007 = vrsqrt.pop %v1832
  %v2008 = vmul.f32 %v2007, %v1832
  %v2009 = vmul.f32 %v2008, %v2007
  %v2010 = vmul.f32 0.5, %v2009
  %v2011 = vsub.f32 1.5, %v2010
  %v2012 = vmul.f32 %v2007, %v2011
  %v2013 = vmul.f32 %v1832, %v2012
  %vm2014 = vcmp.eq.f32.partialorder %v1832, inf
  %v2015 = vsel %vm2014, %v1832, %v2013
  %vm2016 = vcmp.eq.f32.partialorder %v1832, 0.0
  %v2017 = vand.u32 %v1832, 2147483648
  %v2018 = vsel %vm2016, %v2017, %v2015
  %v2019 = vrsqrt.pop %v1833
  %v2020 = vmul.f32 %v2019, %v1833
  %v2021 = vmul.f32 %v2020, %v2019
  %v2022 = vmul.f32 0.5, %v2021
  %v2023 = vsub.f32 1.5, %v2022
  %v2024 = vmul.f32 %v2019, %v2023
  %v2025 = vmul.f32 %v1833, %v2024
  %vm2026 = vcmp.eq.f32.partialorder %v1833, inf
  %v2027 = vsel %vm2026, %v1833, %v2025
  %vm2028 = vcmp.eq.f32.partialorder %v1833, 0.0
  %v2029 = vand.u32 %v1833, 2147483648
  %v2030 = vsel %vm2028, %v2029, %v2027
  %v2031 = vrsqrt.pop %v1834
  %v2032 = vmul.f32 %v2031, %v1834
  %v2033 = vmul.f32 %v2032, %v2031
  %v2034 = vmul.f32 0.5, %v2033
  %v2035 = vsub.f32 1.5, %v2034
  %v2036 = vmul.f32 %v2031, %v2035
  %v2037 = vmul.f32 %v1834, %v2036
  %vm2038 = vcmp.eq.f32.partialorder %v1834, inf
  %v2039 = vsel %vm2038, %v1834, %v2037
  %vm2040 = vcmp.eq.f32.partialorder %v1834, 0.0
  %v2041 = vand.u32 %v1834, 2147483648
  %v2042 = vsel %vm2040, %v2041, %v2039
  %v2043 = vrsqrt.pop %v1835
  %v2044 = vmul.f32 %v2043, %v1835
  %v2045 = vmul.f32 %v2044, %v2043
  %v2046 = vmul.f32 0.5, %v2045
  %v2047 = vsub.f32 1.5, %v2046
  %v2048 = vmul.f32 %v2043, %v2047
  %v2049 = vmul.f32 %v1835, %v2048
  %vm2050 = vcmp.eq.f32.partialorder %v1835, inf
  %v2051 = vsel %vm2050, %v1835, %v2049
  %vm2052 = vcmp.eq.f32.partialorder %v1835, 0.0
  %v2053 = vand.u32 %v1835, 2147483648
  %v2054 = vsel %vm2052, %v2053, %v2051
  %v2055 = vrsqrt.pop %v1836
  %v2056 = vmul.f32 %v2055, %v1836
  %v2057 = vmul.f32 %v2056, %v2055
  %v2058 = vmul.f32 0.5, %v2057
  %v2059 = vsub.f32 1.5, %v2058
  %v2060 = vmul.f32 %v2055, %v2059
  %v2061 = vmul.f32 %v1836, %v2060
  %vm2062 = vcmp.eq.f32.partialorder %v1836, inf
  %v2063 = vsel %vm2062, %v1836, %v2061
  %vm2064 = vcmp.eq.f32.partialorder %v1836, 0.0
  %v2065 = vand.u32 %v1836, 2147483648
  %v2066 = vsel %vm2064, %v2065, %v2063
  %v2067 = vrsqrt.pop %v1837
  %v2068 = vmul.f32 %v2067, %v1837
  %v2069 = vmul.f32 %v2068, %v2067
  %v2070 = vmul.f32 0.5, %v2069
  %v2071 = vsub.f32 1.5, %v2070
  %v2072 = vmul.f32 %v2067, %v2071
  %v2073 = vmul.f32 %v1837, %v2072
  %vm2074 = vcmp.eq.f32.partialorder %v1837, inf
  %v2075 = vsel %vm2074, %v1837, %v2073
  %vm2076 = vcmp.eq.f32.partialorder %v1837, 0.0
  %v2077 = vand.u32 %v1837, 2147483648
  %v2078 = vsel %vm2076, %v2077, %v2075
  %v2079 = vrsqrt.pop %v1838
  %v2080 = vmul.f32 %v2079, %v1838
  %v2081 = vmul.f32 %v2080, %v2079
  %v2082 = vmul.f32 0.5, %v2081
  %v2083 = vsub.f32 1.5, %v2082
  %v2084 = vmul.f32 %v2079, %v2083
  %v2085 = vmul.f32 %v1838, %v2084
  %vm2086 = vcmp.eq.f32.partialorder %v1838, inf
  %v2087 = vsel %vm2086, %v1838, %v2085
  %vm2088 = vcmp.eq.f32.partialorder %v1838, 0.0
  %v2089 = vand.u32 %v1838, 2147483648
  %v2090 = vsel %vm2088, %v2089, %v2087
  %v2091 = vrsqrt.pop %v1839
  %v2092 = vmul.f32 %v2091, %v1839
  %v2093 = vmul.f32 %v2092, %v2091
  %v2094 = vmul.f32 0.5, %v2093
  %v2095 = vsub.f32 1.5, %v2094
  %v2096 = vmul.f32 %v2091, %v2095
  %v2097 = vmul.f32 %v1839, %v2096
  %vm2098 = vcmp.eq.f32.partialorder %v1839, inf
  %v2099 = vsel %vm2098, %v1839, %v2097
  %vm2100 = vcmp.eq.f32.partialorder %v1839, 0.0
  %v2101 = vand.u32 %v1839, 2147483648
  %v2102 = vsel %vm2100, %v2101, %v2099
  %v2103 = vrsqrt.pop %v1840
  %v2104 = vmul.f32 %v2103, %v1840
  %v2105 = vmul.f32 %v2104, %v2103
  %v2106 = vmul.f32 0.5, %v2105
  %v2107 = vsub.f32 1.5, %v2106
  %v2108 = vmul.f32 %v2103, %v2107
  %v2109 = vmul.f32 %v1840, %v2108
  %vm2110 = vcmp.eq.f32.partialorder %v1840, inf
  %v2111 = vsel %vm2110, %v1840, %v2109
  %vm2112 = vcmp.eq.f32.partialorder %v1840, 0.0
  %v2113 = vand.u32 %v1840, 2147483648
  %v2114 = vsel %vm2112, %v2113, %v2111
  %v2115 = vrsqrt.pop %v1841
  %v2116 = vmul.f32 %v2115, %v1841
  %v2117 = vmul.f32 %v2116, %v2115
  %v2118 = vmul.f32 0.5, %v2117
  %v2119 = vsub.f32 1.5, %v2118
  %v2120 = vmul.f32 %v2115, %v2119
  %v2121 = vmul.f32 %v1841, %v2120
  %vm2122 = vcmp.eq.f32.partialorder %v1841, inf
  %v2123 = vsel %vm2122, %v1841, %v2121
  %vm2124 = vcmp.eq.f32.partialorder %v1841, 0.0
  %v2125 = vand.u32 %v1841, 2147483648
  %v2126 = vsel %vm2124, %v2125, %v2123
  %v2127 = vrsqrt.pop %v1842
  %v2128 = vmul.f32 %v2127, %v1842
  %v2129 = vmul.f32 %v2128, %v2127
  %v2130 = vmul.f32 0.5, %v2129
  %v2131 = vsub.f32 1.5, %v2130
  %v2132 = vmul.f32 %v2127, %v2131
  %v2133 = vmul.f32 %v1842, %v2132
  %vm2134 = vcmp.eq.f32.partialorder %v1842, inf
  %v2135 = vsel %vm2134, %v1842, %v2133
  %vm2136 = vcmp.eq.f32.partialorder %v1842, 0.0
  %v2137 = vand.u32 %v1842, 2147483648
  %v2138 = vsel %vm2136, %v2137, %v2135
  %v2139 = vrsqrt.pop %v1843
  %v2140 = vmul.f32 %v2139, %v1843
  %v2141 = vmul.f32 %v2140, %v2139
  %v2142 = vmul.f32 0.5, %v2141
  %v2143 = vsub.f32 1.5, %v2142
  %v2144 = vmul.f32 %v2139, %v2143
  %v2145 = vmul.f32 %v1843, %v2144
  %vm2146 = vcmp.eq.f32.partialorder %v1843, inf
  %v2147 = vsel %vm2146, %v1843, %v2145
  %vm2148 = vcmp.eq.f32.partialorder %v1843, 0.0
  %v2149 = vand.u32 %v1843, 2147483648
  %v2150 = vsel %vm2148, %v2149, %v2147
  %v2151 = vrsqrt.pop %v1844
  %v2152 = vmul.f32 %v2151, %v1844
  %v2153 = vmul.f32 %v2152, %v2151
  %v2154 = vmul.f32 0.5, %v2153
  %v2155 = vsub.f32 1.5, %v2154
  %v2156 = vmul.f32 %v2151, %v2155
  %v2157 = vmul.f32 %v1844, %v2156
  %vm2158 = vcmp.eq.f32.partialorder %v1844, inf
  %v2159 = vsel %vm2158, %v1844, %v2157
  %vm2160 = vcmp.eq.f32.partialorder %v1844, 0.0
  %v2161 = vand.u32 %v1844, 2147483648
  %v2162 = vsel %vm2160, %v2161, %v2159
  %v2163 = vrsqrt.pop %v1845
  %v2164 = vmul.f32 %v2163, %v1845
  %v2165 = vmul.f32 %v2164, %v2163
  %v2166 = vmul.f32 0.5, %v2165
  %v2167 = vsub.f32 1.5, %v2166
  %v2168 = vmul.f32 %v2163, %v2167
  %v2169 = vmul.f32 %v1845, %v2168
  %vm2170 = vcmp.eq.f32.partialorder %v1845, inf
  %v2171 = vsel %vm2170, %v1845, %v2169
  %vm2172 = vcmp.eq.f32.partialorder %v1845, 0.0
  %v2173 = vand.u32 %v1845, 2147483648
  %v2174 = vsel %vm2172, %v2173, %v2171
  %v2175 = vrsqrt.pop %v1846
  %v2176 = vmul.f32 %v2175, %v1846
  %v2177 = vmul.f32 %v2176, %v2175
  %v2178 = vmul.f32 0.5, %v2177
  %v2179 = vsub.f32 1.5, %v2178
  %v2180 = vmul.f32 %v2175, %v2179
  %v2181 = vmul.f32 %v1846, %v2180
  %vm2182 = vcmp.eq.f32.partialorder %v1846, inf
  %v2183 = vsel %vm2182, %v1846, %v2181
  %vm2184 = vcmp.eq.f32.partialorder %v1846, 0.0
  %v2185 = vand.u32 %v1846, 2147483648
  %v2186 = vsel %vm2184, %v2185, %v2183
  %v2187 = vrsqrt.pop %v1847
  %v2188 = vmul.f32 %v2187, %v1847
  %v2189 = vmul.f32 %v2188, %v2187
  %v2190 = vmul.f32 0.5, %v2189
  %v2191 = vsub.f32 1.5, %v2190
  %v2192 = vmul.f32 %v2187, %v2191
  %v2193 = vmul.f32 %v1847, %v2192
  %vm2194 = vcmp.eq.f32.partialorder %v1847, inf
  %v2195 = vsel %vm2194, %v1847, %v2193
  %vm2196 = vcmp.eq.f32.partialorder %v1847, 0.0
  %v2197 = vand.u32 %v1847, 2147483648
  %v2198 = vsel %vm2196, %v2197, %v2195
  %v2199 = vrsqrt.pop %v1848
  %v2200 = vmul.f32 %v2199, %v1848
  %v2201 = vmul.f32 %v2200, %v2199
  %v2202 = vmul.f32 0.5, %v2201
  %v2203 = vsub.f32 1.5, %v2202
  %v2204 = vmul.f32 %v2199, %v2203
  %v2205 = vmul.f32 %v1848, %v2204
  %vm2206 = vcmp.eq.f32.partialorder %v1848, inf
  %v2207 = vsel %vm2206, %v1848, %v2205
  %vm2208 = vcmp.eq.f32.partialorder %v1848, 0.0
  %v2209 = vand.u32 %v1848, 2147483648
  %v2210 = vsel %vm2208, %v2209, %v2207
  %v2211 = vrsqrt.pop %v1849
  %v2212 = vmul.f32 %v2211, %v1849
  %v2213 = vmul.f32 %v2212, %v2211
  %v2214 = vmul.f32 0.5, %v2213
  %v2215 = vsub.f32 1.5, %v2214
  %v2216 = vmul.f32 %v2211, %v2215
  %v2217 = vmul.f32 %v1849, %v2216
  %vm2218 = vcmp.eq.f32.partialorder %v1849, inf
  %v2219 = vsel %vm2218, %v1849, %v2217
  %vm2220 = vcmp.eq.f32.partialorder %v1849, 0.0
  %v2221 = vand.u32 %v1849, 2147483648
  %v2222 = vsel %vm2220, %v2221, %v2219
  %v2223 = vrsqrt.pop %v1850
  %v2224 = vmul.f32 %v2223, %v1850
  %v2225 = vmul.f32 %v2224, %v2223
  %v2226 = vmul.f32 0.5, %v2225
  %v2227 = vsub.f32 1.5, %v2226
  %v2228 = vmul.f32 %v2223, %v2227
  %v2229 = vmul.f32 %v1850, %v2228
  %vm2230 = vcmp.eq.f32.partialorder %v1850, inf
  %v2231 = vsel %vm2230, %v1850, %v2229
  %vm2232 = vcmp.eq.f32.partialorder %v1850, 0.0
  %v2233 = vand.u32 %v1850, 2147483648
  %v2234 = vsel %vm2232, %v2233, %v2231
  %v2235 = vadd.f32 %v1862, 1e-06
  %v2236 = vadd.f32 %v1874, 1e-06
  %v2237 = vadd.f32 %v1886, 1e-06
  %v2238 = vadd.f32 %v1898, 1e-06
  %v2239 = vadd.f32 %v1910, 1e-06
  %v2240 = vadd.f32 %v1922, 1e-06
  %v2241 = vadd.f32 %v1934, 1e-06
  %v2242 = vadd.f32 %v1946, 1e-06
  %v2243 = vadd.f32 %v1958, 1e-06
  %v2244 = vadd.f32 %v1970, 1e-06
  %v2245 = vadd.f32 %v1982, 1e-06
  %v2246 = vadd.f32 %v1994, 1e-06
  %v2247 = vadd.f32 %v2006, 1e-06
  %v2248 = vadd.f32 %v2018, 1e-06
  %v2249 = vadd.f32 %v2030, 1e-06
  %v2250 = vadd.f32 %v2042, 1e-06
  %v2251 = vadd.f32 %v2054, 1e-06
  %v2252 = vadd.f32 %v2066, 1e-06
  %v2253 = vadd.f32 %v2078, 1e-06
  %v2254 = vadd.f32 %v2090, 1e-06
  %v2255 = vadd.f32 %v2102, 1e-06
  %v2256 = vadd.f32 %v2114, 1e-06
  %v2257 = vadd.f32 %v2126, 1e-06
  %v2258 = vadd.f32 %v2138, 1e-06
  %v2259 = vadd.f32 %v2150, 1e-06
  %v2260 = vadd.f32 %v2162, 1e-06
  %v2261 = vadd.f32 %v2174, 1e-06
  %v2262 = vadd.f32 %v2186, 1e-06
  %v2263 = vadd.f32 %v2198, 1e-06
  %v2264 = vadd.f32 %v2210, 1e-06
  %v2265 = vadd.f32 %v2222, 1e-06
  %v2266 = vadd.f32 %v2234, 1e-06
  %v2267 = vrcp.pop %v2235
  %v2268 = vmul.f32 %v2235, %v2267
  %v2269 = vsub.f32 1.0, %v2268
  %v2270 = vmul.f32 %v2267, %v2269
  %v2271 = vadd.f32 %v2267, %v2270
  %vm2272 = vweird.f32 %v2235
  %vm2273 = vweird.f32 %v2267
  %vm2274 = vmor %vm2272, %vm2273
  %v2275 = vsel %vm2274, %v2267, %v2271
  %v2276 = vand.u32 2147483647, %v2235
  %vm2277 = vcmp.eq.f32.partialorder %v2276, 8.507059e+37
  %v2278 = vand.u32 %v2235, 2147483648
  %v2279 = vor.u32 1.1754944e-38, %v2278
  %v2280 = vsel %vm2277, %v2279, %v2275
  %v2281 = vrcp.pop %v2236
  %v2282 = vmul.f32 %v2236, %v2281
  %v2283 = vsub.f32 1.0, %v2282
  %v2284 = vmul.f32 %v2281, %v2283
  %v2285 = vadd.f32 %v2281, %v2284
  %vm2286 = vweird.f32 %v2236
  %vm2287 = vweird.f32 %v2281
  %vm2288 = vmor %vm2286, %vm2287
  %v2289 = vsel %vm2288, %v2281, %v2285
  %v2290 = vand.u32 2147483647, %v2236
  %vm2291 = vcmp.eq.f32.partialorder %v2290, 8.507059e+37
  %v2292 = vand.u32 %v2236, 2147483648
  %v2293 = vor.u32 1.1754944e-38, %v2292
  %v2294 = vsel %vm2291, %v2293, %v2289
  %v2295 = vrcp.pop %v2237
  %v2296 = vmul.f32 %v2237, %v2295
  %v2297 = vsub.f32 1.0, %v2296
  %v2298 = vmul.f32 %v2295, %v2297
  %v2299 = vadd.f32 %v2295, %v2298
  %vm2300 = vweird.f32 %v2237
  %vm2301 = vweird.f32 %v2295
  %vm2302 = vmor %vm2300, %vm2301
  %v2303 = vsel %vm2302, %v2295, %v2299
  %v2304 = vand.u32 2147483647, %v2237
  %vm2305 = vcmp.eq.f32.partialorder %v2304, 8.507059e+37
  %v2306 = vand.u32 %v2237, 2147483648
  %v2307 = vor.u32 1.1754944e-38, %v2306
  %v2308 = vsel %vm2305, %v2307, %v2303
  %v2309 = vrcp.pop %v2238
  %v2310 = vmul.f32 %v2238, %v2309
  %v2311 = vsub.f32 1.0, %v2310
  %v2312 = vmul.f32 %v2309, %v2311
  %v2313 = vadd.f32 %v2309, %v2312
  %vm2314 = vweird.f32 %v2238
  %vm2315 = vweird.f32 %v2309
  %vm2316 = vmor %vm2314, %vm2315
  %v2317 = vsel %vm2316, %v2309, %v2313
  %v2318 = vand.u32 2147483647, %v2238
  %vm2319 = vcmp.eq.f32.partialorder %v2318, 8.507059e+37
  %v2320 = vand.u32 %v2238, 2147483648
  %v2321 = vor.u32 1.1754944e-38, %v2320
  %v2322 = vsel %vm2319, %v2321, %v2317
  %v2323 = vrcp.pop %v2239
  %v2324 = vmul.f32 %v2239, %v2323
  %v2325 = vsub.f32 1.0, %v2324
  %v2326 = vmul.f32 %v2323, %v2325
  %v2327 = vadd.f32 %v2323, %v2326
  %vm2328 = vweird.f32 %v2239
  %vm2329 = vweird.f32 %v2323
  %vm2330 = vmor %vm2328, %vm2329
  %v2331 = vsel %vm2330, %v2323, %v2327
  %v2332 = vand.u32 2147483647, %v2239
  %vm2333 = vcmp.eq.f32.partialorder %v2332, 8.507059e+37
  %v2334 = vand.u32 %v2239, 2147483648
  %v2335 = vor.u32 1.1754944e-38, %v2334
  %v2336 = vsel %vm2333, %v2335, %v2331
  %v2337 = vrcp.pop %v2240
  %v2338 = vmul.f32 %v2240, %v2337
  %v2339 = vsub.f32 1.0, %v2338
  %v2340 = vmul.f32 %v2337, %v2339
  %v2341 = vadd.f32 %v2337, %v2340
  %vm2342 = vweird.f32 %v2240
  %vm2343 = vweird.f32 %v2337
  %vm2344 = vmor %vm2342, %vm2343
  %v2345 = vsel %vm2344, %v2337, %v2341
  %v2346 = vand.u32 2147483647, %v2240
  %vm2347 = vcmp.eq.f32.partialorder %v2346, 8.507059e+37
  %v2348 = vand.u32 %v2240, 2147483648
  %v2349 = vor.u32 1.1754944e-38, %v2348
  %v2350 = vsel %vm2347, %v2349, %v2345
  %v2351 = vrcp.pop %v2241
  %v2352 = vmul.f32 %v2241, %v2351
  %v2353 = vsub.f32 1.0, %v2352
  %v2354 = vmul.f32 %v2351, %v2353
  %v2355 = vadd.f32 %v2351, %v2354
  %vm2356 = vweird.f32 %v2241
  %vm2357 = vweird.f32 %v2351
  %vm2358 = vmor %vm2356, %vm2357
  %v2359 = vsel %vm2358, %v2351, %v2355
  %v2360 = vand.u32 2147483647, %v2241
  %vm2361 = vcmp.eq.f32.partialorder %v2360, 8.507059e+37
  %v2362 = vand.u32 %v2241, 2147483648
  %v2363 = vor.u32 1.1754944e-38, %v2362
  %v2364 = vsel %vm2361, %v2363, %v2359
  %v2365 = vrcp.pop %v2242
  %v2366 = vmul.f32 %v2242, %v2365
  %v2367 = vsub.f32 1.0, %v2366
  %v2368 = vmul.f32 %v2365, %v2367
  %v2369 = vadd.f32 %v2365, %v2368
  %vm2370 = vweird.f32 %v2242
  %vm2371 = vweird.f32 %v2365
  %vm2372 = vmor %vm2370, %vm2371
  %v2373 = vsel %vm2372, %v2365, %v2369
  %v2374 = vand.u32 2147483647, %v2242
  %vm2375 = vcmp.eq.f32.partialorder %v2374, 8.507059e+37
  %v2376 = vand.u32 %v2242, 2147483648
  %v2377 = vor.u32 1.1754944e-38, %v2376
  %v2378 = vsel %vm2375, %v2377, %v2373
  %v2379 = vrcp.pop %v2243
  %v2380 = vmul.f32 %v2243, %v2379
  %v2381 = vsub.f32 1.0, %v2380
  %v2382 = vmul.f32 %v2379, %v2381
  %v2383 = vadd.f32 %v2379, %v2382
  %vm2384 = vweird.f32 %v2243
  %vm2385 = vweird.f32 %v2379
  %vm2386 = vmor %vm2384, %vm2385
  %v2387 = vsel %vm2386, %v2379, %v2383
  %v2388 = vand.u32 2147483647, %v2243
  %vm2389 = vcmp.eq.f32.partialorder %v2388, 8.507059e+37
  %v2390 = vand.u32 %v2243, 2147483648
  %v2391 = vor.u32 1.1754944e-38, %v2390
  %v2392 = vsel %vm2389, %v2391, %v2387
  %v2393 = vrcp.pop %v2244
  %v2394 = vmul.f32 %v2244, %v2393
  %v2395 = vsub.f32 1.0, %v2394
  %v2396 = vmul.f32 %v2393, %v2395
  %v2397 = vadd.f32 %v2393, %v2396
  %vm2398 = vweird.f32 %v2244
  %vm2399 = vweird.f32 %v2393
  %vm2400 = vmor %vm2398, %vm2399
  %v2401 = vsel %vm2400, %v2393, %v2397
  %v2402 = vand.u32 2147483647, %v2244
  %vm2403 = vcmp.eq.f32.partialorder %v2402, 8.507059e+37
  %v2404 = vand.u32 %v2244, 2147483648
  %v2405 = vor.u32 1.1754944e-38, %v2404
  %v2406 = vsel %vm2403, %v2405, %v2401
  %v2407 = vrcp.pop %v2245
  %v2408 = vmul.f32 %v2245, %v2407
  %v2409 = vsub.f32 1.0, %v2408
  %v2410 = vmul.f32 %v2407, %v2409
  %v2411 = vadd.f32 %v2407, %v2410
  %vm2412 = vweird.f32 %v2245
  %vm2413 = vweird.f32 %v2407
  %vm2414 = vmor %vm2412, %vm2413
  %v2415 = vsel %vm2414, %v2407, %v2411
  %v2416 = vand.u32 2147483647, %v2245
  %vm2417 = vcmp.eq.f32.partialorder %v2416, 8.507059e+37
  %v2418 = vand.u32 %v2245, 2147483648
  %v2419 = vor.u32 1.1754944e-38, %v2418
  %v2420 = vsel %vm2417, %v2419, %v2415
  %v2421 = vrcp.pop %v2246
  %v2422 = vmul.f32 %v2246, %v2421
  %v2423 = vsub.f32 1.0, %v2422
  %v2424 = vmul.f32 %v2421, %v2423
  %v2425 = vadd.f32 %v2421, %v2424
  %vm2426 = vweird.f32 %v2246
  %vm2427 = vweird.f32 %v2421
  %vm2428 = vmor %vm2426, %vm2427
  %v2429 = vsel %vm2428, %v2421, %v2425
  %v2430 = vand.u32 2147483647, %v2246
  %vm2431 = vcmp.eq.f32.partialorder %v2430, 8.507059e+37
  %v2432 = vand.u32 %v2246, 2147483648
  %v2433 = vor.u32 1.1754944e-38, %v2432
  %v2434 = vsel %vm2431, %v2433, %v2429
  %v2435 = vrcp.pop %v2247
  %v2436 = vmul.f32 %v2247, %v2435
  %v2437 = vsub.f32 1.0, %v2436
  %v2438 = vmul.f32 %v2435, %v2437
  %v2439 = vadd.f32 %v2435, %v2438
  %vm2440 = vweird.f32 %v2247
  %vm2441 = vweird.f32 %v2435
  %vm2442 = vmor %vm2440, %vm2441
  %v2443 = vsel %vm2442, %v2435, %v2439
  %v2444 = vand.u32 2147483647, %v2247
  %vm2445 = vcmp.eq.f32.partialorder %v2444, 8.507059e+37
  %v2446 = vand.u32 %v2247, 2147483648
  %v2447 = vor.u32 1.1754944e-38, %v2446
  %v2448 = vsel %vm2445, %v2447, %v2443
  %v2449 = vrcp.pop %v2248
  %v2450 = vmul.f32 %v2248, %v2449
  %v2451 = vsub.f32 1.0, %v2450
  %v2452 = vmul.f32 %v2449, %v2451
  %v2453 = vadd.f32 %v2449, %v2452
  %vm2454 = vweird.f32 %v2248
  %vm2455 = vweird.f32 %v2449
  %vm2456 = vmor %vm2454, %vm2455
  %v2457 = vsel %vm2456, %v2449, %v2453
  %v2458 = vand.u32 2147483647, %v2248
  %vm2459 = vcmp.eq.f32.partialorder %v2458, 8.507059e+37
  %v2460 = vand.u32 %v2248, 2147483648
  %v2461 = vor.u32 1.1754944e-38, %v2460
  %v2462 = vsel %vm2459, %v2461, %v2457
  %v2463 = vrcp.pop %v2249
  %v2464 = vmul.f32 %v2249, %v2463
  %v2465 = vsub.f32 1.0, %v2464
  %v2466 = vmul.f32 %v2463, %v2465
  %v2467 = vadd.f32 %v2463, %v2466
  %vm2468 = vweird.f32 %v2249
  %vm2469 = vweird.f32 %v2463
  %vm2470 = vmor %vm2468, %vm2469
  %v2471 = vsel %vm2470, %v2463, %v2467
  %v2472 = vand.u32 2147483647, %v2249
  %vm2473 = vcmp.eq.f32.partialorder %v2472, 8.507059e+37
  %v2474 = vand.u32 %v2249, 2147483648
  %v2475 = vor.u32 1.1754944e-38, %v2474
  %v2476 = vsel %vm2473, %v2475, %v2471
  %v2477 = vrcp.pop %v2250
  %v2478 = vmul.f32 %v2250, %v2477
  %v2479 = vsub.f32 1.0, %v2478
  %v2480 = vmul.f32 %v2477, %v2479
  %v2481 = vadd.f32 %v2477, %v2480
  %vm2482 = vweird.f32 %v2250
  %vm2483 = vweird.f32 %v2477
  %vm2484 = vmor %vm2482, %vm2483
  %v2485 = vsel %vm2484, %v2477, %v2481
  %v2486 = vand.u32 2147483647, %v2250
  %vm2487 = vcmp.eq.f32.partialorder %v2486, 8.507059e+37
  %v2488 = vand.u32 %v2250, 2147483648
  %v2489 = vor.u32 1.1754944e-38, %v2488
  %v2490 = vsel %vm2487, %v2489, %v2485
  %v2491 = vrcp.pop %v2251
  %v2492 = vmul.f32 %v2251, %v2491
  %v2493 = vsub.f32 1.0, %v2492
  %v2494 = vmul.f32 %v2491, %v2493
  %v2495 = vadd.f32 %v2491, %v2494
  %vm2496 = vweird.f32 %v2251
  %vm2497 = vweird.f32 %v2491
  %vm2498 = vmor %vm2496, %vm2497
  %v2499 = vsel %vm2498, %v2491, %v2495
  %v2500 = vand.u32 2147483647, %v2251
  %vm2501 = vcmp.eq.f32.partialorder %v2500, 8.507059e+37
  %v2502 = vand.u32 %v2251, 2147483648
  %v2503 = vor.u32 1.1754944e-38, %v2502
  %v2504 = vsel %vm2501, %v2503, %v2499
  %v2505 = vrcp.pop %v2252
  %v2506 = vmul.f32 %v2252, %v2505
  %v2507 = vsub.f32 1.0, %v2506
  %v2508 = vmul.f32 %v2505, %v2507
  %v2509 = vadd.f32 %v2505, %v2508
  %vm2510 = vweird.f32 %v2252
  %vm2511 = vweird.f32 %v2505
  %vm2512 = vmor %vm2510, %vm2511
  %v2513 = vsel %vm2512, %v2505, %v2509
  %v2514 = vand.u32 2147483647, %v2252
  %vm2515 = vcmp.eq.f32.partialorder %v2514, 8.507059e+37
  %v2516 = vand.u32 %v2252, 2147483648
  %v2517 = vor.u32 1.1754944e-38, %v2516
  %v2518 = vsel %vm2515, %v2517, %v2513
  %v2519 = vrcp.pop %v2253
  %v2520 = vmul.f32 %v2253, %v2519
  %v2521 = vsub.f32 1.0, %v2520
  %v2522 = vmul.f32 %v2519, %v2521
  %v2523 = vadd.f32 %v2519, %v2522
  %vm2524 = vweird.f32 %v2253
  %vm2525 = vweird.f32 %v2519
  %vm2526 = vmor %vm2524, %vm2525
  %v2527 = vsel %vm2526, %v2519, %v2523
  %v2528 = vand.u32 2147483647, %v2253
  %vm2529 = vcmp.eq.f32.partialorder %v2528, 8.507059e+37
  %v2530 = vand.u32 %v2253, 2147483648
  %v2531 = vor.u32 1.1754944e-38, %v2530
  %v2532 = vsel %vm2529, %v2531, %v2527
  %v2533 = vrcp.pop %v2254
  %v2534 = vmul.f32 %v2254, %v2533
  %v2535 = vsub.f32 1.0, %v2534
  %v2536 = vmul.f32 %v2533, %v2535
  %v2537 = vadd.f32 %v2533, %v2536
  %vm2538 = vweird.f32 %v2254
  %vm2539 = vweird.f32 %v2533
  %vm2540 = vmor %vm2538, %vm2539
  %v2541 = vsel %vm2540, %v2533, %v2537
  %v2542 = vand.u32 2147483647, %v2254
  %vm2543 = vcmp.eq.f32.partialorder %v2542, 8.507059e+37
  %v2544 = vand.u32 %v2254, 2147483648
  %v2545 = vor.u32 1.1754944e-38, %v2544
  %v2546 = vsel %vm2543, %v2545, %v2541
  %v2547 = vrcp.pop %v2255
  %v2548 = vmul.f32 %v2255, %v2547
  %v2549 = vsub.f32 1.0, %v2548
  %v2550 = vmul.f32 %v2547, %v2549
  %v2551 = vadd.f32 %v2547, %v2550
  %vm2552 = vweird.f32 %v2255
  %vm2553 = vweird.f32 %v2547
  %vm2554 = vmor %vm2552, %vm2553
  %v2555 = vsel %vm2554, %v2547, %v2551
  %v2556 = vand.u32 2147483647, %v2255
  %vm2557 = vcmp.eq.f32.partialorder %v2556, 8.507059e+37
  %v2558 = vand.u32 %v2255, 2147483648
  %v2559 = vor.u32 1.1754944e-38, %v2558
  %v2560 = vsel %vm2557, %v2559, %v2555
  %v2561 = vrcp.pop %v2256
  %v2562 = vmul.f32 %v2256, %v2561
  %v2563 = vsub.f32 1.0, %v2562
  %v2564 = vmul.f32 %v2561, %v2563
  %v2565 = vadd.f32 %v2561, %v2564
  %vm2566 = vweird.f32 %v2256
  %vm2567 = vweird.f32 %v2561
  %vm2568 = vmor %vm2566, %vm2567
  %v2569 = vsel %vm2568, %v2561, %v2565
  %v2570 = vand.u32 2147483647, %v2256
  %vm2571 = vcmp.eq.f32.partialorder %v2570, 8.507059e+37
  %v2572 = vand.u32 %v2256, 2147483648
  %v2573 = vor.u32 1.1754944e-38, %v2572
  %v2574 = vsel %vm2571, %v2573, %v2569
  %v2575 = vrcp.pop %v2257
  %v2576 = vmul.f32 %v2257, %v2575
  %v2577 = vsub.f32 1.0, %v2576
  %v2578 = vmul.f32 %v2575, %v2577
  %v2579 = vadd.f32 %v2575, %v2578
  %vm2580 = vweird.f32 %v2257
  %vm2581 = vweird.f32 %v2575
  %vm2582 = vmor %vm2580, %vm2581
  %v2583 = vsel %vm2582, %v2575, %v2579
  %v2584 = vand.u32 2147483647, %v2257
  %vm2585 = vcmp.eq.f32.partialorder %v2584, 8.507059e+37
  %v2586 = vand.u32 %v2257, 2147483648
  %v2587 = vor.u32 1.1754944e-38, %v2586
  %v2588 = vsel %vm2585, %v2587, %v2583
  %v2589 = vrcp.pop %v2258
  %v2590 = vmul.f32 %v2258, %v2589
  %v2591 = vsub.f32 1.0, %v2590
  %v2592 = vmul.f32 %v2589, %v2591
  %v2593 = vadd.f32 %v2589, %v2592
  %vm2594 = vweird.f32 %v2258
  %vm2595 = vweird.f32 %v2589
  %vm2596 = vmor %vm2594, %vm2595
  %v2597 = vsel %vm2596, %v2589, %v2593
  %v2598 = vand.u32 2147483647, %v2258
  %vm2599 = vcmp.eq.f32.partialorder %v2598, 8.507059e+37
  %v2600 = vand.u32 %v2258, 2147483648
  %v2601 = vor.u32 1.1754944e-38, %v2600
  %v2602 = vsel %vm2599, %v2601, %v2597
  %v2603 = vrcp.pop %v2259
  %v2604 = vmul.f32 %v2259, %v2603
  %v2605 = vsub.f32 1.0, %v2604
  %v2606 = vmul.f32 %v2603, %v2605
  %v2607 = vadd.f32 %v2603, %v2606
  %vm2608 = vweird.f32 %v2259
  %vm2609 = vweird.f32 %v2603
  %vm2610 = vmor %vm2608, %vm2609
  %v2611 = vsel %vm2610, %v2603, %v2607
  %v2612 = vand.u32 2147483647, %v2259
  %vm2613 = vcmp.eq.f32.partialorder %v2612, 8.507059e+37
  %v2614 = vand.u32 %v2259, 2147483648
  %v2615 = vor.u32 1.1754944e-38, %v2614
  %v2616 = vsel %vm2613, %v2615, %v2611
  %v2617 = vrcp.pop %v2260
  %v2618 = vmul.f32 %v2260, %v2617
  %v2619 = vsub.f32 1.0, %v2618
  %v2620 = vmul.f32 %v2617, %v2619
  %v2621 = vadd.f32 %v2617, %v2620
  %vm2622 = vweird.f32 %v2260
  %vm2623 = vweird.f32 %v2617
  %vm2624 = vmor %vm2622, %vm2623
  %v2625 = vsel %vm2624, %v2617, %v2621
  %v2626 = vand.u32 2147483647, %v2260
  %vm2627 = vcmp.eq.f32.partialorder %v2626, 8.507059e+37
  %v2628 = vand.u32 %v2260, 2147483648
  %v2629 = vor.u32 1.1754944e-38, %v2628
  %v2630 = vsel %vm2627, %v2629, %v2625
  %v2631 = vrcp.pop %v2261
  %v2632 = vmul.f32 %v2261, %v2631
  %v2633 = vsub.f32 1.0, %v2632
  %v2634 = vmul.f32 %v2631, %v2633
  %v2635 = vadd.f32 %v2631, %v2634
  %vm2636 = vweird.f32 %v2261
  %vm2637 = vweird.f32 %v2631
  %vm2638 = vmor %vm2636, %vm2637
  %v2639 = vsel %vm2638, %v2631, %v2635
  %v2640 = vand.u32 2147483647, %v2261
  %vm2641 = vcmp.eq.f32.partialorder %v2640, 8.507059e+37
  %v2642 = vand.u32 %v2261, 2147483648
  %v2643 = vor.u32 1.1754944e-38, %v2642
  %v2644 = vsel %vm2641, %v2643, %v2639
  %v2645 = vrcp.pop %v2262
  %v2646 = vmul.f32 %v2262, %v2645
  %v2647 = vsub.f32 1.0, %v2646
  %v2648 = vmul.f32 %v2645, %v2647
  %v2649 = vadd.f32 %v2645, %v2648
  %vm2650 = vweird.f32 %v2262
  %vm2651 = vweird.f32 %v2645
  %vm2652 = vmor %vm2650, %vm2651
  %v2653 = vsel %vm2652, %v2645, %v2649
  %v2654 = vand.u32 2147483647, %v2262
  %vm2655 = vcmp.eq.f32.partialorder %v2654, 8.507059e+37
  %v2656 = vand.u32 %v2262, 2147483648
  %v2657 = vor.u32 1.1754944e-38, %v2656
  %v2658 = vsel %vm2655, %v2657, %v2653
  %v2659 = vrcp.pop %v2263
  %v2660 = vmul.f32 %v2263, %v2659
  %v2661 = vsub.f32 1.0, %v2660
  %v2662 = vmul.f32 %v2659, %v2661
  %v2663 = vadd.f32 %v2659, %v2662
  %vm2664 = vweird.f32 %v2263
  %vm2665 = vweird.f32 %v2659
  %vm2666 = vmor %vm2664, %vm2665
  %v2667 = vsel %vm2666, %v2659, %v2663
  %v2668 = vand.u32 2147483647, %v2263
  %vm2669 = vcmp.eq.f32.partialorder %v2668, 8.507059e+37
  %v2670 = vand.u32 %v2263, 2147483648
  %v2671 = vor.u32 1.1754944e-38, %v2670
  %v2672 = vsel %vm2669, %v2671, %v2667
  %v2673 = vrcp.pop %v2264
  %v2674 = vmul.f32 %v2264, %v2673
  %v2675 = vsub.f32 1.0, %v2674
  %v2676 = vmul.f32 %v2673, %v2675
  %v2677 = vadd.f32 %v2673, %v2676
  %vm2678 = vweird.f32 %v2264
  %vm2679 = vweird.f32 %v2673
  %vm2680 = vmor %vm2678, %vm2679
  %v2681 = vsel %vm2680, %v2673, %v2677
  %v2682 = vand.u32 2147483647, %v2264
  %vm2683 = vcmp.eq.f32.partialorder %v2682, 8.507059e+37
  %v2684 = vand.u32 %v2264, 2147483648
  %v2685 = vor.u32 1.1754944e-38, %v2684
  %v2686 = vsel %vm2683, %v2685, %v2681
  %v2687 = vrcp.pop %v2265
  %v2688 = vmul.f32 %v2265, %v2687
  %v2689 = vsub.f32 1.0, %v2688
  %v2690 = vmul.f32 %v2687, %v2689
  %v2691 = vadd.f32 %v2687, %v2690
  %vm2692 = vweird.f32 %v2265
  %vm2693 = vweird.f32 %v2687
  %vm2694 = vmor %vm2692, %vm2693
  %v2695 = vsel %vm2694, %v2687, %v2691
  %v2696 = vand.u32 2147483647, %v2265
  %vm2697 = vcmp.eq.f32.partialorder %v2696, 8.507059e+37
  %v2698 = vand.u32 %v2265, 2147483648
  %v2699 = vor.u32 1.1754944e-38, %v2698
  %v2700 = vsel %vm2697, %v2699, %v2695
  %v2701 = vrcp.pop %v2266
  %v2702 = vmul.f32 %v2266, %v2701
  %v2703 = vsub.f32 1.0, %v2702
  %v2704 = vmul.f32 %v2701, %v2703
  %v2705 = vadd.f32 %v2701, %v2704
  %vm2706 = vweird.f32 %v2266
  %vm2707 = vweird.f32 %v2701
  %vm2708 = vmor %vm2706, %vm2707
  %v2709 = vsel %vm2708, %v2701, %v2705
  %v2710 = vand.u32 2147483647, %v2266
  %vm2711 = vcmp.eq.f32.partialorder %v2710, 8.507059e+37
  %v2712 = vand.u32 %v2266, 2147483648
  %v2713 = vor.u32 1.1754944e-38, %v2712
  %v2714 = vsel %vm2711, %v2713, %v2709
  %v2715 = vmul.f32 %v1659, %v2280
  %v2716 = vmul.f32 %v1660, %v2294
  %v2717 = vmul.f32 %v1661, %v2308
  %v2718 = vmul.f32 %v1662, %v2322
  %v2719 = vmul.f32 %v1663, %v2336
  %v2720 = vmul.f32 %v1664, %v2350
  %v2721 = vmul.f32 %v1665, %v2364
  %v2722 = vmul.f32 %v1666, %v2378
  %v2723 = vmul.f32 %v1667, %v2392
  %v2724 = vmul.f32 %v1668, %v2406
  %v2725 = vmul.f32 %v1669, %v2420
  %v2726 = vmul.f32 %v1670, %v2434
  %v2727 = vmul.f32 %v1671, %v2448
  %v2728 = vmul.f32 %v1672, %v2462
  %v2729 = vmul.f32 %v1673, %v2476
  %v2730 = vmul.f32 %v1674, %v2490
  %v2731 = vmul.f32 %v1675, %v2504
  %v2732 = vmul.f32 %v1676, %v2518
  %v2733 = vmul.f32 %v1677, %v2532
  %v2734 = vmul.f32 %v1678, %v2546
  %v2735 = vmul.f32 %v1679, %v2560
  %v2736 = vmul.f32 %v1680, %v2574
  %v2737 = vmul.f32 %v1681, %v2588
  %v2738 = vmul.f32 %v1682, %v2602
  %v2739 = vmul.f32 %v1683, %v2616
  %v2740 = vmul.f32 %v1684, %v2630
  %v2741 = vmul.f32 %v1685, %v2644
  %v2742 = vmul.f32 %v1686, %v2658
  %v2743 = vmul.f32 %v1687, %v2672
  %v2744 = vmul.f32 %v1688, %v2686
  %v2745 = vmul.f32 %v1689, %v2700
  %v2746 = vmul.f32 %v1690, %v2714
  %v2747 = vld [vmem:[%s2] sm:$0xff]
  %v2748 = vld [vmem:[%s2 + $0x8] sm:$0xff]
  %v2749 = vld [vmem:[%s2 + $0x10] sm:$0xff]
  %v2750 = vld [vmem:[%s2 + $0x18] sm:$0xff]
  %v2751 = vld [vmem:[%s2 + $0x20] sm:$0xff]
  %v2752 = vld [vmem:[%s2 + $0x28] sm:$0xff]
  %v2753 = vld [vmem:[%s2 + $0x30] sm:$0xff]
  %v2754 = vld [vmem:[%s2 + $0x38] sm:$0xff]
  %v2755 = vperm.slane %v20, 1
  %v2757 = vsel %vm1523, %v2715, 0
  %v2760 = vsel %vm1523, %v2716, 0
  %v2763 = vsel %vm1523, %v2717, 0
  %v2766 = vsel %vm1523, %v2718, 0
  %v2769 = vsel %vm1523, %v2719, 0
  %v2772 = vsel %vm1523, %v2720, 0
  %v2775 = vsel %vm1523, %v2721, 0
  %v2778 = vsel %vm1523, %v2722, 0
  %v2781 = vsel %vm1523, %v2723, 0
  %v2784 = vsel %vm1523, %v2724, 0
  %v2787 = vsel %vm1523, %v2725, 0
  %v2790 = vsel %vm1523, %v2726, 0
  %v2793 = vsel %vm1523, %v2727, 0
  %v2796 = vsel %vm1523, %v2728, 0
  %v2799 = vsel %vm1523, %v2729, 0
  %v2802 = vsel %vm1523, %v2730, 0
  %v2805 = vsel %vm1523, %v2731, 0
  %v2808 = vsel %vm1523, %v2732, 0
  %v2811 = vsel %vm1523, %v2733, 0
  %v2814 = vsel %vm1523, %v2734, 0
  %v2817 = vsel %vm1523, %v2735, 0
  %v2820 = vsel %vm1523, %v2736, 0
  %v2823 = vsel %vm1523, %v2737, 0
  %v2826 = vsel %vm1523, %v2738, 0
  %v2829 = vsel %vm1523, %v2739, 0
  %v2832 = vsel %vm1523, %v2740, 0
  %v2835 = vsel %vm1523, %v2741, 0
  %v2838 = vsel %vm1523, %v2742, 0
  %v2841 = vsel %vm1523, %v2743, 0
  %v2844 = vsel %vm1523, %v2744, 0
  %v2847 = vsel %vm1523, %v2745, 0
  %v2850 = vsel %vm1523, %v2746, 0
  %2852 = vmatpush.msra.mxu0 0.0
  %2853 = vmatpush.msra.mxu0 0.0
  %2854 = vmatpush.msra.mxu0 0.0
  %2855 = vmatpush.msra.mxu0 0.0
  %2856 = vmatpush.msra.mxu0 0.0
  %2857 = vmatpush.msra.mxu0 0.0
  %2858 = vmatpush.msra.mxu0 0.0
  %2859 = vmatpush.msra.mxu0 0.0
  %2860 = vmatpush.msra.mxu0 %v2754
  %2861 = vmatpush.msra.mxu0 %v2753
  %2862 = vmatpush.msra.mxu0 %v2752
  %2863 = vmatpush.msra.mxu0 %v2751
  %2864 = vmatpush.msra.mxu0 %v2750
  %2865 = vmatpush.msra.mxu0 %v2749
  %2866 = vmatpush.msra.mxu0 %v2748
  %2867 = vmatpush.msra.mxu0 %v2747
  %2868 = vmatmul.f32.gmra.mxu0 %v2757
  %v2869 = vpop.f32.mrf.mxu0
  %v2870 = vadd.f32 %v2755, %v2869
  %2871 = vmatmul.f32.gmra.mxu0 %v2760
  %v2872 = vpop.f32.mrf.mxu0
  %v2873 = vadd.f32 %v2755, %v2872
  %2874 = vmatmul.f32.gmra.mxu0 %v2763
  %v2875 = vpop.f32.mrf.mxu0
  %v2876 = vadd.f32 %v2755, %v2875
  %2877 = vmatmul.f32.gmra.mxu0 %v2766
  %v2878 = vpop.f32.mrf.mxu0
  %v2879 = vadd.f32 %v2755, %v2878
  %2880 = vmatmul.f32.gmra.mxu0 %v2769
  %v2881 = vpop.f32.mrf.mxu0
  %v2882 = vadd.f32 %v2755, %v2881
  %2883 = vmatmul.f32.gmra.mxu0 %v2772
  %v2884 = vpop.f32.mrf.mxu0
  %v2885 = vadd.f32 %v2755, %v2884
  %2886 = vmatmul.f32.gmra.mxu0 %v2775
  %v2887 = vpop.f32.mrf.mxu0
  %v2888 = vadd.f32 %v2755, %v2887
  %2889 = vmatmul.f32.gmra.mxu0 %v2778
  %v2890 = vpop.f32.mrf.mxu0
  %v2891 = vadd.f32 %v2755, %v2890
  %2892 = vmatmul.f32.gmra.mxu0 %v2781
  %v2893 = vpop.f32.mrf.mxu0
  %v2894 = vadd.f32 %v2755, %v2893
  %2895 = vmatmul.f32.gmra.mxu0 %v2784
  %v2896 = vpop.f32.mrf.mxu0
  %v2897 = vadd.f32 %v2755, %v2896
  %2898 = vmatmul.f32.gmra.mxu0 %v2787
  %v2899 = vpop.f32.mrf.mxu0
  %v2900 = vadd.f32 %v2755, %v2899
  %2901 = vmatmul.f32.gmra.mxu0 %v2790
  %v2902 = vpop.f32.mrf.mxu0
  %v2903 = vadd.f32 %v2755, %v2902
  %2904 = vmatmul.f32.gmra.mxu0 %v2793
  %v2905 = vpop.f32.mrf.mxu0
  %v2906 = vadd.f32 %v2755, %v2905
  %2907 = vmatmul.f32.gmra.mxu0 %v2796
  %v2908 = vpop.f32.mrf.mxu0
  %v2909 = vadd.f32 %v2755, %v2908
  %2910 = vmatmul.f32.gmra.mxu0 %v2799
  %v2911 = vpop.f32.mrf.mxu0
  %v2912 = vadd.f32 %v2755, %v2911
  %2913 = vmatmul.f32.gmra.mxu0 %v2802
  %v2914 = vpop.f32.mrf.mxu0
  %v2915 = vadd.f32 %v2755, %v2914
  %2916 = vmatmul.f32.gmra.mxu0 %v2805
  %v2917 = vpop.f32.mrf.mxu0
  %v2918 = vadd.f32 %v2755, %v2917
  %2919 = vmatmul.f32.gmra.mxu0 %v2808
  %v2920 = vpop.f32.mrf.mxu0
  %v2921 = vadd.f32 %v2755, %v2920
  %2922 = vmatmul.f32.gmra.mxu0 %v2811
  %v2923 = vpop.f32.mrf.mxu0
  %v2924 = vadd.f32 %v2755, %v2923
  %2925 = vmatmul.f32.gmra.mxu0 %v2814
  %v2926 = vpop.f32.mrf.mxu0
  %v2927 = vadd.f32 %v2755, %v2926
  %2928 = vmatmul.f32.gmra.mxu0 %v2817
  %v2929 = vpop.f32.mrf.mxu0
  %v2930 = vadd.f32 %v2755, %v2929
  %2931 = vmatmul.f32.gmra.mxu0 %v2820
  %v2932 = vpop.f32.mrf.mxu0
  %v2933 = vadd.f32 %v2755, %v2932
  %2934 = vmatmul.f32.gmra.mxu0 %v2823
  %v2935 = vpop.f32.mrf.mxu0
  %v2936 = vadd.f32 %v2755, %v2935
  %2937 = vmatmul.f32.gmra.mxu0 %v2826
  %v2938 = vpop.f32.mrf.mxu0
  %v2939 = vadd.f32 %v2755, %v2938
  %2940 = vmatmul.f32.gmra.mxu0 %v2829
  %v2941 = vpop.f32.mrf.mxu0
  %v2942 = vadd.f32 %v2755, %v2941
  %2943 = vmatmul.f32.gmra.mxu0 %v2832
  %v2944 = vpop.f32.mrf.mxu0
  %v2945 = vadd.f32 %v2755, %v2944
  %2946 = vmatmul.f32.gmra.mxu0 %v2835
  %v2947 = vpop.f32.mrf.mxu0
  %v2948 = vadd.f32 %v2755, %v2947
  %2949 = vmatmul.f32.gmra.mxu0 %v2838
  %v2950 = vpop.f32.mrf.mxu0
  %v2951 = vadd.f32 %v2755, %v2950
  %2952 = vmatmul.f32.gmra.mxu0 %v2841
  %v2953 = vpop.f32.mrf.mxu0
  %v2954 = vadd.f32 %v2755, %v2953
  %2955 = vmatmul.f32.gmra.mxu0 %v2844
  %v2956 = vpop.f32.mrf.mxu0
  %v2957 = vadd.f32 %v2755, %v2956
  %2958 = vmatmul.f32.gmra.mxu0 %v2847
  %v2959 = vpop.f32.mrf.mxu0
  %v2960 = vadd.f32 %v2755, %v2959
  %2961 = vmatmul.f32.gmra.mxu0 %v2850
  %v2962 = vpop.f32.mrf.mxu0
  %v2963 = vadd.f32 %v2755, %v2962
  %2964 = vdwg.mxu0
  %v2965 = vmax.f32 %v2870, 0.0
  %v2966 = vmax.f32 %v2873, 0.0
  %v2967 = vmax.f32 %v2876, 0.0
  %v2968 = vmax.f32 %v2879, 0.0
  %v2969 = vmax.f32 %v2882, 0.0
  %v2970 = vmax.f32 %v2885, 0.0
  %v2971 = vmax.f32 %v2888, 0.0
  %v2972 = vmax.f32 %v2891, 0.0
  %v2973 = vmax.f32 %v2894, 0.0
  %v2974 = vmax.f32 %v2897, 0.0
  %v2975 = vmax.f32 %v2900, 0.0
  %v2976 = vmax.f32 %v2903, 0.0
  %v2977 = vmax.f32 %v2906, 0.0
  %v2978 = vmax.f32 %v2909, 0.0
  %v2979 = vmax.f32 %v2912, 0.0
  %v2980 = vmax.f32 %v2915, 0.0
  %v2981 = vmax.f32 %v2918, 0.0
  %v2982 = vmax.f32 %v2921, 0.0
  %v2983 = vmax.f32 %v2924, 0.0
  %v2984 = vmax.f32 %v2927, 0.0
  %v2985 = vmax.f32 %v2930, 0.0
  %v2986 = vmax.f32 %v2933, 0.0
  %v2987 = vmax.f32 %v2936, 0.0
  %v2988 = vmax.f32 %v2939, 0.0
  %v2989 = vmax.f32 %v2942, 0.0
  %v2990 = vmax.f32 %v2945, 0.0
  %v2991 = vmax.f32 %v2948, 0.0
  %v2992 = vmax.f32 %v2951, 0.0
  %v2993 = vmax.f32 %v2954, 0.0
  %v2994 = vmax.f32 %v2957, 0.0
  %v2995 = vmax.f32 %v2960, 0.0
  %v2996 = vmax.f32 %v2963, 0.0
  %v2997 = vsel %vm1523, %v2965, 0.0
  %2998 = vadd.xlane.f32.xlu0 %v2997
  %v2999 = vpop.xlane.xlu0 %2998
  %v3000 = vsel %vm1523, %v2966, 0.0
  %3001 = vadd.xlane.f32.xlu0 %v3000
  %v3002 = vpop.xlane.xlu0 %3001
  %v3003 = vsel %vm1523, %v2967, 0.0
  %3004 = vadd.xlane.f32.xlu0 %v3003
  %v3005 = vpop.xlane.xlu0 %3004
  %v3006 = vsel %vm1523, %v2968, 0.0
  %3007 = vadd.xlane.f32.xlu0 %v3006
  %v3008 = vpop.xlane.xlu0 %3007
  %v3009 = vsel %vm1523, %v2969, 0.0
  %3010 = vadd.xlane.f32.xlu0 %v3009
  %v3011 = vpop.xlane.xlu0 %3010
  %v3012 = vsel %vm1523, %v2970, 0.0
  %3013 = vadd.xlane.f32.xlu0 %v3012
  %v3014 = vpop.xlane.xlu0 %3013
  %v3015 = vsel %vm1523, %v2971, 0.0
  %3016 = vadd.xlane.f32.xlu0 %v3015
  %v3017 = vpop.xlane.xlu0 %3016
  %v3018 = vsel %vm1523, %v2972, 0.0
  %3019 = vadd.xlane.f32.xlu0 %v3018
  %v3020 = vpop.xlane.xlu0 %3019
  %v3021 = vsel %vm1523, %v2973, 0.0
  %3022 = vadd.xlane.f32.xlu0 %v3021
  %v3023 = vpop.xlane.xlu0 %3022
  %v3024 = vsel %vm1523, %v2974, 0.0
  %3025 = vadd.xlane.f32.xlu0 %v3024
  %v3026 = vpop.xlane.xlu0 %3025
  %v3027 = vsel %vm1523, %v2975, 0.0
  %3028 = vadd.xlane.f32.xlu0 %v3027
  %v3029 = vpop.xlane.xlu0 %3028
  %v3030 = vsel %vm1523, %v2976, 0.0
  %3031 = vadd.xlane.f32.xlu0 %v3030
  %v3032 = vpop.xlane.xlu0 %3031
  %v3033 = vsel %vm1523, %v2977, 0.0
  %3034 = vadd.xlane.f32.xlu0 %v3033
  %v3035 = vpop.xlane.xlu0 %3034
  %v3036 = vsel %vm1523, %v2978, 0.0
  %3037 = vadd.xlane.f32.xlu0 %v3036
  %v3038 = vpop.xlane.xlu0 %3037
  %v3039 = vsel %vm1523, %v2979, 0.0
  %3040 = vadd.xlane.f32.xlu0 %v3039
  %v3041 = vpop.xlane.xlu0 %3040
  %v3042 = vsel %vm1523, %v2980, 0.0
  %3043 = vadd.xlane.f32.xlu0 %v3042
  %v3044 = vpop.xlane.xlu0 %3043
  %v3045 = vsel %vm1523, %v2981, 0.0
  %3046 = vadd.xlane.f32.xlu0 %v3045
  %v3047 = vpop.xlane.xlu0 %3046
  %v3048 = vsel %vm1523, %v2982, 0.0
  %3049 = vadd.xlane.f32.xlu0 %v3048
  %v3050 = vpop.xlane.xlu0 %3049
  %v3051 = vsel %vm1523, %v2983, 0.0
  %3052 = vadd.xlane.f32.xlu0 %v3051
  %v3053 = vpop.xlane.xlu0 %3052
  %v3054 = vsel %vm1523, %v2984, 0.0
  %3055 = vadd.xlane.f32.xlu0 %v3054
  %v3056 = vpop.xlane.xlu0 %3055
  %v3057 = vsel %vm1523, %v2985, 0.0
  %3058 = vadd.xlane.f32.xlu0 %v3057
  %v3059 = vpop.xlane.xlu0 %3058
  %v3060 = vsel %vm1523, %v2986, 0.0
  %3061 = vadd.xlane.f32.xlu0 %v3060
  %v3062 = vpop.xlane.xlu0 %3061
  %v3063 = vsel %vm1523, %v2987, 0.0
  %3064 = vadd.xlane.f32.xlu0 %v3063
  %v3065 = vpop.xlane.xlu0 %3064
  %v3066 = vsel %vm1523, %v2988, 0.0
  %3067 = vadd.xlane.f32.xlu0 %v3066
  %v3068 = vpop.xlane.xlu0 %3067
  %v3069 = vsel %vm1523, %v2989, 0.0
  %3070 = vadd.xlane.f32.xlu0 %v3069
  %v3071 = vpop.xlane.xlu0 %3070
  %v3072 = vsel %vm1523, %v2990, 0.0
  %3073 = vadd.xlane.f32.xlu0 %v3072
  %v3074 = vpop.xlane.xlu0 %3073
  %v3075 = vsel %vm1523, %v2991, 0.0
  %3076 = vadd.xlane.f32.xlu0 %v3075
  %v3077 = vpop.xlane.xlu0 %3076
  %v3078 = vsel %vm1523, %v2992, 0.0
  %3079 = vadd.xlane.f32.xlu0 %v3078
  %v3080 = vpop.xlane.xlu0 %3079
  %v3081 = vsel %vm1523, %v2993, 0.0
  %3082 = vadd.xlane.f32.xlu0 %v3081
  %v3083 = vpop.xlane.xlu0 %3082
  %v3084 = vsel %vm1523, %v2994, 0.0
  %3085 = vadd.xlane.f32.xlu0 %v3084
  %v3086 = vpop.xlane.xlu0 %3085
  %v3087 = vsel %vm1523, %v2995, 0.0
  %3088 = vadd.xlane.f32.xlu0 %v3087
  %v3089 = vpop.xlane.xlu0 %3088
  %v3090 = vsel %vm1523, %v2996, 0.0
  %3091 = vadd.xlane.f32.xlu0 %v3090
  %v3092 = vpop.xlane.xlu0 %3091
  %v3093 = vmul.f32 %v2999, %v1626
  %v3094 = vmul.f32 %v3002, %v1626
  %v3095 = vmul.f32 %v3005, %v1626
  %v3096 = vmul.f32 %v3008, %v1626
  %v3097 = vmul.f32 %v3011, %v1626
  %v3098 = vmul.f32 %v3014, %v1626
  %v3099 = vmul.f32 %v3017, %v1626
  %v3100 = vmul.f32 %v3020, %v1626
  %v3101 = vmul.f32 %v3023, %v1626
  %v3102 = vmul.f32 %v3026, %v1626
  %v3103 = vmul.f32 %v3029, %v1626
  %v3104 = vmul.f32 %v3032, %v1626
  %v3105 = vmul.f32 %v3035, %v1626
  %v3106 = vmul.f32 %v3038, %v1626
  %v3107 = vmul.f32 %v3041, %v1626
  %v3108 = vmul.f32 %v3044, %v1626
  %v3109 = vmul.f32 %v3047, %v1626
  %v3110 = vmul.f32 %v3050, %v1626
  %v3111 = vmul.f32 %v3053, %v1626
  %v3112 = vmul.f32 %v3056, %v1626
  %v3113 = vmul.f32 %v3059, %v1626
  %v3114 = vmul.f32 %v3062, %v1626
  %v3115 = vmul.f32 %v3065, %v1626
  %v3116 = vmul.f32 %v3068, %v1626
  %v3117 = vmul.f32 %v3071, %v1626
  %v3118 = vmul.f32 %v3074, %v1626
  %v3119 = vmul.f32 %v3077, %v1626
  %v3120 = vmul.f32 %v3080, %v1626
  %v3121 = vmul.f32 %v3083, %v1626
  %v3122 = vmul.f32 %v3086, %v1626
  %v3123 = vmul.f32 %v3089, %v1626
  %v3124 = vmul.f32 %v3092, %v1626
  %v3125 = vsub.f32 %v2965, %v3093
  %v3126 = vsub.f32 %v2966, %v3094
  %v3127 = vsub.f32 %v2967, %v3095
  %v3128 = vsub.f32 %v2968, %v3096
  %v3129 = vsub.f32 %v2969, %v3097
  %v3130 = vsub.f32 %v2970, %v3098
  %v3131 = vsub.f32 %v2971, %v3099
  %v3132 = vsub.f32 %v2972, %v3100
  %v3133 = vsub.f32 %v2973, %v3101
  %v3134 = vsub.f32 %v2974, %v3102
  %v3135 = vsub.f32 %v2975, %v3103
  %v3136 = vsub.f32 %v2976, %v3104
  %v3137 = vsub.f32 %v2977, %v3105
  %v3138 = vsub.f32 %v2978, %v3106
  %v3139 = vsub.f32 %v2979, %v3107
  %v3140 = vsub.f32 %v2980, %v3108
  %v3141 = vsub.f32 %v2981, %v3109
  %v3142 = vsub.f32 %v2982, %v3110
  %v3143 = vsub.f32 %v2983, %v3111
  %v3144 = vsub.f32 %v2984, %v3112
  %v3145 = vsub.f32 %v2985, %v3113
  %v3146 = vsub.f32 %v2986, %v3114
  %v3147 = vsub.f32 %v2987, %v3115
  %v3148 = vsub.f32 %v2988, %v3116
  %v3149 = vsub.f32 %v2989, %v3117
  %v3150 = vsub.f32 %v2990, %v3118
  %v3151 = vsub.f32 %v2991, %v3119
  %v3152 = vsub.f32 %v2992, %v3120
  %v3153 = vsub.f32 %v2993, %v3121
  %v3154 = vsub.f32 %v2994, %v3122
  %v3155 = vsub.f32 %v2995, %v3123
  %v3156 = vsub.f32 %v2996, %v3124
  %v3157 = vmul.f32 %v3125, %v3125
  %v3158 = vmul.f32 %v3126, %v3126
  %v3159 = vmul.f32 %v3127, %v3127
  %v3160 = vmul.f32 %v3128, %v3128
  %v3161 = vmul.f32 %v3129, %v3129
  %v3162 = vmul.f32 %v3130, %v3130
  %v3163 = vmul.f32 %v3131, %v3131
  %v3164 = vmul.f32 %v3132, %v3132
  %v3165 = vmul.f32 %v3133, %v3133
  %v3166 = vmul.f32 %v3134, %v3134
  %v3167 = vmul.f32 %v3135, %v3135
  %v3168 = vmul.f32 %v3136, %v3136
  %v3169 = vmul.f32 %v3137, %v3137
  %v3170 = vmul.f32 %v3138, %v3138
  %v3171 = vmul.f32 %v3139, %v3139
  %v3172 = vmul.f32 %v3140, %v3140
  %v3173 = vmul.f32 %v3141, %v3141
  %v3174 = vmul.f32 %v3142, %v3142
  %v3175 = vmul.f32 %v3143, %v3143
  %v3176 = vmul.f32 %v3144, %v3144
  %v3177 = vmul.f32 %v3145, %v3145
  %v3178 = vmul.f32 %v3146, %v3146
  %v3179 = vmul.f32 %v3147, %v3147
  %v3180 = vmul.f32 %v3148, %v3148
  %v3181 = vmul.f32 %v3149, %v3149
  %v3182 = vmul.f32 %v3150, %v3150
  %v3183 = vmul.f32 %v3151, %v3151
  %v3184 = vmul.f32 %v3152, %v3152
  %v3185 = vmul.f32 %v3153, %v3153
  %v3186 = vmul.f32 %v3154, %v3154
  %v3187 = vmul.f32 %v3155, %v3155
  %v3188 = vmul.f32 %v3156, %v3156
  %v3189 = vsel %vm1523, %v3157, 0.0
  %3190 = vadd.xlane.f32.xlu0 %v3189
  %v3191 = vpop.xlane.xlu0 %3190
  %v3192 = vsel %vm1523, %v3158, 0.0
  %3193 = vadd.xlane.f32.xlu0 %v3192
  %v3194 = vpop.xlane.xlu0 %3193
  %v3195 = vsel %vm1523, %v3159, 0.0
  %3196 = vadd.xlane.f32.xlu0 %v3195
  %v3197 = vpop.xlane.xlu0 %3196
  %v3198 = vsel %vm1523, %v3160, 0.0
  %3199 = vadd.xlane.f32.xlu0 %v3198
  %v3200 = vpop.xlane.xlu0 %3199
  %v3201 = vsel %vm1523, %v3161, 0.0
  %3202 = vadd.xlane.f32.xlu0 %v3201
  %v3203 = vpop.xlane.xlu0 %3202
  %v3204 = vsel %vm1523, %v3162, 0.0
  %3205 = vadd.xlane.f32.xlu0 %v3204
  %v3206 = vpop.xlane.xlu0 %3205
  %v3207 = vsel %vm1523, %v3163, 0.0
  %3208 = vadd.xlane.f32.xlu0 %v3207
  %v3209 = vpop.xlane.xlu0 %3208
  %v3210 = vsel %vm1523, %v3164, 0.0
  %3211 = vadd.xlane.f32.xlu0 %v3210
  %v3212 = vpop.xlane.xlu0 %3211
  %v3213 = vsel %vm1523, %v3165, 0.0
  %3214 = vadd.xlane.f32.xlu0 %v3213
  %v3215 = vpop.xlane.xlu0 %3214
  %v3216 = vsel %vm1523, %v3166, 0.0
  %3217 = vadd.xlane.f32.xlu0 %v3216
  %v3218 = vpop.xlane.xlu0 %3217
  %v3219 = vsel %vm1523, %v3167, 0.0
  %3220 = vadd.xlane.f32.xlu0 %v3219
  %v3221 = vpop.xlane.xlu0 %3220
  %v3222 = vsel %vm1523, %v3168, 0.0
  %3223 = vadd.xlane.f32.xlu0 %v3222
  %v3224 = vpop.xlane.xlu0 %3223
  %v3225 = vsel %vm1523, %v3169, 0.0
  %3226 = vadd.xlane.f32.xlu0 %v3225
  %v3227 = vpop.xlane.xlu0 %3226
  %v3228 = vsel %vm1523, %v3170, 0.0
  %3229 = vadd.xlane.f32.xlu0 %v3228
  %v3230 = vpop.xlane.xlu0 %3229
  %v3231 = vsel %vm1523, %v3171, 0.0
  %3232 = vadd.xlane.f32.xlu0 %v3231
  %v3233 = vpop.xlane.xlu0 %3232
  %v3234 = vsel %vm1523, %v3172, 0.0
  %3235 = vadd.xlane.f32.xlu0 %v3234
  %v3236 = vpop.xlane.xlu0 %3235
  %v3237 = vsel %vm1523, %v3173, 0.0
  %3238 = vadd.xlane.f32.xlu0 %v3237
  %v3239 = vpop.xlane.xlu0 %3238
  %v3240 = vsel %vm1523, %v3174, 0.0
  %3241 = vadd.xlane.f32.xlu0 %v3240
  %v3242 = vpop.xlane.xlu0 %3241
  %v3243 = vsel %vm1523, %v3175, 0.0
  %3244 = vadd.xlane.f32.xlu0 %v3243
  %v3245 = vpop.xlane.xlu0 %3244
  %v3246 = vsel %vm1523, %v3176, 0.0
  %3247 = vadd.xlane.f32.xlu0 %v3246
  %v3248 = vpop.xlane.xlu0 %3247
  %v3249 = vsel %vm1523, %v3177, 0.0
  %3250 = vadd.xlane.f32.xlu0 %v3249
  %v3251 = vpop.xlane.xlu0 %3250
  %v3252 = vsel %vm1523, %v3178, 0.0
  %3253 = vadd.xlane.f32.xlu0 %v3252
  %v3254 = vpop.xlane.xlu0 %3253
  %v3255 = vsel %vm1523, %v3179, 0.0
  %3256 = vadd.xlane.f32.xlu0 %v3255
  %v3257 = vpop.xlane.xlu0 %3256
  %v3258 = vsel %vm1523, %v3180, 0.0
  %3259 = vadd.xlane.f32.xlu0 %v3258
  %v3260 = vpop.xlane.xlu0 %3259
  %v3261 = vsel %vm1523, %v3181, 0.0
  %3262 = vadd.xlane.f32.xlu0 %v3261
  %v3263 = vpop.xlane.xlu0 %3262
  %v3264 = vsel %vm1523, %v3182, 0.0
  %3265 = vadd.xlane.f32.xlu0 %v3264
  %v3266 = vpop.xlane.xlu0 %3265
  %v3267 = vsel %vm1523, %v3183, 0.0
  %3268 = vadd.xlane.f32.xlu0 %v3267
  %v3269 = vpop.xlane.xlu0 %3268
  %v3270 = vsel %vm1523, %v3184, 0.0
  %3271 = vadd.xlane.f32.xlu0 %v3270
  %v3272 = vpop.xlane.xlu0 %3271
  %v3273 = vsel %vm1523, %v3185, 0.0
  %3274 = vadd.xlane.f32.xlu0 %v3273
  %v3275 = vpop.xlane.xlu0 %3274
  %v3276 = vsel %vm1523, %v3186, 0.0
  %3277 = vadd.xlane.f32.xlu0 %v3276
  %v3278 = vpop.xlane.xlu0 %3277
  %v3279 = vsel %vm1523, %v3187, 0.0
  %3280 = vadd.xlane.f32.xlu0 %v3279
  %v3281 = vpop.xlane.xlu0 %3280
  %v3282 = vsel %vm1523, %v3188, 0.0
  %3283 = vadd.xlane.f32.xlu0 %v3282
  %v3284 = vpop.xlane.xlu0 %3283
  %v3285 = vmul.f32 %v3191, 0.015873017
  %v3286 = vmul.f32 %v3194, 0.015873017
  %v3287 = vmul.f32 %v3197, 0.015873017
  %v3288 = vmul.f32 %v3200, 0.015873017
  %v3289 = vmul.f32 %v3203, 0.015873017
  %v3290 = vmul.f32 %v3206, 0.015873017
  %v3291 = vmul.f32 %v3209, 0.015873017
  %v3292 = vmul.f32 %v3212, 0.015873017
  %v3293 = vmul.f32 %v3215, 0.015873017
  %v3294 = vmul.f32 %v3218, 0.015873017
  %v3295 = vmul.f32 %v3221, 0.015873017
  %v3296 = vmul.f32 %v3224, 0.015873017
  %v3297 = vmul.f32 %v3227, 0.015873017
  %v3298 = vmul.f32 %v3230, 0.015873017
  %v3299 = vmul.f32 %v3233, 0.015873017
  %v3300 = vmul.f32 %v3236, 0.015873017
  %v3301 = vmul.f32 %v3239, 0.015873017
  %v3302 = vmul.f32 %v3242, 0.015873017
  %v3303 = vmul.f32 %v3245, 0.015873017
  %v3304 = vmul.f32 %v3248, 0.015873017
  %v3305 = vmul.f32 %v3251, 0.015873017
  %v3306 = vmul.f32 %v3254, 0.015873017
  %v3307 = vmul.f32 %v3257, 0.015873017
  %v3308 = vmul.f32 %v3260, 0.015873017
  %v3309 = vmul.f32 %v3263, 0.015873017
  %v3310 = vmul.f32 %v3266, 0.015873017
  %v3311 = vmul.f32 %v3269, 0.015873017
  %v3312 = vmul.f32 %v3272, 0.015873017
  %v3313 = vmul.f32 %v3275, 0.015873017
  %v3314 = vmul.f32 %v3278, 0.015873017
  %v3315 = vmul.f32 %v3281, 0.015873017
  %v3316 = vmul.f32 %v3284, 0.015873017
  %v3317 = vrsqrt.pop %v3285
  %v3318 = vmul.f32 %v3317, %v3285
  %v3319 = vmul.f32 %v3318, %v3317
  %v3320 = vmul.f32 0.5, %v3319
  %v3321 = vsub.f32 1.5, %v3320
  %v3322 = vmul.f32 %v3317, %v3321
  %v3323 = vmul.f32 %v3285, %v3322
  %vm3324 = vcmp.eq.f32.partialorder %v3285, inf
  %v3325 = vsel %vm3324, %v3285, %v3323
  %vm3326 = vcmp.eq.f32.partialorder %v3285, 0.0
  %v3327 = vand.u32 %v3285, 2147483648
  %v3328 = vsel %vm3326, %v3327, %v3325
  %v3329 = vrsqrt.pop %v3286
  %v3330 = vmul.f32 %v3329, %v3286
  %v3331 = vmul.f32 %v3330, %v3329
  %v3332 = vmul.f32 0.5, %v3331
  %v3333 = vsub.f32 1.5, %v3332
  %v3334 = vmul.f32 %v3329, %v3333
  %v3335 = vmul.f32 %v3286, %v3334
  %vm3336 = vcmp.eq.f32.partialorder %v3286, inf
  %v3337 = vsel %vm3336, %v3286, %v3335
  %vm3338 = vcmp.eq.f32.partialorder %v3286, 0.0
  %v3339 = vand.u32 %v3286, 2147483648
  %v3340 = vsel %vm3338, %v3339, %v3337
  %v3341 = vrsqrt.pop %v3287
  %v3342 = vmul.f32 %v3341, %v3287
  %v3343 = vmul.f32 %v3342, %v3341
  %v3344 = vmul.f32 0.5, %v3343
  %v3345 = vsub.f32 1.5, %v3344
  %v3346 = vmul.f32 %v3341, %v3345
  %v3347 = vmul.f32 %v3287, %v3346
  %vm3348 = vcmp.eq.f32.partialorder %v3287, inf
  %v3349 = vsel %vm3348, %v3287, %v3347
  %vm3350 = vcmp.eq.f32.partialorder %v3287, 0.0
  %v3351 = vand.u32 %v3287, 2147483648
  %v3352 = vsel %vm3350, %v3351, %v3349
  %v3353 = vrsqrt.pop %v3288
  %v3354 = vmul.f32 %v3353, %v3288
  %v3355 = vmul.f32 %v3354, %v3353
  %v3356 = vmul.f32 0.5, %v3355
  %v3357 = vsub.f32 1.5, %v3356
  %v3358 = vmul.f32 %v3353, %v3357
  %v3359 = vmul.f32 %v3288, %v3358
  %vm3360 = vcmp.eq.f32.partialorder %v3288, inf
  %v3361 = vsel %vm3360, %v3288, %v3359
  %vm3362 = vcmp.eq.f32.partialorder %v3288, 0.0
  %v3363 = vand.u32 %v3288, 2147483648
  %v3364 = vsel %vm3362, %v3363, %v3361
  %v3365 = vrsqrt.pop %v3289
  %v3366 = vmul.f32 %v3365, %v3289
  %v3367 = vmul.f32 %v3366, %v3365
  %v3368 = vmul.f32 0.5, %v3367
  %v3369 = vsub.f32 1.5, %v3368
  %v3370 = vmul.f32 %v3365, %v3369
  %v3371 = vmul.f32 %v3289, %v3370
  %vm3372 = vcmp.eq.f32.partialorder %v3289, inf
  %v3373 = vsel %vm3372, %v3289, %v3371
  %vm3374 = vcmp.eq.f32.partialorder %v3289, 0.0
  %v3375 = vand.u32 %v3289, 2147483648
  %v3376 = vsel %vm3374, %v3375, %v3373
  %v3377 = vrsqrt.pop %v3290
  %v3378 = vmul.f32 %v3377, %v3290
  %v3379 = vmul.f32 %v3378, %v3377
  %v3380 = vmul.f32 0.5, %v3379
  %v3381 = vsub.f32 1.5, %v3380
  %v3382 = vmul.f32 %v3377, %v3381
  %v3383 = vmul.f32 %v3290, %v3382
  %vm3384 = vcmp.eq.f32.partialorder %v3290, inf
  %v3385 = vsel %vm3384, %v3290, %v3383
  %vm3386 = vcmp.eq.f32.partialorder %v3290, 0.0
  %v3387 = vand.u32 %v3290, 2147483648
  %v3388 = vsel %vm3386, %v3387, %v3385
  %v3389 = vrsqrt.pop %v3291
  %v3390 = vmul.f32 %v3389, %v3291
  %v3391 = vmul.f32 %v3390, %v3389
  %v3392 = vmul.f32 0.5, %v3391
  %v3393 = vsub.f32 1.5, %v3392
  %v3394 = vmul.f32 %v3389, %v3393
  %v3395 = vmul.f32 %v3291, %v3394
  %vm3396 = vcmp.eq.f32.partialorder %v3291, inf
  %v3397 = vsel %vm3396, %v3291, %v3395
  %vm3398 = vcmp.eq.f32.partialorder %v3291, 0.0
  %v3399 = vand.u32 %v3291, 2147483648
  %v3400 = vsel %vm3398, %v3399, %v3397
  %v3401 = vrsqrt.pop %v3292
  %v3402 = vmul.f32 %v3401, %v3292
  %v3403 = vmul.f32 %v3402, %v3401
  %v3404 = vmul.f32 0.5, %v3403
  %v3405 = vsub.f32 1.5, %v3404
  %v3406 = vmul.f32 %v3401, %v3405
  %v3407 = vmul.f32 %v3292, %v3406
  %vm3408 = vcmp.eq.f32.partialorder %v3292, inf
  %v3409 = vsel %vm3408, %v3292, %v3407
  %vm3410 = vcmp.eq.f32.partialorder %v3292, 0.0
  %v3411 = vand.u32 %v3292, 2147483648
  %v3412 = vsel %vm3410, %v3411, %v3409
  %v3413 = vrsqrt.pop %v3293
  %v3414 = vmul.f32 %v3413, %v3293
  %v3415 = vmul.f32 %v3414, %v3413
  %v3416 = vmul.f32 0.5, %v3415
  %v3417 = vsub.f32 1.5, %v3416
  %v3418 = vmul.f32 %v3413, %v3417
  %v3419 = vmul.f32 %v3293, %v3418
  %vm3420 = vcmp.eq.f32.partialorder %v3293, inf
  %v3421 = vsel %vm3420, %v3293, %v3419
  %vm3422 = vcmp.eq.f32.partialorder %v3293, 0.0
  %v3423 = vand.u32 %v3293, 2147483648
  %v3424 = vsel %vm3422, %v3423, %v3421
  %v3425 = vrsqrt.pop %v3294
  %v3426 = vmul.f32 %v3425, %v3294
  %v3427 = vmul.f32 %v3426, %v3425
  %v3428 = vmul.f32 0.5, %v3427
  %v3429 = vsub.f32 1.5, %v3428
  %v3430 = vmul.f32 %v3425, %v3429
  %v3431 = vmul.f32 %v3294, %v3430
  %vm3432 = vcmp.eq.f32.partialorder %v3294, inf
  %v3433 = vsel %vm3432, %v3294, %v3431
  %vm3434 = vcmp.eq.f32.partialorder %v3294, 0.0
  %v3435 = vand.u32 %v3294, 2147483648
  %v3436 = vsel %vm3434, %v3435, %v3433
  %v3437 = vrsqrt.pop %v3295
  %v3438 = vmul.f32 %v3437, %v3295
  %v3439 = vmul.f32 %v3438, %v3437
  %v3440 = vmul.f32 0.5, %v3439
  %v3441 = vsub.f32 1.5, %v3440
  %v3442 = vmul.f32 %v3437, %v3441
  %v3443 = vmul.f32 %v3295, %v3442
  %vm3444 = vcmp.eq.f32.partialorder %v3295, inf
  %v3445 = vsel %vm3444, %v3295, %v3443
  %vm3446 = vcmp.eq.f32.partialorder %v3295, 0.0
  %v3447 = vand.u32 %v3295, 2147483648
  %v3448 = vsel %vm3446, %v3447, %v3445
  %v3449 = vrsqrt.pop %v3296
  %v3450 = vmul.f32 %v3449, %v3296
  %v3451 = vmul.f32 %v3450, %v3449
  %v3452 = vmul.f32 0.5, %v3451
  %v3453 = vsub.f32 1.5, %v3452
  %v3454 = vmul.f32 %v3449, %v3453
  %v3455 = vmul.f32 %v3296, %v3454
  %vm3456 = vcmp.eq.f32.partialorder %v3296, inf
  %v3457 = vsel %vm3456, %v3296, %v3455
  %vm3458 = vcmp.eq.f32.partialorder %v3296, 0.0
  %v3459 = vand.u32 %v3296, 2147483648
  %v3460 = vsel %vm3458, %v3459, %v3457
  %v3461 = vrsqrt.pop %v3297
  %v3462 = vmul.f32 %v3461, %v3297
  %v3463 = vmul.f32 %v3462, %v3461
  %v3464 = vmul.f32 0.5, %v3463
  %v3465 = vsub.f32 1.5, %v3464
  %v3466 = vmul.f32 %v3461, %v3465
  %v3467 = vmul.f32 %v3297, %v3466
  %vm3468 = vcmp.eq.f32.partialorder %v3297, inf
  %v3469 = vsel %vm3468, %v3297, %v3467
  %vm3470 = vcmp.eq.f32.partialorder %v3297, 0.0
  %v3471 = vand.u32 %v3297, 2147483648
  %v3472 = vsel %vm3470, %v3471, %v3469
  %v3473 = vrsqrt.pop %v3298
  %v3474 = vmul.f32 %v3473, %v3298
  %v3475 = vmul.f32 %v3474, %v3473
  %v3476 = vmul.f32 0.5, %v3475
  %v3477 = vsub.f32 1.5, %v3476
  %v3478 = vmul.f32 %v3473, %v3477
  %v3479 = vmul.f32 %v3298, %v3478
  %vm3480 = vcmp.eq.f32.partialorder %v3298, inf
  %v3481 = vsel %vm3480, %v3298, %v3479
  %vm3482 = vcmp.eq.f32.partialorder %v3298, 0.0
  %v3483 = vand.u32 %v3298, 2147483648
  %v3484 = vsel %vm3482, %v3483, %v3481
  %v3485 = vrsqrt.pop %v3299
  %v3486 = vmul.f32 %v3485, %v3299
  %v3487 = vmul.f32 %v3486, %v3485
  %v3488 = vmul.f32 0.5, %v3487
  %v3489 = vsub.f32 1.5, %v3488
  %v3490 = vmul.f32 %v3485, %v3489
  %v3491 = vmul.f32 %v3299, %v3490
  %vm3492 = vcmp.eq.f32.partialorder %v3299, inf
  %v3493 = vsel %vm3492, %v3299, %v3491
  %vm3494 = vcmp.eq.f32.partialorder %v3299, 0.0
  %v3495 = vand.u32 %v3299, 2147483648
  %v3496 = vsel %vm3494, %v3495, %v3493
  %v3497 = vrsqrt.pop %v3300
  %v3498 = vmul.f32 %v3497, %v3300
  %v3499 = vmul.f32 %v3498, %v3497
  %v3500 = vmul.f32 0.5, %v3499
  %v3501 = vsub.f32 1.5, %v3500
  %v3502 = vmul.f32 %v3497, %v3501
  %v3503 = vmul.f32 %v3300, %v3502
  %vm3504 = vcmp.eq.f32.partialorder %v3300, inf
  %v3505 = vsel %vm3504, %v3300, %v3503
  %vm3506 = vcmp.eq.f32.partialorder %v3300, 0.0
  %v3507 = vand.u32 %v3300, 2147483648
  %v3508 = vsel %vm3506, %v3507, %v3505
  %v3509 = vrsqrt.pop %v3301
  %v3510 = vmul.f32 %v3509, %v3301
  %v3511 = vmul.f32 %v3510, %v3509
  %v3512 = vmul.f32 0.5, %v3511
  %v3513 = vsub.f32 1.5, %v3512
  %v3514 = vmul.f32 %v3509, %v3513
  %v3515 = vmul.f32 %v3301, %v3514
  %vm3516 = vcmp.eq.f32.partialorder %v3301, inf
  %v3517 = vsel %vm3516, %v3301, %v3515
  %vm3518 = vcmp.eq.f32.partialorder %v3301, 0.0
  %v3519 = vand.u32 %v3301, 2147483648
  %v3520 = vsel %vm3518, %v3519, %v3517
  %v3521 = vrsqrt.pop %v3302
  %v3522 = vmul.f32 %v3521, %v3302
  %v3523 = vmul.f32 %v3522, %v3521
  %v3524 = vmul.f32 0.5, %v3523
  %v3525 = vsub.f32 1.5, %v3524
  %v3526 = vmul.f32 %v3521, %v3525
  %v3527 = vmul.f32 %v3302, %v3526
  %vm3528 = vcmp.eq.f32.partialorder %v3302, inf
  %v3529 = vsel %vm3528, %v3302, %v3527
  %vm3530 = vcmp.eq.f32.partialorder %v3302, 0.0
  %v3531 = vand.u32 %v3302, 2147483648
  %v3532 = vsel %vm3530, %v3531, %v3529
  %v3533 = vrsqrt.pop %v3303
  %v3534 = vmul.f32 %v3533, %v3303
  %v3535 = vmul.f32 %v3534, %v3533
  %v3536 = vmul.f32 0.5, %v3535
  %v3537 = vsub.f32 1.5, %v3536
  %v3538 = vmul.f32 %v3533, %v3537
  %v3539 = vmul.f32 %v3303, %v3538
  %vm3540 = vcmp.eq.f32.partialorder %v3303, inf
  %v3541 = vsel %vm3540, %v3303, %v3539
  %vm3542 = vcmp.eq.f32.partialorder %v3303, 0.0
  %v3543 = vand.u32 %v3303, 2147483648
  %v3544 = vsel %vm3542, %v3543, %v3541
  %v3545 = vrsqrt.pop %v3304
  %v3546 = vmul.f32 %v3545, %v3304
  %v3547 = vmul.f32 %v3546, %v3545
  %v3548 = vmul.f32 0.5, %v3547
  %v3549 = vsub.f32 1.5, %v3548
  %v3550 = vmul.f32 %v3545, %v3549
  %v3551 = vmul.f32 %v3304, %v3550
  %vm3552 = vcmp.eq.f32.partialorder %v3304, inf
  %v3553 = vsel %vm3552, %v3304, %v3551
  %vm3554 = vcmp.eq.f32.partialorder %v3304, 0.0
  %v3555 = vand.u32 %v3304, 2147483648
  %v3556 = vsel %vm3554, %v3555, %v3553
  %v3557 = vrsqrt.pop %v3305
  %v3558 = vmul.f32 %v3557, %v3305
  %v3559 = vmul.f32 %v3558, %v3557
  %v3560 = vmul.f32 0.5, %v3559
  %v3561 = vsub.f32 1.5, %v3560
  %v3562 = vmul.f32 %v3557, %v3561
  %v3563 = vmul.f32 %v3305, %v3562
  %vm3564 = vcmp.eq.f32.partialorder %v3305, inf
  %v3565 = vsel %vm3564, %v3305, %v3563
  %vm3566 = vcmp.eq.f32.partialorder %v3305, 0.0
  %v3567 = vand.u32 %v3305, 2147483648
  %v3568 = vsel %vm3566, %v3567, %v3565
  %v3569 = vrsqrt.pop %v3306
  %v3570 = vmul.f32 %v3569, %v3306
  %v3571 = vmul.f32 %v3570, %v3569
  %v3572 = vmul.f32 0.5, %v3571
  %v3573 = vsub.f32 1.5, %v3572
  %v3574 = vmul.f32 %v3569, %v3573
  %v3575 = vmul.f32 %v3306, %v3574
  %vm3576 = vcmp.eq.f32.partialorder %v3306, inf
  %v3577 = vsel %vm3576, %v3306, %v3575
  %vm3578 = vcmp.eq.f32.partialorder %v3306, 0.0
  %v3579 = vand.u32 %v3306, 2147483648
  %v3580 = vsel %vm3578, %v3579, %v3577
  %v3581 = vrsqrt.pop %v3307
  %v3582 = vmul.f32 %v3581, %v3307
  %v3583 = vmul.f32 %v3582, %v3581
  %v3584 = vmul.f32 0.5, %v3583
  %v3585 = vsub.f32 1.5, %v3584
  %v3586 = vmul.f32 %v3581, %v3585
  %v3587 = vmul.f32 %v3307, %v3586
  %vm3588 = vcmp.eq.f32.partialorder %v3307, inf
  %v3589 = vsel %vm3588, %v3307, %v3587
  %vm3590 = vcmp.eq.f32.partialorder %v3307, 0.0
  %v3591 = vand.u32 %v3307, 2147483648
  %v3592 = vsel %vm3590, %v3591, %v3589
  %v3593 = vrsqrt.pop %v3308
  %v3594 = vmul.f32 %v3593, %v3308
  %v3595 = vmul.f32 %v3594, %v3593
  %v3596 = vmul.f32 0.5, %v3595
  %v3597 = vsub.f32 1.5, %v3596
  %v3598 = vmul.f32 %v3593, %v3597
  %v3599 = vmul.f32 %v3308, %v3598
  %vm3600 = vcmp.eq.f32.partialorder %v3308, inf
  %v3601 = vsel %vm3600, %v3308, %v3599
  %vm3602 = vcmp.eq.f32.partialorder %v3308, 0.0
  %v3603 = vand.u32 %v3308, 2147483648
  %v3604 = vsel %vm3602, %v3603, %v3601
  %v3605 = vrsqrt.pop %v3309
  %v3606 = vmul.f32 %v3605, %v3309
  %v3607 = vmul.f32 %v3606, %v3605
  %v3608 = vmul.f32 0.5, %v3607
  %v3609 = vsub.f32 1.5, %v3608
  %v3610 = vmul.f32 %v3605, %v3609
  %v3611 = vmul.f32 %v3309, %v3610
  %vm3612 = vcmp.eq.f32.partialorder %v3309, inf
  %v3613 = vsel %vm3612, %v3309, %v3611
  %vm3614 = vcmp.eq.f32.partialorder %v3309, 0.0
  %v3615 = vand.u32 %v3309, 2147483648
  %v3616 = vsel %vm3614, %v3615, %v3613
  %v3617 = vrsqrt.pop %v3310
  %v3618 = vmul.f32 %v3617, %v3310
  %v3619 = vmul.f32 %v3618, %v3617
  %v3620 = vmul.f32 0.5, %v3619
  %v3621 = vsub.f32 1.5, %v3620
  %v3622 = vmul.f32 %v3617, %v3621
  %v3623 = vmul.f32 %v3310, %v3622
  %vm3624 = vcmp.eq.f32.partialorder %v3310, inf
  %v3625 = vsel %vm3624, %v3310, %v3623
  %vm3626 = vcmp.eq.f32.partialorder %v3310, 0.0
  %v3627 = vand.u32 %v3310, 2147483648
  %v3628 = vsel %vm3626, %v3627, %v3625
  %v3629 = vrsqrt.pop %v3311
  %v3630 = vmul.f32 %v3629, %v3311
  %v3631 = vmul.f32 %v3630, %v3629
  %v3632 = vmul.f32 0.5, %v3631
  %v3633 = vsub.f32 1.5, %v3632
  %v3634 = vmul.f32 %v3629, %v3633
  %v3635 = vmul.f32 %v3311, %v3634
  %vm3636 = vcmp.eq.f32.partialorder %v3311, inf
  %v3637 = vsel %vm3636, %v3311, %v3635
  %vm3638 = vcmp.eq.f32.partialorder %v3311, 0.0
  %v3639 = vand.u32 %v3311, 2147483648
  %v3640 = vsel %vm3638, %v3639, %v3637
  %v3641 = vrsqrt.pop %v3312
  %v3642 = vmul.f32 %v3641, %v3312
  %v3643 = vmul.f32 %v3642, %v3641
  %v3644 = vmul.f32 0.5, %v3643
  %v3645 = vsub.f32 1.5, %v3644
  %v3646 = vmul.f32 %v3641, %v3645
  %v3647 = vmul.f32 %v3312, %v3646
  %vm3648 = vcmp.eq.f32.partialorder %v3312, inf
  %v3649 = vsel %vm3648, %v3312, %v3647
  %vm3650 = vcmp.eq.f32.partialorder %v3312, 0.0
  %v3651 = vand.u32 %v3312, 2147483648
  %v3652 = vsel %vm3650, %v3651, %v3649
  %v3653 = vrsqrt.pop %v3313
  %v3654 = vmul.f32 %v3653, %v3313
  %v3655 = vmul.f32 %v3654, %v3653
  %v3656 = vmul.f32 0.5, %v3655
  %v3657 = vsub.f32 1.5, %v3656
  %v3658 = vmul.f32 %v3653, %v3657
  %v3659 = vmul.f32 %v3313, %v3658
  %vm3660 = vcmp.eq.f32.partialorder %v3313, inf
  %v3661 = vsel %vm3660, %v3313, %v3659
  %vm3662 = vcmp.eq.f32.partialorder %v3313, 0.0
  %v3663 = vand.u32 %v3313, 2147483648
  %v3664 = vsel %vm3662, %v3663, %v3661
  %v3665 = vrsqrt.pop %v3314
  %v3666 = vmul.f32 %v3665, %v3314
  %v3667 = vmul.f32 %v3666, %v3665
  %v3668 = vmul.f32 0.5, %v3667
  %v3669 = vsub.f32 1.5, %v3668
  %v3670 = vmul.f32 %v3665, %v3669
  %v3671 = vmul.f32 %v3314, %v3670
  %vm3672 = vcmp.eq.f32.partialorder %v3314, inf
  %v3673 = vsel %vm3672, %v3314, %v3671
  %vm3674 = vcmp.eq.f32.partialorder %v3314, 0.0
  %v3675 = vand.u32 %v3314, 2147483648
  %v3676 = vsel %vm3674, %v3675, %v3673
  %v3677 = vrsqrt.pop %v3315
  %v3678 = vmul.f32 %v3677, %v3315
  %v3679 = vmul.f32 %v3678, %v3677
  %v3680 = vmul.f32 0.5, %v3679
  %v3681 = vsub.f32 1.5, %v3680
  %v3682 = vmul.f32 %v3677, %v3681
  %v3683 = vmul.f32 %v3315, %v3682
  %vm3684 = vcmp.eq.f32.partialorder %v3315, inf
  %v3685 = vsel %vm3684, %v3315, %v3683
  %vm3686 = vcmp.eq.f32.partialorder %v3315, 0.0
  %v3687 = vand.u32 %v3315, 2147483648
  %v3688 = vsel %vm3686, %v3687, %v3685
  %v3689 = vrsqrt.pop %v3316
  %v3690 = vmul.f32 %v3689, %v3316
  %v3691 = vmul.f32 %v3690, %v3689
  %v3692 = vmul.f32 0.5, %v3691
  %v3693 = vsub.f32 1.5, %v3692
  %v3694 = vmul.f32 %v3689, %v3693
  %v3695 = vmul.f32 %v3316, %v3694
  %vm3696 = vcmp.eq.f32.partialorder %v3316, inf
  %v3697 = vsel %vm3696, %v3316, %v3695
  %vm3698 = vcmp.eq.f32.partialorder %v3316, 0.0
  %v3699 = vand.u32 %v3316, 2147483648
  %v3700 = vsel %vm3698, %v3699, %v3697
  %v3701 = vadd.f32 %v3328, 1e-06
  %v3702 = vadd.f32 %v3340, 1e-06
  %v3703 = vadd.f32 %v3352, 1e-06
  %v3704 = vadd.f32 %v3364, 1e-06
  %v3705 = vadd.f32 %v3376, 1e-06
  %v3706 = vadd.f32 %v3388, 1e-06
  %v3707 = vadd.f32 %v3400, 1e-06
  %v3708 = vadd.f32 %v3412, 1e-06
  %v3709 = vadd.f32 %v3424, 1e-06
  %v3710 = vadd.f32 %v3436, 1e-06
  %v3711 = vadd.f32 %v3448, 1e-06
  %v3712 = vadd.f32 %v3460, 1e-06
  %v3713 = vadd.f32 %v3472, 1e-06
  %v3714 = vadd.f32 %v3484, 1e-06
  %v3715 = vadd.f32 %v3496, 1e-06
  %v3716 = vadd.f32 %v3508, 1e-06
  %v3717 = vadd.f32 %v3520, 1e-06
  %v3718 = vadd.f32 %v3532, 1e-06
  %v3719 = vadd.f32 %v3544, 1e-06
  %v3720 = vadd.f32 %v3556, 1e-06
  %v3721 = vadd.f32 %v3568, 1e-06
  %v3722 = vadd.f32 %v3580, 1e-06
  %v3723 = vadd.f32 %v3592, 1e-06
  %v3724 = vadd.f32 %v3604, 1e-06
  %v3725 = vadd.f32 %v3616, 1e-06
  %v3726 = vadd.f32 %v3628, 1e-06
  %v3727 = vadd.f32 %v3640, 1e-06
  %v3728 = vadd.f32 %v3652, 1e-06
  %v3729 = vadd.f32 %v3664, 1e-06
  %v3730 = vadd.f32 %v3676, 1e-06
  %v3731 = vadd.f32 %v3688, 1e-06
  %v3732 = vadd.f32 %v3700, 1e-06
  %v3733 = vrcp.pop %v3701
  %v3734 = vmul.f32 %v3701, %v3733
  %v3735 = vsub.f32 1.0, %v3734
  %v3736 = vmul.f32 %v3733, %v3735
  %v3737 = vadd.f32 %v3733, %v3736
  %vm3738 = vweird.f32 %v3701
  %vm3739 = vweird.f32 %v3733
  %vm3740 = vmor %vm3738, %vm3739
  %v3741 = vsel %vm3740, %v3733, %v3737
  %v3742 = vand.u32 2147483647, %v3701
  %vm3743 = vcmp.eq.f32.partialorder %v3742, 8.507059e+37
  %v3744 = vand.u32 %v3701, 2147483648
  %v3745 = vor.u32 1.1754944e-38, %v3744
  %v3746 = vsel %vm3743, %v3745, %v3741
  %v3747 = vrcp.pop %v3702
  %v3748 = vmul.f32 %v3702, %v3747
  %v3749 = vsub.f32 1.0, %v3748
  %v3750 = vmul.f32 %v3747, %v3749
  %v3751 = vadd.f32 %v3747, %v3750
  %vm3752 = vweird.f32 %v3702
  %vm3753 = vweird.f32 %v3747
  %vm3754 = vmor %vm3752, %vm3753
  %v3755 = vsel %vm3754, %v3747, %v3751
  %v3756 = vand.u32 2147483647, %v3702
  %vm3757 = vcmp.eq.f32.partialorder %v3756, 8.507059e+37
  %v3758 = vand.u32 %v3702, 2147483648
  %v3759 = vor.u32 1.1754944e-38, %v3758
  %v3760 = vsel %vm3757, %v3759, %v3755
  %v3761 = vrcp.pop %v3703
  %v3762 = vmul.f32 %v3703, %v3761
  %v3763 = vsub.f32 1.0, %v3762
  %v3764 = vmul.f32 %v3761, %v3763
  %v3765 = vadd.f32 %v3761, %v3764
  %vm3766 = vweird.f32 %v3703
  %vm3767 = vweird.f32 %v3761
  %vm3768 = vmor %vm3766, %vm3767
  %v3769 = vsel %vm3768, %v3761, %v3765
  %v3770 = vand.u32 2147483647, %v3703
  %vm3771 = vcmp.eq.f32.partialorder %v3770, 8.507059e+37
  %v3772 = vand.u32 %v3703, 2147483648
  %v3773 = vor.u32 1.1754944e-38, %v3772
  %v3774 = vsel %vm3771, %v3773, %v3769
  %v3775 = vrcp.pop %v3704
  %v3776 = vmul.f32 %v3704, %v3775
  %v3777 = vsub.f32 1.0, %v3776
  %v3778 = vmul.f32 %v3775, %v3777
  %v3779 = vadd.f32 %v3775, %v3778
  %vm3780 = vweird.f32 %v3704
  %vm3781 = vweird.f32 %v3775
  %vm3782 = vmor %vm3780, %vm3781
  %v3783 = vsel %vm3782, %v3775, %v3779
  %v3784 = vand.u32 2147483647, %v3704
  %vm3785 = vcmp.eq.f32.partialorder %v3784, 8.507059e+37
  %v3786 = vand.u32 %v3704, 2147483648
  %v3787 = vor.u32 1.1754944e-38, %v3786
  %v3788 = vsel %vm3785, %v3787, %v3783
  %v3789 = vrcp.pop %v3705
  %v3790 = vmul.f32 %v3705, %v3789
  %v3791 = vsub.f32 1.0, %v3790
  %v3792 = vmul.f32 %v3789, %v3791
  %v3793 = vadd.f32 %v3789, %v3792
  %vm3794 = vweird.f32 %v3705
  %vm3795 = vweird.f32 %v3789
  %vm3796 = vmor %vm3794, %vm3795
  %v3797 = vsel %vm3796, %v3789, %v3793
  %v3798 = vand.u32 2147483647, %v3705
  %vm3799 = vcmp.eq.f32.partialorder %v3798, 8.507059e+37
  %v3800 = vand.u32 %v3705, 2147483648
  %v3801 = vor.u32 1.1754944e-38, %v3800
  %v3802 = vsel %vm3799, %v3801, %v3797
  %v3803 = vrcp.pop %v3706
  %v3804 = vmul.f32 %v3706, %v3803
  %v3805 = vsub.f32 1.0, %v3804
  %v3806 = vmul.f32 %v3803, %v3805
  %v3807 = vadd.f32 %v3803, %v3806
  %vm3808 = vweird.f32 %v3706
  %vm3809 = vweird.f32 %v3803
  %vm3810 = vmor %vm3808, %vm3809
  %v3811 = vsel %vm3810, %v3803, %v3807
  %v3812 = vand.u32 2147483647, %v3706
  %vm3813 = vcmp.eq.f32.partialorder %v3812, 8.507059e+37
  %v3814 = vand.u32 %v3706, 2147483648
  %v3815 = vor.u32 1.1754944e-38, %v3814
  %v3816 = vsel %vm3813, %v3815, %v3811
  %v3817 = vrcp.pop %v3707
  %v3818 = vmul.f32 %v3707, %v3817
  %v3819 = vsub.f32 1.0, %v3818
  %v3820 = vmul.f32 %v3817, %v3819
  %v3821 = vadd.f32 %v3817, %v3820
  %vm3822 = vweird.f32 %v3707
  %vm3823 = vweird.f32 %v3817
  %vm3824 = vmor %vm3822, %vm3823
  %v3825 = vsel %vm3824, %v3817, %v3821
  %v3826 = vand.u32 2147483647, %v3707
  %vm3827 = vcmp.eq.f32.partialorder %v3826, 8.507059e+37
  %v3828 = vand.u32 %v3707, 2147483648
  %v3829 = vor.u32 1.1754944e-38, %v3828
  %v3830 = vsel %vm3827, %v3829, %v3825
  %v3831 = vrcp.pop %v3708
  %v3832 = vmul.f32 %v3708, %v3831
  %v3833 = vsub.f32 1.0, %v3832
  %v3834 = vmul.f32 %v3831, %v3833
  %v3835 = vadd.f32 %v3831, %v3834
  %vm3836 = vweird.f32 %v3708
  %vm3837 = vweird.f32 %v3831
  %vm3838 = vmor %vm3836, %vm3837
  %v3839 = vsel %vm3838, %v3831, %v3835
  %v3840 = vand.u32 2147483647, %v3708
  %vm3841 = vcmp.eq.f32.partialorder %v3840, 8.507059e+37
  %v3842 = vand.u32 %v3708, 2147483648
  %v3843 = vor.u32 1.1754944e-38, %v3842
  %v3844 = vsel %vm3841, %v3843, %v3839
  %v3845 = vrcp.pop %v3709
  %v3846 = vmul.f32 %v3709, %v3845
  %v3847 = vsub.f32 1.0, %v3846
  %v3848 = vmul.f32 %v3845, %v3847
  %v3849 = vadd.f32 %v3845, %v3848
  %vm3850 = vweird.f32 %v3709
  %vm3851 = vweird.f32 %v3845
  %vm3852 = vmor %vm3850, %vm3851
  %v3853 = vsel %vm3852, %v3845, %v3849
  %v3854 = vand.u32 2147483647, %v3709
  %vm3855 = vcmp.eq.f32.partialorder %v3854, 8.507059e+37
  %v3856 = vand.u32 %v3709, 2147483648
  %v3857 = vor.u32 1.1754944e-38, %v3856
  %v3858 = vsel %vm3855, %v3857, %v3853
  %v3859 = vrcp.pop %v3710
  %v3860 = vmul.f32 %v3710, %v3859
  %v3861 = vsub.f32 1.0, %v3860
  %v3862 = vmul.f32 %v3859, %v3861
  %v3863 = vadd.f32 %v3859, %v3862
  %vm3864 = vweird.f32 %v3710
  %vm3865 = vweird.f32 %v3859
  %vm3866 = vmor %vm3864, %vm3865
  %v3867 = vsel %vm3866, %v3859, %v3863
  %v3868 = vand.u32 2147483647, %v3710
  %vm3869 = vcmp.eq.f32.partialorder %v3868, 8.507059e+37
  %v3870 = vand.u32 %v3710, 2147483648
  %v3871 = vor.u32 1.1754944e-38, %v3870
  %v3872 = vsel %vm3869, %v3871, %v3867
  %v3873 = vrcp.pop %v3711
  %v3874 = vmul.f32 %v3711, %v3873
  %v3875 = vsub.f32 1.0, %v3874
  %v3876 = vmul.f32 %v3873, %v3875
  %v3877 = vadd.f32 %v3873, %v3876
  %vm3878 = vweird.f32 %v3711
  %vm3879 = vweird.f32 %v3873
  %vm3880 = vmor %vm3878, %vm3879
  %v3881 = vsel %vm3880, %v3873, %v3877
  %v3882 = vand.u32 2147483647, %v3711
  %vm3883 = vcmp.eq.f32.partialorder %v3882, 8.507059e+37
  %v3884 = vand.u32 %v3711, 2147483648
  %v3885 = vor.u32 1.1754944e-38, %v3884
  %v3886 = vsel %vm3883, %v3885, %v3881
  %v3887 = vrcp.pop %v3712
  %v3888 = vmul.f32 %v3712, %v3887
  %v3889 = vsub.f32 1.0, %v3888
  %v3890 = vmul.f32 %v3887, %v3889
  %v3891 = vadd.f32 %v3887, %v3890
  %vm3892 = vweird.f32 %v3712
  %vm3893 = vweird.f32 %v3887
  %vm3894 = vmor %vm3892, %vm3893
  %v3895 = vsel %vm3894, %v3887, %v3891
  %v3896 = vand.u32 2147483647, %v3712
  %vm3897 = vcmp.eq.f32.partialorder %v3896, 8.507059e+37
  %v3898 = vand.u32 %v3712, 2147483648
  %v3899 = vor.u32 1.1754944e-38, %v3898
  %v3900 = vsel %vm3897, %v3899, %v3895
  %v3901 = vrcp.pop %v3713
  %v3902 = vmul.f32 %v3713, %v3901
  %v3903 = vsub.f32 1.0, %v3902
  %v3904 = vmul.f32 %v3901, %v3903
  %v3905 = vadd.f32 %v3901, %v3904
  %vm3906 = vweird.f32 %v3713
  %vm3907 = vweird.f32 %v3901
  %vm3908 = vmor %vm3906, %vm3907
  %v3909 = vsel %vm3908, %v3901, %v3905
  %v3910 = vand.u32 2147483647, %v3713
  %vm3911 = vcmp.eq.f32.partialorder %v3910, 8.507059e+37
  %v3912 = vand.u32 %v3713, 2147483648
  %v3913 = vor.u32 1.1754944e-38, %v3912
  %v3914 = vsel %vm3911, %v3913, %v3909
  %v3915 = vrcp.pop %v3714
  %v3916 = vmul.f32 %v3714, %v3915
  %v3917 = vsub.f32 1.0, %v3916
  %v3918 = vmul.f32 %v3915, %v3917
  %v3919 = vadd.f32 %v3915, %v3918
  %vm3920 = vweird.f32 %v3714
  %vm3921 = vweird.f32 %v3915
  %vm3922 = vmor %vm3920, %vm3921
  %v3923 = vsel %vm3922, %v3915, %v3919
  %v3924 = vand.u32 2147483647, %v3714
  %vm3925 = vcmp.eq.f32.partialorder %v3924, 8.507059e+37
  %v3926 = vand.u32 %v3714, 2147483648
  %v3927 = vor.u32 1.1754944e-38, %v3926
  %v3928 = vsel %vm3925, %v3927, %v3923
  %v3929 = vrcp.pop %v3715
  %v3930 = vmul.f32 %v3715, %v3929
  %v3931 = vsub.f32 1.0, %v3930
  %v3932 = vmul.f32 %v3929, %v3931
  %v3933 = vadd.f32 %v3929, %v3932
  %vm3934 = vweird.f32 %v3715
  %vm3935 = vweird.f32 %v3929
  %vm3936 = vmor %vm3934, %vm3935
  %v3937 = vsel %vm3936, %v3929, %v3933
  %v3938 = vand.u32 2147483647, %v3715
  %vm3939 = vcmp.eq.f32.partialorder %v3938, 8.507059e+37
  %v3940 = vand.u32 %v3715, 2147483648
  %v3941 = vor.u32 1.1754944e-38, %v3940
  %v3942 = vsel %vm3939, %v3941, %v3937
  %v3943 = vrcp.pop %v3716
  %v3944 = vmul.f32 %v3716, %v3943
  %v3945 = vsub.f32 1.0, %v3944
  %v3946 = vmul.f32 %v3943, %v3945
  %v3947 = vadd.f32 %v3943, %v3946
  %vm3948 = vweird.f32 %v3716
  %vm3949 = vweird.f32 %v3943
  %vm3950 = vmor %vm3948, %vm3949
  %v3951 = vsel %vm3950, %v3943, %v3947
  %v3952 = vand.u32 2147483647, %v3716
  %vm3953 = vcmp.eq.f32.partialorder %v3952, 8.507059e+37
  %v3954 = vand.u32 %v3716, 2147483648
  %v3955 = vor.u32 1.1754944e-38, %v3954
  %v3956 = vsel %vm3953, %v3955, %v3951
  %v3957 = vrcp.pop %v3717
  %v3958 = vmul.f32 %v3717, %v3957
  %v3959 = vsub.f32 1.0, %v3958
  %v3960 = vmul.f32 %v3957, %v3959
  %v3961 = vadd.f32 %v3957, %v3960
  %vm3962 = vweird.f32 %v3717
  %vm3963 = vweird.f32 %v3957
  %vm3964 = vmor %vm3962, %vm3963
  %v3965 = vsel %vm3964, %v3957, %v3961
  %v3966 = vand.u32 2147483647, %v3717
  %vm3967 = vcmp.eq.f32.partialorder %v3966, 8.507059e+37
  %v3968 = vand.u32 %v3717, 2147483648
  %v3969 = vor.u32 1.1754944e-38, %v3968
  %v3970 = vsel %vm3967, %v3969, %v3965
  %v3971 = vrcp.pop %v3718
  %v3972 = vmul.f32 %v3718, %v3971
  %v3973 = vsub.f32 1.0, %v3972
  %v3974 = vmul.f32 %v3971, %v3973
  %v3975 = vadd.f32 %v3971, %v3974
  %vm3976 = vweird.f32 %v3718
  %vm3977 = vweird.f32 %v3971
  %vm3978 = vmor %vm3976, %vm3977
  %v3979 = vsel %vm3978, %v3971, %v3975
  %v3980 = vand.u32 2147483647, %v3718
  %vm3981 = vcmp.eq.f32.partialorder %v3980, 8.507059e+37
  %v3982 = vand.u32 %v3718, 2147483648
  %v3983 = vor.u32 1.1754944e-38, %v3982
  %v3984 = vsel %vm3981, %v3983, %v3979
  %v3985 = vrcp.pop %v3719
  %v3986 = vmul.f32 %v3719, %v3985
  %v3987 = vsub.f32 1.0, %v3986
  %v3988 = vmul.f32 %v3985, %v3987
  %v3989 = vadd.f32 %v3985, %v3988
  %vm3990 = vweird.f32 %v3719
  %vm3991 = vweird.f32 %v3985
  %vm3992 = vmor %vm3990, %vm3991
  %v3993 = vsel %vm3992, %v3985, %v3989
  %v3994 = vand.u32 2147483647, %v3719
  %vm3995 = vcmp.eq.f32.partialorder %v3994, 8.507059e+37
  %v3996 = vand.u32 %v3719, 2147483648
  %v3997 = vor.u32 1.1754944e-38, %v3996
  %v3998 = vsel %vm3995, %v3997, %v3993
  %v3999 = vrcp.pop %v3720
  %v4000 = vmul.f32 %v3720, %v3999
  %v4001 = vsub.f32 1.0, %v4000
  %v4002 = vmul.f32 %v3999, %v4001
  %v4003 = vadd.f32 %v3999, %v4002
  %vm4004 = vweird.f32 %v3720
  %vm4005 = vweird.f32 %v3999
  %vm4006 = vmor %vm4004, %vm4005
  %v4007 = vsel %vm4006, %v3999, %v4003
  %v4008 = vand.u32 2147483647, %v3720
  %vm4009 = vcmp.eq.f32.partialorder %v4008, 8.507059e+37
  %v4010 = vand.u32 %v3720, 2147483648
  %v4011 = vor.u32 1.1754944e-38, %v4010
  %v4012 = vsel %vm4009, %v4011, %v4007
  %v4013 = vrcp.pop %v3721
  %v4014 = vmul.f32 %v3721, %v4013
  %v4015 = vsub.f32 1.0, %v4014
  %v4016 = vmul.f32 %v4013, %v4015
  %v4017 = vadd.f32 %v4013, %v4016
  %vm4018 = vweird.f32 %v3721
  %vm4019 = vweird.f32 %v4013
  %vm4020 = vmor %vm4018, %vm4019
  %v4021 = vsel %vm4020, %v4013, %v4017
  %v4022 = vand.u32 2147483647, %v3721
  %vm4023 = vcmp.eq.f32.partialorder %v4022, 8.507059e+37
  %v4024 = vand.u32 %v3721, 2147483648
  %v4025 = vor.u32 1.1754944e-38, %v4024
  %v4026 = vsel %vm4023, %v4025, %v4021
  %v4027 = vrcp.pop %v3722
  %v4028 = vmul.f32 %v3722, %v4027
  %v4029 = vsub.f32 1.0, %v4028
  %v4030 = vmul.f32 %v4027, %v4029
  %v4031 = vadd.f32 %v4027, %v4030
  %vm4032 = vweird.f32 %v3722
  %vm4033 = vweird.f32 %v4027
  %vm4034 = vmor %vm4032, %vm4033
  %v4035 = vsel %vm4034, %v4027, %v4031
  %v4036 = vand.u32 2147483647, %v3722
  %vm4037 = vcmp.eq.f32.partialorder %v4036, 8.507059e+37
  %v4038 = vand.u32 %v3722, 2147483648
  %v4039 = vor.u32 1.1754944e-38, %v4038
  %v4040 = vsel %vm4037, %v4039, %v4035
  %v4041 = vrcp.pop %v3723
  %v4042 = vmul.f32 %v3723, %v4041
  %v4043 = vsub.f32 1.0, %v4042
  %v4044 = vmul.f32 %v4041, %v4043
  %v4045 = vadd.f32 %v4041, %v4044
  %vm4046 = vweird.f32 %v3723
  %vm4047 = vweird.f32 %v4041
  %vm4048 = vmor %vm4046, %vm4047
  %v4049 = vsel %vm4048, %v4041, %v4045
  %v4050 = vand.u32 2147483647, %v3723
  %vm4051 = vcmp.eq.f32.partialorder %v4050, 8.507059e+37
  %v4052 = vand.u32 %v3723, 2147483648
  %v4053 = vor.u32 1.1754944e-38, %v4052
  %v4054 = vsel %vm4051, %v4053, %v4049
  %v4055 = vrcp.pop %v3724
  %v4056 = vmul.f32 %v3724, %v4055
  %v4057 = vsub.f32 1.0, %v4056
  %v4058 = vmul.f32 %v4055, %v4057
  %v4059 = vadd.f32 %v4055, %v4058
  %vm4060 = vweird.f32 %v3724
  %vm4061 = vweird.f32 %v4055
  %vm4062 = vmor %vm4060, %vm4061
  %v4063 = vsel %vm4062, %v4055, %v4059
  %v4064 = vand.u32 2147483647, %v3724
  %vm4065 = vcmp.eq.f32.partialorder %v4064, 8.507059e+37
  %v4066 = vand.u32 %v3724, 2147483648
  %v4067 = vor.u32 1.1754944e-38, %v4066
  %v4068 = vsel %vm4065, %v4067, %v4063
  %v4069 = vrcp.pop %v3725
  %v4070 = vmul.f32 %v3725, %v4069
  %v4071 = vsub.f32 1.0, %v4070
  %v4072 = vmul.f32 %v4069, %v4071
  %v4073 = vadd.f32 %v4069, %v4072
  %vm4074 = vweird.f32 %v3725
  %vm4075 = vweird.f32 %v4069
  %vm4076 = vmor %vm4074, %vm4075
  %v4077 = vsel %vm4076, %v4069, %v4073
  %v4078 = vand.u32 2147483647, %v3725
  %vm4079 = vcmp.eq.f32.partialorder %v4078, 8.507059e+37
  %v4080 = vand.u32 %v3725, 2147483648
  %v4081 = vor.u32 1.1754944e-38, %v4080
  %v4082 = vsel %vm4079, %v4081, %v4077
  %v4083 = vrcp.pop %v3726
  %v4084 = vmul.f32 %v3726, %v4083
  %v4085 = vsub.f32 1.0, %v4084
  %v4086 = vmul.f32 %v4083, %v4085
  %v4087 = vadd.f32 %v4083, %v4086
  %vm4088 = vweird.f32 %v3726
  %vm4089 = vweird.f32 %v4083
  %vm4090 = vmor %vm4088, %vm4089
  %v4091 = vsel %vm4090, %v4083, %v4087
  %v4092 = vand.u32 2147483647, %v3726
  %vm4093 = vcmp.eq.f32.partialorder %v4092, 8.507059e+37
  %v4094 = vand.u32 %v3726, 2147483648
  %v4095 = vor.u32 1.1754944e-38, %v4094
  %v4096 = vsel %vm4093, %v4095, %v4091
  %v4097 = vrcp.pop %v3727
  %v4098 = vmul.f32 %v3727, %v4097
  %v4099 = vsub.f32 1.0, %v4098
  %v4100 = vmul.f32 %v4097, %v4099
  %v4101 = vadd.f32 %v4097, %v4100
  %vm4102 = vweird.f32 %v3727
  %vm4103 = vweird.f32 %v4097
  %vm4104 = vmor %vm4102, %vm4103
  %v4105 = vsel %vm4104, %v4097, %v4101
  %v4106 = vand.u32 2147483647, %v3727
  %vm4107 = vcmp.eq.f32.partialorder %v4106, 8.507059e+37
  %v4108 = vand.u32 %v3727, 2147483648
  %v4109 = vor.u32 1.1754944e-38, %v4108
  %v4110 = vsel %vm4107, %v4109, %v4105
  %v4111 = vrcp.pop %v3728
  %v4112 = vmul.f32 %v3728, %v4111
  %v4113 = vsub.f32 1.0, %v4112
  %v4114 = vmul.f32 %v4111, %v4113
  %v4115 = vadd.f32 %v4111, %v4114
  %vm4116 = vweird.f32 %v3728
  %vm4117 = vweird.f32 %v4111
  %vm4118 = vmor %vm4116, %vm4117
  %v4119 = vsel %vm4118, %v4111, %v4115
  %v4120 = vand.u32 2147483647, %v3728
  %vm4121 = vcmp.eq.f32.partialorder %v4120, 8.507059e+37
  %v4122 = vand.u32 %v3728, 2147483648
  %v4123 = vor.u32 1.1754944e-38, %v4122
  %v4124 = vsel %vm4121, %v4123, %v4119
  %v4125 = vrcp.pop %v3729
  %v4126 = vmul.f32 %v3729, %v4125
  %v4127 = vsub.f32 1.0, %v4126
  %v4128 = vmul.f32 %v4125, %v4127
  %v4129 = vadd.f32 %v4125, %v4128
  %vm4130 = vweird.f32 %v3729
  %vm4131 = vweird.f32 %v4125
  %vm4132 = vmor %vm4130, %vm4131
  %v4133 = vsel %vm4132, %v4125, %v4129
  %v4134 = vand.u32 2147483647, %v3729
  %vm4135 = vcmp.eq.f32.partialorder %v4134, 8.507059e+37
  %v4136 = vand.u32 %v3729, 2147483648
  %v4137 = vor.u32 1.1754944e-38, %v4136
  %v4138 = vsel %vm4135, %v4137, %v4133
  %v4139 = vrcp.pop %v3730
  %v4140 = vmul.f32 %v3730, %v4139
  %v4141 = vsub.f32 1.0, %v4140
  %v4142 = vmul.f32 %v4139, %v4141
  %v4143 = vadd.f32 %v4139, %v4142
  %vm4144 = vweird.f32 %v3730
  %vm4145 = vweird.f32 %v4139
  %vm4146 = vmor %vm4144, %vm4145
  %v4147 = vsel %vm4146, %v4139, %v4143
  %v4148 = vand.u32 2147483647, %v3730
  %vm4149 = vcmp.eq.f32.partialorder %v4148, 8.507059e+37
  %v4150 = vand.u32 %v3730, 2147483648
  %v4151 = vor.u32 1.1754944e-38, %v4150
  %v4152 = vsel %vm4149, %v4151, %v4147
  %v4153 = vrcp.pop %v3731
  %v4154 = vmul.f32 %v3731, %v4153
  %v4155 = vsub.f32 1.0, %v4154
  %v4156 = vmul.f32 %v4153, %v4155
  %v4157 = vadd.f32 %v4153, %v4156
  %vm4158 = vweird.f32 %v3731
  %vm4159 = vweird.f32 %v4153
  %vm4160 = vmor %vm4158, %vm4159
  %v4161 = vsel %vm4160, %v4153, %v4157
  %v4162 = vand.u32 2147483647, %v3731
  %vm4163 = vcmp.eq.f32.partialorder %v4162, 8.507059e+37
  %v4164 = vand.u32 %v3731, 2147483648
  %v4165 = vor.u32 1.1754944e-38, %v4164
  %v4166 = vsel %vm4163, %v4165, %v4161
  %v4167 = vrcp.pop %v3732
  %v4168 = vmul.f32 %v3732, %v4167
  %v4169 = vsub.f32 1.0, %v4168
  %v4170 = vmul.f32 %v4167, %v4169
  %v4171 = vadd.f32 %v4167, %v4170
  %vm4172 = vweird.f32 %v3732
  %vm4173 = vweird.f32 %v4167
  %vm4174 = vmor %vm4172, %vm4173
  %v4175 = vsel %vm4174, %v4167, %v4171
  %v4176 = vand.u32 2147483647, %v3732
  %vm4177 = vcmp.eq.f32.partialorder %v4176, 8.507059e+37
  %v4178 = vand.u32 %v3732, 2147483648
  %v4179 = vor.u32 1.1754944e-38, %v4178
  %v4180 = vsel %vm4177, %v4179, %v4175
  %v4181 = vmul.f32 %v3125, %v3746
  %v4182 = vmul.f32 %v3126, %v3760
  %v4183 = vmul.f32 %v3127, %v3774
  %v4184 = vmul.f32 %v3128, %v3788
  %v4185 = vmul.f32 %v3129, %v3802
  %v4186 = vmul.f32 %v3130, %v3816
  %v4187 = vmul.f32 %v3131, %v3830
  %v4188 = vmul.f32 %v3132, %v3844
  %v4189 = vmul.f32 %v3133, %v3858
  %v4190 = vmul.f32 %v3134, %v3872
  %v4191 = vmul.f32 %v3135, %v3886
  %v4192 = vmul.f32 %v3136, %v3900
  %v4193 = vmul.f32 %v3137, %v3914
  %v4194 = vmul.f32 %v3138, %v3928
  %v4195 = vmul.f32 %v3139, %v3942
  %v4196 = vmul.f32 %v3140, %v3956
  %v4197 = vmul.f32 %v3141, %v3970
  %v4198 = vmul.f32 %v3142, %v3984
  %v4199 = vmul.f32 %v3143, %v3998
  %v4200 = vmul.f32 %v3144, %v4012
  %v4201 = vmul.f32 %v3145, %v4026
  %v4202 = vmul.f32 %v3146, %v4040
  %v4203 = vmul.f32 %v3147, %v4054
  %v4204 = vmul.f32 %v3148, %v4068
  %v4205 = vmul.f32 %v3149, %v4082
  %v4206 = vmul.f32 %v3150, %v4096
  %v4207 = vmul.f32 %v3151, %v4110
  %v4208 = vmul.f32 %v3152, %v4124
  %v4209 = vmul.f32 %v3153, %v4138
  %v4210 = vmul.f32 %v3154, %v4152
  %v4211 = vmul.f32 %v3155, %v4166
  %v4212 = vmul.f32 %v3156, %v4180
  %v4213 = vld [vmem:[%s3] sm:$0xff]
  %v4214 = vld [vmem:[%s3 + $0x8] sm:$0xff]
  %v4215 = vld [vmem:[%s3 + $0x10] sm:$0xff]
  %v4216 = vld [vmem:[%s3 + $0x18] sm:$0xff]
  %v4217 = vld [vmem:[%s3 + $0x20] sm:$0xff]
  %v4218 = vld [vmem:[%s3 + $0x28] sm:$0xff]
  %v4219 = vld [vmem:[%s3 + $0x30] sm:$0xff]
  %v4220 = vld [vmem:[%s3 + $0x38] sm:$0xff]
  %v4221 = vperm.slane %v20, 2
  %v4223 = vsel %vm1523, %v4181, 0
  %v4226 = vsel %vm1523, %v4182, 0
  %v4229 = vsel %vm1523, %v4183, 0
  %v4232 = vsel %vm1523, %v4184, 0
  %v4235 = vsel %vm1523, %v4185, 0
  %v4238 = vsel %vm1523, %v4186, 0
  %v4241 = vsel %vm1523, %v4187, 0
  %v4244 = vsel %vm1523, %v4188, 0
  %v4247 = vsel %vm1523, %v4189, 0
  %v4250 = vsel %vm1523, %v4190, 0
  %v4253 = vsel %vm1523, %v4191, 0
  %v4256 = vsel %vm1523, %v4192, 0
  %v4259 = vsel %vm1523, %v4193, 0
  %v4262 = vsel %vm1523, %v4194, 0
  %v4265 = vsel %vm1523, %v4195, 0
  %v4268 = vsel %vm1523, %v4196, 0
  %v4271 = vsel %vm1523, %v4197, 0
  %v4274 = vsel %vm1523, %v4198, 0
  %v4277 = vsel %vm1523, %v4199, 0
  %v4280 = vsel %vm1523, %v4200, 0
  %v4283 = vsel %vm1523, %v4201, 0
  %v4286 = vsel %vm1523, %v4202, 0
  %v4289 = vsel %vm1523, %v4203, 0
  %v4292 = vsel %vm1523, %v4204, 0
  %v4295 = vsel %vm1523, %v4205, 0
  %v4298 = vsel %vm1523, %v4206, 0
  %v4301 = vsel %vm1523, %v4207, 0
  %v4304 = vsel %vm1523, %v4208, 0
  %v4307 = vsel %vm1523, %v4209, 0
  %v4310 = vsel %vm1523, %v4210, 0
  %v4313 = vsel %vm1523, %v4211, 0
  %v4316 = vsel %vm1523, %v4212, 0
  %4318 = vmatpush.msra.mxu0 0.0
  %4319 = vmatpush.msra.mxu0 0.0
  %4320 = vmatpush.msra.mxu0 0.0
  %4321 = vmatpush.msra.mxu0 0.0
  %4322 = vmatpush.msra.mxu0 0.0
  %4323 = vmatpush.msra.mxu0 0.0
  %4324 = vmatpush.msra.mxu0 0.0
  %4325 = vmatpush.msra.mxu0 0.0
  %4326 = vmatpush.msra.mxu0 %v4220
  %4327 = vmatpush.msra.mxu0 %v4219
  %4328 = vmatpush.msra.mxu0 %v4218
  %4329 = vmatpush.msra.mxu0 %v4217
  %4330 = vmatpush.msra.mxu0 %v4216
  %4331 = vmatpush.msra.mxu0 %v4215
  %4332 = vmatpush.msra.mxu0 %v4214
  %4333 = vmatpush.msra.mxu0 %v4213
  %4334 = vmatmul.f32.gmra.mxu0 %v4223
  %v4335 = vpop.f32.mrf.mxu0
  %v4336 = vadd.f32 %v4221, %v4335
  %4337 = vmatmul.f32.gmra.mxu0 %v4226
  %v4338 = vpop.f32.mrf.mxu0
  %v4339 = vadd.f32 %v4221, %v4338
  %4340 = vmatmul.f32.gmra.mxu0 %v4229
  %v4341 = vpop.f32.mrf.mxu0
  %v4342 = vadd.f32 %v4221, %v4341
  %4343 = vmatmul.f32.gmra.mxu0 %v4232
  %v4344 = vpop.f32.mrf.mxu0
  %v4345 = vadd.f32 %v4221, %v4344
  %4346 = vmatmul.f32.gmra.mxu0 %v4235
  %v4347 = vpop.f32.mrf.mxu0
  %v4348 = vadd.f32 %v4221, %v4347
  %4349 = vmatmul.f32.gmra.mxu0 %v4238
  %v4350 = vpop.f32.mrf.mxu0
  %v4351 = vadd.f32 %v4221, %v4350
  %4352 = vmatmul.f32.gmra.mxu0 %v4241
  %v4353 = vpop.f32.mrf.mxu0
  %v4354 = vadd.f32 %v4221, %v4353
  %4355 = vmatmul.f32.gmra.mxu0 %v4244
  %v4356 = vpop.f32.mrf.mxu0
  %v4357 = vadd.f32 %v4221, %v4356
  %4358 = vmatmul.f32.gmra.mxu0 %v4247
  %v4359 = vpop.f32.mrf.mxu0
  %v4360 = vadd.f32 %v4221, %v4359
  %4361 = vmatmul.f32.gmra.mxu0 %v4250
  %v4362 = vpop.f32.mrf.mxu0
  %v4363 = vadd.f32 %v4221, %v4362
  %4364 = vmatmul.f32.gmra.mxu0 %v4253
  %v4365 = vpop.f32.mrf.mxu0
  %v4366 = vadd.f32 %v4221, %v4365
  %4367 = vmatmul.f32.gmra.mxu0 %v4256
  %v4368 = vpop.f32.mrf.mxu0
  %v4369 = vadd.f32 %v4221, %v4368
  %4370 = vmatmul.f32.gmra.mxu0 %v4259
  %v4371 = vpop.f32.mrf.mxu0
  %v4372 = vadd.f32 %v4221, %v4371
  %4373 = vmatmul.f32.gmra.mxu0 %v4262
  %v4374 = vpop.f32.mrf.mxu0
  %v4375 = vadd.f32 %v4221, %v4374
  %4376 = vmatmul.f32.gmra.mxu0 %v4265
  %v4377 = vpop.f32.mrf.mxu0
  %v4378 = vadd.f32 %v4221, %v4377
  %4379 = vmatmul.f32.gmra.mxu0 %v4268
  %v4380 = vpop.f32.mrf.mxu0
  %v4381 = vadd.f32 %v4221, %v4380
  %4382 = vmatmul.f32.gmra.mxu0 %v4271
  %v4383 = vpop.f32.mrf.mxu0
  %v4384 = vadd.f32 %v4221, %v4383
  %4385 = vmatmul.f32.gmra.mxu0 %v4274
  %v4386 = vpop.f32.mrf.mxu0
  %v4387 = vadd.f32 %v4221, %v4386
  %4388 = vmatmul.f32.gmra.mxu0 %v4277
  %v4389 = vpop.f32.mrf.mxu0
  %v4390 = vadd.f32 %v4221, %v4389
  %4391 = vmatmul.f32.gmra.mxu0 %v4280
  %v4392 = vpop.f32.mrf.mxu0
  %v4393 = vadd.f32 %v4221, %v4392
  %4394 = vmatmul.f32.gmra.mxu0 %v4283
  %v4395 = vpop.f32.mrf.mxu0
  %v4396 = vadd.f32 %v4221, %v4395
  %4397 = vmatmul.f32.gmra.mxu0 %v4286
  %v4398 = vpop.f32.mrf.mxu0
  %v4399 = vadd.f32 %v4221, %v4398
  %4400 = vmatmul.f32.gmra.mxu0 %v4289
  %v4401 = vpop.f32.mrf.mxu0
  %v4402 = vadd.f32 %v4221, %v4401
  %4403 = vmatmul.f32.gmra.mxu0 %v4292
  %v4404 = vpop.f32.mrf.mxu0
  %v4405 = vadd.f32 %v4221, %v4404
  %4406 = vmatmul.f32.gmra.mxu0 %v4295
  %v4407 = vpop.f32.mrf.mxu0
  %v4408 = vadd.f32 %v4221, %v4407
  %4409 = vmatmul.f32.gmra.mxu0 %v4298
  %v4410 = vpop.f32.mrf.mxu0
  %v4411 = vadd.f32 %v4221, %v4410
  %4412 = vmatmul.f32.gmra.mxu0 %v4301
  %v4413 = vpop.f32.mrf.mxu0
  %v4414 = vadd.f32 %v4221, %v4413
  %4415 = vmatmul.f32.gmra.mxu0 %v4304
  %v4416 = vpop.f32.mrf.mxu0
  %v4417 = vadd.f32 %v4221, %v4416
  %4418 = vmatmul.f32.gmra.mxu0 %v4307
  %v4419 = vpop.f32.mrf.mxu0
  %v4420 = vadd.f32 %v4221, %v4419
  %4421 = vmatmul.f32.gmra.mxu0 %v4310
  %v4422 = vpop.f32.mrf.mxu0
  %v4423 = vadd.f32 %v4221, %v4422
  %4424 = vmatmul.f32.gmra.mxu0 %v4313
  %v4425 = vpop.f32.mrf.mxu0
  %v4426 = vadd.f32 %v4221, %v4425
  %4427 = vmatmul.f32.gmra.mxu0 %v4316
  %v4428 = vpop.f32.mrf.mxu0
  %v4429 = vadd.f32 %v4221, %v4428
  %4430 = vdwg.mxu0
  %4431 = vst [vmem:[%s5] sm:$0xff] %v4336
  %4432 = vst [vmem:[%s5 + $0x8] sm:$0xff] %v4339
  %4433 = vst [vmem:[%s5 + $0x10] sm:$0xff] %v4342
  %4434 = vst [vmem:[%s5 + $0x18] sm:$0xff] %v4345
  %4435 = vst [vmem:[%s5 + $0x20] sm:$0xff] %v4348
  %4436 = vst [vmem:[%s5 + $0x28] sm:$0xff] %v4351
  %4437 = vst [vmem:[%s5 + $0x30] sm:$0xff] %v4354
  %4438 = vst [vmem:[%s5 + $0x38] sm:$0xff] %v4357
  %4439 = vst [vmem:[%s5 + $0x40] sm:$0xff] %v4360
  %4440 = vst [vmem:[%s5 + $0x48] sm:$0xff] %v4363
  %4441 = vst [vmem:[%s5 + $0x50] sm:$0xff] %v4366
  %4442 = vst [vmem:[%s5 + $0x58] sm:$0xff] %v4369
  %4443 = vst [vmem:[%s5 + $0x60] sm:$0xff] %v4372
  %4444 = vst [vmem:[%s5 + $0x68] sm:$0xff] %v4375
  %4445 = vst [vmem:[%s5 + $0x70] sm:$0xff] %v4378
  %4446 = vst [vmem:[%s5 + $0x78] sm:$0xff] %v4381
  %4447 = vst [vmem:[%s5 + $0x80] sm:$0xff] %v4384
  %4448 = vst [vmem:[%s5 + $0x88] sm:$0xff] %v4387
  %4449 = vst [vmem:[%s5 + $0x90] sm:$0xff] %v4390
  %4450 = vst [vmem:[%s5 + $0x98] sm:$0xff] %v4393
  %4451 = vst [vmem:[%s5 + $0xa0] sm:$0xff] %v4396
  %4452 = vst [vmem:[%s5 + $0xa8] sm:$0xff] %v4399
  %4453 = vst [vmem:[%s5 + $0xb0] sm:$0xff] %v4402
  %4454 = vst [vmem:[%s5 + $0xb8] sm:$0xff] %v4405
  %4455 = vst [vmem:[%s5 + $0xc0] sm:$0xff] %v4408
  %4456 = vst [vmem:[%s5 + $0xc8] sm:$0xff] %v4411
  %4457 = vst [vmem:[%s5 + $0xd0] sm:$0xff] %v4414
  %4458 = vst [vmem:[%s5 + $0xd8] sm:$0xff] %v4417
  %4459 = vst [vmem:[%s5 + $0xe0] sm:$0xff] %v4420
  %4460 = vst [vmem:[%s5 + $0xe8] sm:$0xff] %v4423
  %4461 = vst [vmem:[%s5 + $0xf0] sm:$0xff] %v4426
  %4462 = vst [vmem:[%s5 + $0xf8] sm:$0xff] %v4429
  // Predicated region
  $region22: #{discriminator_forward.1} parent=0 // pred_check
    _
  $region23: #{discriminator_forward.1} parent=0 // pred_check_branch
    %4464 = sbr.rel (0) target = $region25
  $region24: #{discriminator_forward.1} parent=0 // pred_region
    _
  $region25: #{discriminator_forward.1} parent=0 // pred_fallthru
    _
  // Predicated region
  $region26: #{discriminator_forward.1} parent=0 // pred_check
    _
  $region27: #{discriminator_forward.1} parent=0 // pred_check_branch
    %4466 = sbr.rel (0) target = $region29
  $region28: #{discriminator_forward.1} parent=0 // pred_region
    _
  $region29: #{discriminator_forward.1} parent=0 // pred_fallthru
    _

</llo_original>
